<compile_context>
chip_gen: v7x
topology: tpu7x:2x2x1
jax: 0.10.0
libtpu: 0.0.40
codegen_flags: <defaults>
</compile_context>

<pallas_src>
import functools

import jax
import jax.numpy as jnp
from jax.experimental import pallas as pl
from jax.experimental.pallas import tpu as pltpu


# ----------------------------------------------------------------------------
# Per-generation budgets / tile targets
# ----------------------------------------------------------------------------
def _detect_vmem_limit_bytes():
    """Scoped-VMEM budget per generation: 128 MiB parts (v5e/v6e) -> ~96 MiB,
    64 MiB-per-TensorCore parts (v7x) -> 48 MiB.  Falls back to the conservative
    v7x-sized budget if the hardware query is unavailable."""
    cap = None
    try:
        get_info = getattr(pltpu, "get_tpu_info", None)
        if get_info is not None:
            cap = int(getattr(get_info(), "vmem_capacity_bytes", 0)) or None
    except Exception:
        cap = None
    if cap is None:
        cap = 64 * 1024 * 1024
    return min((cap * 3) // 4, 100 * 1024 * 1024)


VMEM_LIMIT_BYTES = _detect_vmem_limit_bytes()
_BIG_VMEM = VMEM_LIMIT_BYTES >= 80 * 1024 * 1024

# Tile targets: M/N multiples of 256 fill the 256-wide MXU on v6e/v7x; larger tiles on
# 128 MiB parts amortize the ~0.35 us per-grid-step overhead, smaller on 64 MiB v7x.
MM_TM = 512 if _BIG_VMEM else 256
MM_TN = 512 if _BIG_VMEM else 256
MM_TK = 1024 if _BIG_VMEM else 512
FFN_TF = 1024 if _BIG_VMEM else 512
WEIGHT_BUFFERS = 3 if _BIG_VMEM else 2     # pipeline depth on streamed weight tiles


def _compiler_params(sem):
    return pltpu.CompilerParams(
        dimension_semantics=sem, vmem_limit_bytes=VMEM_LIMIT_BYTES
    )


def _pick_row_tile(n, target):
    """Largest row tile <= target dividing n; prefers 16-alignment (bf16 sublane
    packing), then 8-alignment, else the full extent (always legal)."""
    target = max(1, min(target, n))
    for align in (16, 8):
        if n % align:
            continue
        t = (target // align) * align
        while t >= align:
            if n % t == 0:
                return t
            t -= align
    return n


def _row_tile(n, target, min_tiles=2):
    """Row tile that also tries to expose >=2 grid steps so both TensorCores on
    dual-core parts (v7x) get work; costs at most one extra sub-us grid step on
    single-core parts."""
    t = _pick_row_tile(n, target)
    if n // t < min_tiles:
        t2 = _pick_row_tile(n, max(n // min_tiles, 1))
        if 0 < t2 < t:
            t = t2
    return t


def _pick_lane_tile(dim, target, align=128):
    """Largest lane/K tile <= target, `align`-aligned, dividing dim; else full."""
    if dim <= target:
        return dim
    t = (target // align) * align
    while t >= align:
        if dim % t == 0:
            return t
        t -= align
    return dim


def _wspec(shape, index_map, steps):
    """BlockSpec for a streamed weight operand; triple-buffer when the stream is long
    enough and the VMEM budget allows (hides HBM latency behind the MXU)."""
    if WEIGHT_BUFFERS > 2 and steps >= 3 and hasattr(pl, "Buffered"):
        try:
            return pl.BlockSpec(shape, index_map,
                                pipeline_mode=pl.Buffered(WEIGHT_BUFFERS))
        except TypeError:  # jax build without pipeline_mode on BlockSpec
            pass
    return pl.BlockSpec(shape, index_map)


def _layernorm_rows(y, g, beta, eps):
    """Row LayerNorm with unbiased variance (ddof=1).  Single-pass statistics (one
    sum + one sum-of-squares -> independent XLU reductions) and rsqrt on the EUP
    instead of a VPU divide."""
    d = y.shape[-1]
    s1 = jnp.sum(y, axis=-1, keepdims=True)
    s2 = jnp.sum(y * y, axis=-1, keepdims=True)
    mean = s1 * (1.0 / d)
    var = (s2 - s1 * mean) * (1.0 / (d - 1))          # unbiased (ddof=1)
    return (y - mean) * jax.lax.rsqrt(var + eps) * g + beta


# ----------------------------------------------------------------------------
# Pallas kernels
# ----------------------------------------------------------------------------
def _mm_bias_kernel(x_ref, w_ref, b_ref, o_ref, acc_ref):
    """Tiled o = x @ w + b.  bf16 MXU inputs, f32 accumulation in VMEM scratch."""
    k = pl.program_id(2)

    @pl.when(k == 0)
    def _():
        acc_ref[...] = jnp.zeros_like(acc_ref)

    acc_ref[...] += jnp.dot(
        x_ref[...].astype(jnp.bfloat16),
        w_ref[...].astype(jnp.bfloat16),
        preferred_element_type=jnp.float32,
    )

    @pl.when(k == pl.num_programs(2) - 1)
    def _():
        o_ref[...] = (acc_ref[...] + b_ref[...]).astype(o_ref.dtype)


def _mm_res_ln_kernel(x_ref, w_ref, b_ref, res_ref, g_ref, beta_ref, o_ref,
                      acc_ref, *, eps):
    """o = LayerNorm(res + x @ w + b); K-tiled reduction, stats in f32."""
    k = pl.program_id(1)

    @pl.when(k == 0)
    def _():
        acc_ref[...] = jnp.zeros_like(acc_ref)

    acc_ref[...] += jnp.dot(
        x_ref[...].astype(jnp.bfloat16),
        w_ref[...].astype(jnp.bfloat16),
        preferred_element_type=jnp.float32,
    )

    @pl.when(k == pl.num_programs(1) - 1)
    def _():
        y = acc_ref[...] + b_ref[...] + res_ref[...]
        o_ref[...] = _layernorm_rows(y, g_ref[...], beta_ref[...], eps)


def _ffn_res_ln_kernel(x_ref, w1_ref, b1_ref, w2_ref, b2_ref, g_ref, beta_ref,
                       o_ref, acc_ref, *, eps):
    """o = LayerNorm(x + fc2(relu(fc1(x)))); ffn_dim streamed in tiles so the
    (rows, ffn_dim) intermediate never leaves VMEM."""
    j = pl.program_id(1)

    @pl.when(j == 0)
    def _():
        acc_ref[...] = jnp.zeros_like(acc_ref)

    xb = x_ref[...].astype(jnp.bfloat16)
    h = jnp.dot(xb, w1_ref[...].astype(jnp.bfloat16),
                preferred_element_type=jnp.float32) + b1_ref[...]
    h = jnp.maximum(h, 0.0).astype(jnp.bfloat16)
    acc_ref[...] += jnp.dot(h, w2_ref[...].astype(jnp.bfloat16),
                            preferred_element_type=jnp.float32)

    @pl.when(j == pl.num_programs(1) - 1)
    def _():
        y = acc_ref[...] + b2_ref[...] + x_ref[...]        # residual = f32 input block
        o_ref[...] = _layernorm_rows(y, g_ref[...], beta_ref[...], eps)


def _ln_mm_bias_kernel(x_ref, g_ref, beta_ref, w_ref, b_ref, o_ref, xln_ref, *, eps):
    """Final LayerNorm fused into the lm head: LN(x) is computed once per row tile
    (at vocab tile j == 0) into a bf16 VMEM scratch and reused across vocab tiles."""
    j = pl.program_id(1)

    @pl.when(j == 0)
    def _():
        xln_ref[...] = _layernorm_rows(
            x_ref[...], g_ref[...], beta_ref[...], eps).astype(jnp.bfloat16)

    o_ref[...] = (jnp.dot(xln_ref[...], w_ref[...].astype(jnp.bfloat16),
                          preferred_element_type=jnp.float32)
                  + b_ref[...]).astype(o_ref.dtype)


def _attention_kernel(qkv_ref, o_ref, *, num_heads, scale):
    """One batch element per grid step.  qkv block is (1, S, 3D) bf16 (lane-dense,
    one DMA); with seq_len == num_heads (required by the buggy reshape/broadcast in
    the reference) the scrambled computation reduces exactly to standard per-head
    attention over contiguous feature slices.  Heads are statically unrolled on
    VALUE slices; the output is written as one full-width lane-dense store."""
    S = qkv_ref.shape[1]
    D = qkv_ref.shape[2] // 3
    hd = D // num_heads

    qkv = qkv_ref[0]                       # (S, 3D) bf16 — single lane-dense load
    q = qkv[:, 0:D]
    k = qkv[:, D:2 * D]
    v = qkv[:, 2 * D:3 * D]

    # causal (tril) mask from the top-level forward, hoisted out of the head loop
    row = jax.lax.broadcasted_iota(jnp.int32, (S, S), 0)
    col = jax.lax.broadcasted_iota(jnp.int32, (S, S), 1)
    causal = row >= col

    outs = []
    for h in range(num_heads):             # static unroll; num_heads == seq_len (small)
        lo = h * hd
        qh = q[:, lo:lo + hd]
        kh = k[:, lo:lo + hd]
        vh = v[:, lo:lo + hd]
        s = jax.lax.dot_general(qh, kh, (((1,), (1,)), ((), ())),
                                preferred_element_type=jnp.float32) * scale   # 1/hd
        s = jnp.where(causal, s, -jnp.inf)
        m = jnp.max(s, axis=-1, keepdims=True)
        p = jnp.exp(s - m)
        p = p / jnp.sum(p, axis=-1, keepdims=True)       # exact softmax (parity-safe)
        outs.append(jnp.dot(p.astype(jnp.bfloat16), vh,
                            preferred_element_type=jnp.float32))
    o_ref[0] = jnp.concatenate(outs, axis=-1).astype(o_ref.dtype)


# ----------------------------------------------------------------------------
# Pallas wrappers
# ----------------------------------------------------------------------------
def linear(x2d, w, b, out_dtype=jnp.bfloat16):
    """Tiled x @ w + b.  Used for the fused QKV projection (bf16 output)."""
    n, din = x2d.shape
    dout = w.shape[1]
    tm = _row_tile(n, MM_TM)
    tn = _pick_lane_tile(dout, MM_TN)
    tk = _pick_lane_tile(din, MM_TK)
    ksteps = din // tk
    flops = 2 * n * dout * din
    bytes_accessed = (n * din * x2d.dtype.itemsize
                      + din * dout * w.dtype.itemsize
                      + n * dout * jnp.dtype(out_dtype).itemsize)
    return pl.pallas_call(
        _mm_bias_kernel,
        out_shape=jax.ShapeDtypeStruct((n, dout), out_dtype),
        grid=(n // tm, dout // tn, ksteps),
        in_specs=[
            pl.BlockSpec((tm, tk), lambda i, j, k: (i, k)),
            _wspec((tk, tn), lambda i, j, k: (k, j), ksteps),
            pl.BlockSpec((1, tn), lambda i, j, k: (0, j)),
        ],
        out_specs=pl.BlockSpec((tm, tn), lambda i, j, k: (i, j)),
        scratch_shapes=[pltpu.VMEM((tm, tn), jnp.float32)],
        compiler_params=_compiler_params(("parallel", "parallel", "arbitrary")),
        cost_estimate=pl.CostEstimate(flops=flops, transcendentals=0,
                                      bytes_accessed=bytes_accessed),
    )(x2d, w, b.reshape(1, dout).astype(jnp.float32))


def matmul_residual_layernorm(x2d, w, b, res2d, g, beta, eps=1e-5):
    """LayerNorm(res + x @ w + b) — out_proj / attn_norm fusion (f32 residual out)."""
    n, din = x2d.shape
    dout = w.shape[1]
    # (tm, dout)-wide f32 blocks (res, acc, out) dominate VMEM — cap tm from budget.
    tm_target = min(MM_TM, max(16, VMEM_LIMIT_BYTES // (32 * dout)))
    tm = _row_tile(n, tm_target)
    tk = _pick_lane_tile(din, MM_TK)
    ksteps = din // tk
    return pl.pallas_call(
        functools.partial(_mm_res_ln_kernel, eps=eps),
        out_shape=jax.ShapeDtypeStruct((n, dout), jnp.float32),
        grid=(n // tm, ksteps),
        in_specs=[
            pl.BlockSpec((tm, tk), lambda i, k: (i, k)),
            _wspec((tk, dout), lambda i, k: (k, 0), ksteps),
            pl.BlockSpec((1, dout), lambda i, k: (0, 0)),
            pl.BlockSpec((tm, dout), lambda i, k: (i, 0)),
            pl.BlockSpec((1, dout), lambda i, k: (0, 0)),
            pl.BlockSpec((1, dout), lambda i, k: (0, 0)),
        ],
        out_specs=pl.BlockSpec((tm, dout), lambda i, k: (i, 0)),
        scratch_shapes=[pltpu.VMEM((tm, dout), jnp.float32)],
        compiler_params=_compiler_params(("parallel", "arbitrary")),
    )(x2d, w, b.reshape(1, dout).astype(jnp.float32), res2d,
      g.reshape(1, dout), beta.reshape(1, dout))


def ffn_residual_layernorm(x2d, w1, b1, w2, b2, g, beta, eps=1e-5):
    """LayerNorm(x + fc2(relu(fc1(x)))) — whole FFN block in one kernel."""
    n, d = x2d.shape
    f = w1.shape[1]
    tm = _row_tile(n, min(MM_TM, max(16, VMEM_LIMIT_BYTES // (32 * d))))
    tf = _pick_lane_tile(f, min(FFN_TF, max(128, VMEM_LIMIT_BYTES // (16 * d))))
    fsteps = f // tf
    return pl.pallas_call(
        functools.partial(_ffn_res_ln_kernel, eps=eps),
        out_shape=jax.ShapeDtypeStruct((n, d), jnp.float32),
        grid=(n // tm, fsteps),
        in_specs=[
            pl.BlockSpec((tm, d), lambda i, j: (i, 0)),    # x (matmul in + residual)
            _wspec((d, tf), lambda i, j: (0, j), fsteps),  # w1 tile
            pl.BlockSpec((1, tf), lambda i, j: (0, j)),    # b1 tile
            _wspec((tf, d), lambda i, j: (j, 0), fsteps),  # w2 tile
            pl.BlockSpec((1, d), lambda i, j: (0, 0)),     # b2
            pl.BlockSpec((1, d), lambda i, j: (0, 0)),     # ln weight
            pl.BlockSpec((1, d), lambda i, j: (0, 0)),     # ln bias
        ],
        out_specs=pl.BlockSpec((tm, d), lambda i, j: (i, 0)),
        scratch_shapes=[pltpu.VMEM((tm, d), jnp.float32)],
        compiler_params=_compiler_params(("parallel", "arbitrary")),
    )(x2d, w1, b1.reshape(1, f).astype(jnp.float32), w2,
      b2.reshape(1, d).astype(jnp.float32), g.reshape(1, d), beta.reshape(1, d))


def layernorm_lm_head(x2d, g, beta, w, b, eps=1e-5):
    """logits = LayerNorm(x) @ w + b — final norm fused into the lm head."""
    n, d = x2d.shape
    vocab = w.shape[1]
    tm = _row_tile(n, min(MM_TM, max(16, VMEM_LIMIT_BYTES // (32 * d))))
    tn = _pick_lane_tile(vocab, MM_TN)
    nsteps = vocab // tn
    return pl.pallas_call(
        functools.partial(_ln_mm_bias_kernel, eps=eps),
        out_shape=jax.ShapeDtypeStruct((n, vocab), jnp.float32),
        grid=(n // tm, nsteps),
        in_specs=[
            pl.BlockSpec((tm, d), lambda i, j: (i, 0)),
            pl.BlockSpec((1, d), lambda i, j: (0, 0)),
            pl.BlockSpec((1, d), lambda i, j: (0, 0)),
            _wspec((d, tn), lambda i, j: (0, j), nsteps),
            pl.BlockSpec((1, tn), lambda i, j: (0, j)),
        ],
        out_specs=pl.BlockSpec((tm, tn), lambda i, j: (i, j)),
        scratch_shapes=[pltpu.VMEM((tm, d), jnp.bfloat16)],
        # j must stay "arbitrary": the j==0 LN-prologue scratch is reused across j.
        compiler_params=_compiler_params(("parallel", "arbitrary")),
    )(x2d, g.reshape(1, d), beta.reshape(1, d), w,
      b.reshape(1, vocab).astype(jnp.float32))


def attention_core(qkv, *, num_heads, scale, out_dtype=jnp.bfloat16):
    """qkv: (B, S, 3D) bf16 fused projection.  Requires S == num_heads (constraint
    of the buggy module).  Output (B, S, D) bf16."""
    B, S, threeD = qkv.shape
    D = threeD // 3
    return pl.pallas_call(
        functools.partial(_attention_kernel, num_heads=num_heads, scale=scale),
        out_shape=jax.ShapeDtypeStruct((B, S, D), out_dtype),
        grid=(B,),
        in_specs=[pl.BlockSpec((1, S, threeD), lambda b: (b, 0, 0))],
        out_specs=pl.BlockSpec((1, S, D), lambda b: (b, 0, 0)),
        compiler_params=_compiler_params(("parallel",)),
    )(qkv)


# ----------------------------------------------------------------------------
# Model forward (embedding/glue in plain JAX, hot path in Pallas)
# ----------------------------------------------------------------------------
@functools.partial(jax.jit, static_argnames=("num_heads",))
def sharded_transformer_forward(idx, params, *, num_heads):
    B, S = idx.shape
    tok_emb = jnp.take(params["tok_emb"], idx, axis=0)                 # (B, S, D)
    pos_ids = jnp.arange(1, S + 1, dtype=jnp.int32)                    # quirk: 1..S
    pos_emb = jnp.take(params["pos_emb"], pos_ids, axis=0)[None]       # (1, S, D)
    x = tok_emb + pos_emb                                              # dropout = identity
    D = x.shape[-1]
    H = num_heads
    assert D % H == 0
    hd = D // H
    assert S == H, "buggy broadcasted attention requires seq_len == num_heads"
    scale = 1.0 / hd                                                   # quirk: 1/head_dim
    N = B * S

    x2 = x.reshape(N, D)                                               # f32 residual stream
    for layer in params["layers"]:
        # fused QKV projection (bf16 output, consumed directly by attention)
        qkv = linear(x2, layer["w_qkv"], layer["b_qkv"])               # (N, 3D) bf16
        attn = attention_core(qkv.reshape(B, S, 3 * D),
                              num_heads=H, scale=scale)                # (B, S, D) bf16

        # out_proj + residual add + attn_norm (LayerNorm), fused
        x2 = matmul_residual_layernorm(attn.reshape(N, D), layer["wo"], layer["bo"],
                                       x2, layer["ln1_w"], layer["ln1_b"])

        # fc1 + ReLU + fc2 + residual add + ffn_norm (LayerNorm), fused
        x2 = ffn_residual_layernorm(x2, layer["w1"], layer["b1"],
                                    layer["w2"], layer["b2"],
                                    layer["ln2_w"], layer["ln2_b"])

    # final LayerNorm fused into the lm head
    logits = layernorm_lm_head(x2, params["norm_w"], params["norm_b"],
                               params["lm_w"], params["lm_b"]).reshape(B, S, -1)
    return logits


# ----------------------------------------------------------------------------
# Deterministic parameter init (shapes from the module's __init__)
# ----------------------------------------------------------------------------
def init_params(key, *, num_layers, dim, ffn_dim, vocab_size, block_size):
    keys = jax.random.split(key, 3 + num_layers)
    params = {
        "tok_emb": 0.02 * jax.random.normal(keys[0], (vocab_size, dim), jnp.float32),
        "pos_emb": 0.02 * jax.random.normal(keys[1], (block_size, dim), jnp.float32),
        "norm_w": jnp.ones((dim,), jnp.float32),
        "norm_b": jnp.zeros((dim,), jnp.float32),
        "lm_w": (0.1 * jax.random.normal(keys[2], (dim, vocab_size), jnp.float32)
                 ).astype(jnp.bfloat16),
        "lm_b": jnp.zeros((vocab_size,), jnp.float32),
        "layers": [],
    }
    for l in range(num_layers):
        lk = jax.random.split(keys[3 + l], 6)
        wq = 0.1 * jax.random.normal(lk[0], (dim, dim), jnp.float32)
        wk = 0.1 * jax.random.normal(lk[1], (dim, dim), jnp.float32)
        wv = 0.1 * jax.random.normal(lk[2], (dim, dim), jnp.float32)
        layer = {
            "w_qkv": jnp.concatenate([wq, wk, wv], axis=1).astype(jnp.bfloat16),
            "b_qkv": jnp.zeros((3 * dim,), jnp.float32),
            "wo": (0.1 * jax.random.normal(lk[3], (dim, dim), jnp.float32)
                   ).astype(jnp.bfloat16),
            "bo": jnp.zeros((dim,), jnp.float32),
            "ln1_w": jnp.ones((dim,), jnp.float32),
            "ln1_b": jnp.zeros((dim,), jnp.float32),
            "w1": (0.1 * jax.random.normal(lk[4], (dim, ffn_dim), jnp.float32)
                   ).astype(jnp.bfloat16),
            "b1": jnp.zeros((ffn_dim,), jnp.float32),
            "w2": (0.1 * jax.random.normal(lk[5], (ffn_dim, dim), jnp.float32)
                   ).astype(jnp.bfloat16),
            "b2": jnp.zeros((dim,), jnp.float32),
            "ln2_w": jnp.ones((dim,), jnp.float32),
            "ln2_b": jnp.zeros((dim,), jnp.float32),
        }
        params["layers"].append(layer)
    return params


if __name__ == "__main__":
    # Small config consistent with the module's forward.
    # NOTE: the buggy reshape + broadcasted matmul requires seq_len == num_heads,
    # and block_size must be >= seq_len + 1 because positions run 1..seq_len.
    num_layers = 2
    num_heads = 8
    dim = 32
    ffn_dim = 64
    vocab_size = 64
    block_size = 16
    batch = 2
    seq_len = 8  # == num_heads (required by the buggy attention reshape)

    key = jax.random.PRNGKey(0)
    pkey, ikey = jax.random.split(key)
    params = init_params(pkey, num_layers=num_layers, dim=dim, ffn_dim=ffn_dim,
                         vocab_size=vocab_size, block_size=block_size)
    idx = jax.random.randint(ikey, (batch, seq_len), 0, vocab_size, dtype=jnp.int32)

    logits = sharded_transformer_forward(idx, params, num_heads=num_heads)
    logits = jax.block_until_ready(logits)
    assert logits.shape == (batch, seq_len, vocab_size)
    assert bool(jnp.all(jnp.isfinite(logits)))
    print("KERNEL_OK")
</pallas_src>

<mosaic_0001>
module attributes {stable_mosaic.version = 11 : i64} {
  func.func @_mm_bias_kernel(%arg0: i32, %arg1: i32, %arg2: i32, %arg3: memref<8x32xf32, #tpu.memory_space<vmem>>, %arg4: memref<32x96xbf16, #tpu.memory_space<vmem>>, %arg5: memref<1x96xf32, #tpu.memory_space<vmem>>, %arg6: memref<8x96xbf16, #tpu.memory_space<vmem>>, %arg7: memref<8x96xf32, #tpu.memory_space<vmem>>) attributes {dimension_semantics = [#tpu.dimension_semantics<parallel>, #tpu.dimension_semantics<parallel>, #tpu.dimension_semantics<arbitrary>], iteration_bounds = array<i64: 2, 1, 1>, scalar_prefetch = 0 : i64, scratch_operands = 1 : i64, tpu.core_type = #tpu.core_type<tc>, window_params = [{transform_indices = @transform_0, window_bounds = array<i64: 8, 32>}, {transform_indices = @transform_1, window_bounds = array<i64: 32, 96>}, {transform_indices = @transform_2, window_bounds = array<i64: 1, 96>}, {transform_indices = @transform_3, window_bounds = array<i64: 8, 96>}]} {
    %c0_i32 = arith.constant 0 : i32
    %0 = arith.cmpi eq, %arg2, %c0_i32 : i32
    %1 = arith.extui %0 : i1 to i32
    %c0_i32_0 = arith.constant 0 : i32
    %2 = arith.cmpi ne, %1, %c0_i32_0 : i32
    scf.if %2 {
      %cst_10 = arith.constant 0.000000e+00 : f32
      %13 = vector.broadcast %cst_10 : f32 to vector<8x96xf32>
      %c0_11 = arith.constant 0 : index
      %c0_12 = arith.constant 0 : index
      %14 = vector.load %arg7[%c0_11, %c0_12] : memref<8x96xf32, #tpu.memory_space<vmem>>, vector<8x96xf32>
      tpu.vector_store %arg7[%c0_11, %c0_12], %13 {strides = array<i32>} : memref<8x96xf32, #tpu.memory_space<vmem>>, vector<8x96xf32>,
    } else {
    }
    %c0 = arith.constant 0 : index
    %c0_1 = arith.constant 0 : index
    %3 = vector.load %arg7[%c0, %c0_1] : memref<8x96xf32, #tpu.memory_space<vmem>>, vector<8x96xf32>
    %c0_2 = arith.constant 0 : index
    %c0_3 = arith.constant 0 : index
    %4 = vector.load %arg3[%c0_2, %c0_3] : memref<8x32xf32, #tpu.memory_space<vmem>>, vector<8x32xf32>
    %5 = arith.truncf %4 : vector<8x32xf32> to vector<8x32xbf16>
    %c0_4 = arith.constant 0 : index
    %c0_5 = arith.constant 0 : index
    %6 = vector.load %arg4[%c0_4, %c0_5] : memref<32x96xbf16, #tpu.memory_space<vmem>>, vector<32x96xbf16>
    %cst = arith.constant dense<0.000000e+00> : vector<8x96xf32>
    %7 = tpu.matmul %5, %6, %cst {dimension_numbers = #tpu.dot_dimension_numbers<[1], [0], [0], [1], [0, 0, 1, 1], [], []>} : vector<8x32xbf16>, vector<32x96xbf16>, vector<8x96xf32> -> vector<8x96xf32>
    %8 = arith.addf %3, %7 : vector<8x96xf32>
    %c0_6 = arith.constant 0 : index
    %c0_7 = arith.constant 0 : index
    %9 = vector.load %arg7[%c0_6, %c0_7] : memref<8x96xf32, #tpu.memory_space<vmem>>, vector<8x96xf32>
    tpu.vector_store %arg7[%c0_6, %c0_7], %8 {strides = array<i32>} : memref<8x96xf32, #tpu.memory_space<vmem>>, vector<8x96xf32>,
    %c0_i32_8 = arith.constant 0 : i32
    %10 = arith.cmpi eq, %arg2, %c0_i32_8 : i32
    %11 = arith.extui %10 : i1 to i32
    %c0_i32_9 = arith.constant 0 : i32
    %12 = arith.cmpi ne, %11, %c0_i32_9 : i32
    scf.if %12 {
      %c0_10 = arith.constant 0 : index
      %c0_11 = arith.constant 0 : index
      %13 = vector.load %arg7[%c0_10, %c0_11] : memref<8x96xf32, #tpu.memory_space<vmem>>, vector<8x96xf32>
      %c0_12 = arith.constant 0 : index
      %c0_13 = arith.constant 0 : index
      %14 = vector.load %arg5[%c0_12, %c0_13] : memref<1x96xf32, #tpu.memory_space<vmem>>, vector<1x96xf32>
      %15 = vector.broadcast %14 : vector<1x96xf32> to vector<8x96xf32>
      %16 = arith.addf %13, %15 : vector<8x96xf32>
      %17 = arith.truncf %16 : vector<8x96xf32> to vector<8x96xbf16>
      %c0_14 = arith.constant 0 : index
      %c0_15 = arith.constant 0 : index
      %18 = vector.load %arg6[%c0_14, %c0_15] : memref<8x96xbf16, #tpu.memory_space<vmem>>, vector<8x96xbf16>
      tpu.vector_store %arg6[%c0_14, %c0_15], %17 {strides = array<i32>} : memref<8x96xbf16, #tpu.memory_space<vmem>>, vector<8x96xbf16>,
    } else {
    }
    return
  }
  func.func @transform_0(%arg0: i32, %arg1: i32, %arg2: i32) -> (i32, i32) {
    %c0_i32 = arith.constant 0 : i32
    return %arg0, %arg2 : i32, i32
  }
  func.func @transform_1(%arg0: i32, %arg1: i32, %arg2: i32) -> (i32, i32) {
    %c0_i32 = arith.constant 0 : i32
    return %arg2, %arg1 : i32, i32
  }
  func.func @transform_2(%arg0: i32, %arg1: i32, %arg2: i32) -> (i32, i32) {
    %c0_i32 = arith.constant 0 : i32
    %c0_i32_0 = arith.constant 0 : i32
    return %c0_i32, %arg1 : i32, i32
  }
  func.func @transform_3(%arg0: i32, %arg1: i32, %arg2: i32) -> (i32, i32) {
    %c0_i32 = arith.constant 0 : i32
    return %arg0, %arg1 : i32, i32
  }
}

module attributes {stable_mosaic.version = 11 : i64} {
  func.func @_mm_res_ln_kernel(%arg0: i32, %arg1: i32, %arg2: memref<8x32xbf16, #tpu.memory_space<vmem>>, %arg3: memref<32x32xbf16, #tpu.memory_space<vmem>>, %arg4: memref<1x32xf32, #tpu.memory_space<vmem>>, %arg5: memref<8x32xf32, #tpu.memory_space<vmem>>, %arg6: memref<1x32xf32, #tpu.memory_space<vmem>>, %arg7: memref<1x32xf32, #tpu.memory_space<vmem>>, %arg8: memref<8x32xf32, #tpu.memory_space<vmem>>, %arg9: memref<8x32xf32, #tpu.memory_space<vmem>>) attributes {dimension_semantics = [#tpu.dimension_semantics<parallel>, #tpu.dimension_semantics<arbitrary>], iteration_bounds = array<i64: 2, 1>, scalar_prefetch = 0 : i64, scratch_operands = 1 : i64, tpu.core_type = #tpu.core_type<tc>, window_params = [{transform_indices = @transform_0, window_bounds = array<i64: 8, 32>}, {transform_indices = @transform_1, window_bounds = array<i64: 32, 32>}, {pipeline_mode = #tpu.pipeline_mode<synchronous>, transform_indices = @transform_2, window_bounds = array<i64: 1, 32>}, {transform_indices = @transform_3, window_bounds = array<i64: 8, 32>}, {pipeline_mode = #tpu.pipeline_mode<synchronous>, transform_indices = @transform_4, window_bounds = array<i64: 1, 32>}, {pipeline_mode = #tpu.pipeline_mode<synchronous>, transform_indices = @transform_5, window_bounds = array<i64: 1, 32>}, {transform_indices = @transform_6, window_bounds = array<i64: 8, 32>}]} {
    %c0_i32 = arith.constant 0 : i32
    %0 = arith.cmpi eq, %arg1, %c0_i32 : i32
    %1 = arith.extui %0 : i1 to i32
    %c0_i32_0 = arith.constant 0 : i32
    %2 = arith.cmpi ne, %1, %c0_i32_0 : i32
    scf.if %2 {
      %cst_10 = arith.constant 0.000000e+00 : f32
      %12 = vector.broadcast %cst_10 : f32 to vector<8x32xf32>
      %c0_11 = arith.constant 0 : index
      %c0_12 = arith.constant 0 : index
      %13 = vector.load %arg9[%c0_11, %c0_12] : memref<8x32xf32, #tpu.memory_space<vmem>>, vector<8x32xf32>
      tpu.vector_store %arg9[%c0_11, %c0_12], %12 {strides = array<i32>} : memref<8x32xf32, #tpu.memory_space<vmem>>, vector<8x32xf32>,
    } else {
    }
    %c0 = arith.constant 0 : index
    %c0_1 = arith.constant 0 : index
    %3 = vector.load %arg9[%c0, %c0_1] : memref<8x32xf32, #tpu.memory_space<vmem>>, vector<8x32xf32>
    %c0_2 = arith.constant 0 : index
    %c0_3 = arith.constant 0 : index
    %4 = vector.load %arg2[%c0_2, %c0_3] : memref<8x32xbf16, #tpu.memory_space<vmem>>, vector<8x32xbf16>
    %c0_4 = arith.constant 0 : index
    %c0_5 = arith.constant 0 : index
    %5 = vector.load %arg3[%c0_4, %c0_5] : memref<32x32xbf16, #tpu.memory_space<vmem>>, vector<32x32xbf16>
    %cst = arith.constant dense<0.000000e+00> : vector<8x32xf32>
    %6 = tpu.matmul %4, %5, %cst {dimension_numbers = #tpu.dot_dimension_numbers<[1], [0], [0], [1], [0, 0, 1, 1], [], []>} : vector<8x32xbf16>, vector<32x32xbf16>, vector<8x32xf32> -> vector<8x32xf32>
    %7 = arith.addf %3, %6 : vector<8x32xf32>
    %c0_6 = arith.constant 0 : index
    %c0_7 = arith.constant 0 : index
    %8 = vector.load %arg9[%c0_6, %c0_7] : memref<8x32xf32, #tpu.memory_space<vmem>>, vector<8x32xf32>
    tpu.vector_store %arg9[%c0_6, %c0_7], %7 {strides = array<i32>} : memref<8x32xf32, #tpu.memory_space<vmem>>, vector<8x32xf32>,
    %c0_i32_8 = arith.constant 0 : i32
    %9 = arith.cmpi eq, %arg1, %c0_i32_8 : i32
    %10 = arith.extui %9 : i1 to i32
    %c0_i32_9 = arith.constant 0 : i32
    %11 = arith.cmpi ne, %10, %c0_i32_9 : i32
    scf.if %11 {
      %c0_10 = arith.constant 0 : index
      %c0_11 = arith.constant 0 : index
      %12 = vector.load %arg9[%c0_10, %c0_11] : memref<8x32xf32, #tpu.memory_space<vmem>>, vector<8x32xf32>
      %c0_12 = arith.constant 0 : index
      %c0_13 = arith.constant 0 : index
      %13 = vector.load %arg4[%c0_12, %c0_13] : memref<1x32xf32, #tpu.memory_space<vmem>>, vector<1x32xf32>
      %14 = vector.broadcast %13 : vector<1x32xf32> to vector<8x32xf32>
      %15 = arith.addf %12, %14 : vector<8x32xf32>
      %c0_14 = arith.constant 0 : index
      %c0_15 = arith.constant 0 : index
      %16 = vector.load %arg5[%c0_14, %c0_15] : memref<8x32xf32, #tpu.memory_space<vmem>>, vector<8x32xf32>
      %17 = arith.addf %15, %16 : vector<8x32xf32>
      %c0_16 = arith.constant 0 : index
      %c0_17 = arith.constant 0 : index
      %18 = vector.load %arg6[%c0_16, %c0_17] : memref<1x32xf32, #tpu.memory_space<vmem>>, vector<1x32xf32>
      %c0_18 = arith.constant 0 : index
      %c0_19 = arith.constant 0 : index
      %19 = vector.load %arg7[%c0_18, %c0_19] : memref<1x32xf32, #tpu.memory_space<vmem>>, vector<1x32xf32>
      %cst_20 = arith.constant dense<0.000000e+00> : vector<8xf32>
      %20 = vector.multi_reduction <add>, %17, %cst_20 [1] : vector<8x32xf32> to vector<8xf32>
      %21 = vector.shape_cast %20 : vector<8xf32> to vector<8x1xf32>
      %22 = arith.mulf %17, %17 : vector<8x32xf32>
      %cst_21 = arith.constant dense<0.000000e+00> : vector<8xf32>
      %23 = vector.multi_reduction <add>, %22, %cst_21 [1] : vector<8x32xf32> to vector<8xf32>
      %24 = vector.shape_cast %23 : vector<8xf32> to vector<8x1xf32>
      %cst_22 = arith.constant 3.125000e-02 : f32
      %25 = vector.broadcast %cst_22 : f32 to vector<8x1xf32>
      %26 = arith.mulf %21, %25 : vector<8x1xf32>
      %27 = arith.mulf %21, %26 : vector<8x1xf32>
      %28 = arith.subf %24, %27 : vector<8x1xf32>
      %cst_23 = arith.constant 0.0322580636 : f32
      %29 = vector.broadcast %cst_23 : f32 to vector<8x1xf32>
      %30 = arith.mulf %28, %29 : vector<8x1xf32>
      %31 = vector.broadcast %26 : vector<8x1xf32> to vector<8x32xf32>
      %32 = arith.subf %17, %31 : vector<8x32xf32>
      %cst_24 = arith.constant 9.99999974E-6 : f32
      %33 = vector.broadcast %cst_24 : f32 to vector<8x1xf32>
      %34 = arith.addf %30, %33 : vector<8x1xf32>
      %35 = math.rsqrt %34 : vector<8x1xf32>
      %36 = vector.broadcast %35 : vector<8x1xf32> to vector<8x32xf32>
      %37 = arith.mulf %32, %36 : vector<8x32xf32>
      %38 = vector.broadcast %18 : vector<1x32xf32> to vector<8x32xf32>
      %39 = arith.mulf %37, %38 : vector<8x32xf32>
      %40 = vector.broadcast %19 : vector<1x32xf32> to vector<8x32xf32>
      %41 = arith.addf %39, %40 : vector<8x32xf32>
      %c0_25 = arith.constant 0 : index
      %c0_26 = arith.constant 0 : index
      %42 = vector.load %arg8[%c0_25, %c0_26] : memref<8x32xf32, #tpu.memory_space<vmem>>, vector<8x32xf32>
      tpu.vector_store %arg8[%c0_25, %c0_26], %41 {strides = array<i32>} : memref<8x32xf32, #tpu.memory_space<vmem>>, vector<8x32xf32>,
    } else {
    }
    return
  }
  func.func @transform_0(%arg0: i32, %arg1: i32) -> (i32, i32) {
    %c0_i32 = arith.constant 0 : i32
    return %arg0, %arg1 : i32, i32
  }
  func.func @transform_1(%arg0: i32, %arg1: i32) -> (i32, i32) {
    %c0_i32 = arith.constant 0 : i32
    %c0_i32_0 = arith.constant 0 : i32
    return %arg1, %c0_i32 : i32, i32
  }
  func.func @transform_2(%arg0: i32, %arg1: i32) -> (i32, i32) {
    %c0_i32 = arith.constant 0 : i32
    %c0_i32_0 = arith.constant 0 : i32
    %c0_i32_1 = arith.constant 0 : i32
    return %c0_i32, %c0_i32_0 : i32, i32
  }
  func.func @transform_3(%arg0: i32, %arg1: i32) -> (i32, i32) {
    %c0_i32 = arith.constant 0 : i32
    %c0_i32_0 = arith.constant 0 : i32
    return %arg0, %c0_i32 : i32, i32
  }
  func.func @transform_4(%arg0: i32, %arg1: i32) -> (i32, i32) {
    %c0_i32 = arith.constant 0 : i32
    %c0_i32_0 = arith.constant 0 : i32
    %c0_i32_1 = arith.constant 0 : i32
    return %c0_i32, %c0_i32_0 : i32, i32
  }
  func.func @transform_5(%arg0: i32, %arg1: i32) -> (i32, i32) {
    %c0_i32 = arith.constant 0 : i32
    %c0_i32_0 = arith.constant 0 : i32
    %c0_i32_1 = arith.constant 0 : i32
    return %c0_i32, %c0_i32_0 : i32, i32
  }
  func.func @transform_6(%arg0: i32, %arg1: i32) -> (i32, i32) {
    %c0_i32 = arith.constant 0 : i32
    %c0_i32_0 = arith.constant 0 : i32
    return %arg0, %c0_i32 : i32, i32
  }
}

module attributes {stable_mosaic.version = 11 : i64} {
  func.func @_attention_kernel(%arg0: i32, %arg1: memref<1x8x96xbf16, #tpu.memory_space<vmem>>, %arg2: memref<1x8x32xbf16, #tpu.memory_space<vmem>>) attributes {dimension_semantics = [#tpu.dimension_semantics<parallel>], iteration_bounds = array<i64: 2>, scalar_prefetch = 0 : i64, scratch_operands = 0 : i64, tpu.core_type = #tpu.core_type<tc>, window_params = [{transform_indices = @transform_0, window_bounds = array<i64: 1, 8, 96>}, {transform_indices = @transform_1, window_bounds = array<i64: 1, 8, 32>}]} {
    %c0 = arith.constant 0 : index
    %c0_0 = arith.constant 0 : index
    %c0_1 = arith.constant 0 : index
    %0 = vector.load %arg1[%c0, %c0_0, %c0_1] : memref<1x8x96xbf16, #tpu.memory_space<vmem>>, vector<1x8x96xbf16>
    %1 = vector.shape_cast %0 : vector<1x8x96xbf16> to vector<8x96xbf16>
    %2 = vector.extract_strided_slice %1 {offsets = [0, 0], sizes = [8, 32], strides = [1, 1]} : vector<8x96xbf16> to vector<8x32xbf16>
    %3 = vector.extract_strided_slice %1 {offsets = [0, 32], sizes = [8, 32], strides = [1, 1]} : vector<8x96xbf16> to vector<8x32xbf16>
    %4 = vector.extract_strided_slice %1 {offsets = [0, 64], sizes = [8, 32], strides = [1, 1]} : vector<8x96xbf16> to vector<8x32xbf16>
    %5 = tpu.iota {dimensions = array<i32: 0>} : vector<8x8xi32>
    %6 = tpu.iota {dimensions = array<i32: 1>} : vector<8x8xi32>
    %7 = arith.cmpi sge, %5, %6 : vector<8x8xi32>
    %8 = vector.extract_strided_slice %2 {offsets = [0, 0], sizes = [8, 4], strides = [1, 1]} : vector<8x32xbf16> to vector<8x4xbf16>
    %9 = vector.extract_strided_slice %3 {offsets = [0, 0], sizes = [8, 4], strides = [1, 1]} : vector<8x32xbf16> to vector<8x4xbf16>
    %10 = vector.extract_strided_slice %4 {offsets = [0, 0], sizes = [8, 4], strides = [1, 1]} : vector<8x32xbf16> to vector<8x4xbf16>
    %cst = arith.constant dense<0.000000e+00> : vector<8x8xf32>
    %11 = tpu.matmul %8, %9, %cst {dimension_numbers = #tpu.dot_dimension_numbers<[1], [1], [0], [0], [0, 0, 1, 0], [], []>} : vector<8x4xbf16>, vector<8x4xbf16>, vector<8x8xf32> -> vector<8x8xf32>
    %cst_2 = arith.constant 2.500000e-01 : f32
    %12 = vector.broadcast %cst_2 : f32 to vector<8x8xf32>
    %13 = arith.mulf %11, %12 : vector<8x8xf32>
    %cst_3 = arith.constant 0xFF800000 : f32
    %14 = vector.broadcast %cst_3 : f32 to vector<8x8xf32>
    %15 = arith.select %7, %13, %14 : vector<8x8xi1>, vector<8x8xf32>
    %cst_4 = arith.constant dense<0xFF800000> : vector<8xf32>
    %16 = vector.multi_reduction <maximumf>, %15, %cst_4 [1] : vector<8x8xf32> to vector<8xf32>
    %17 = vector.shape_cast %16 : vector<8xf32> to vector<8x1xf32>
    %18 = vector.broadcast %17 : vector<8x1xf32> to vector<8x8xf32>
    %19 = arith.subf %15, %18 : vector<8x8xf32>
    %20 = math.exp %19 : vector<8x8xf32>
    %cst_5 = arith.constant dense<0.000000e+00> : vector<8xf32>
    %21 = vector.multi_reduction <add>, %20, %cst_5 [1] : vector<8x8xf32> to vector<8xf32>
    %22 = vector.shape_cast %21 : vector<8xf32> to vector<8x1xf32>
    %23 = vector.broadcast %22 : vector<8x1xf32> to vector<8x8xf32>
    %24 = arith.divf %20, %23 : vector<8x8xf32>
    %25 = arith.truncf %24 : vector<8x8xf32> to vector<8x8xbf16>
    %cst_6 = arith.constant dense<0.000000e+00> : vector<8x4xf32>
    %26 = tpu.matmul %25, %10, %cst_6 {dimension_numbers = #tpu.dot_dimension_numbers<[1], [0], [0], [1], [0, 0, 1, 1], [], []>} : vector<8x8xbf16>, vector<8x4xbf16>, vector<8x4xf32> -> vector<8x4xf32>
    %27 = vector.extract_strided_slice %2 {offsets = [0, 4], sizes = [8, 4], strides = [1, 1]} : vector<8x32xbf16> to vector<8x4xbf16>
    %28 = vector.extract_strided_slice %3 {offsets = [0, 4], sizes = [8, 4], strides = [1, 1]} : vector<8x32xbf16> to vector<8x4xbf16>
    %29 = vector.extract_strided_slice %4 {offsets = [0, 4], sizes = [8, 4], strides = [1, 1]} : vector<8x32xbf16> to vector<8x4xbf16>
    %cst_7 = arith.constant dense<0.000000e+00> : vector<8x8xf32>
    %30 = tpu.matmul %27, %28, %cst_7 {dimension_numbers = #tpu.dot_dimension_numbers<[1], [1], [0], [0], [0, 0, 1, 0], [], []>} : vector<8x4xbf16>, vector<8x4xbf16>, vector<8x8xf32> -> vector<8x8xf32>
    %cst_8 = arith.constant 2.500000e-01 : f32
    %31 = vector.broadcast %cst_8 : f32 to vector<8x8xf32>
    %32 = arith.mulf %30, %31 : vector<8x8xf32>
    %cst_9 = arith.constant 0xFF800000 : f32
    %33 = vector.broadcast %cst_9 : f32 to vector<8x8xf32>
    %34 = arith.select %7, %32, %33 : vector<8x8xi1>, vector<8x8xf32>
    %cst_10 = arith.constant dense<0xFF800000> : vector<8xf32>
    %35 = vector.multi_reduction <maximumf>, %34, %cst_10 [1] : vector<8x8xf32> to vector<8xf32>
    %36 = vector.shape_cast %35 : vector<8xf32> to vector<8x1xf32>
    %37 = vector.broadcast %36 : vector<8x1xf32> to vector<8x8xf32>
    %38 = arith.subf %34, %37 : vector<8x8xf32>
    %39 = math.exp %38 : vector<8x8xf32>
    %cst_11 = arith.constant dense<0.000000e+00> : vector<8xf32>
    %40 = vector.multi_reduction <add>, %39, %cst_11 [1] : vector<8x8xf32> to vector<8xf32>
    %41 = vector.shape_cast %40 : vector<8xf32> to vector<8x1xf32>
    %42 = vector.broadcast %41 : vector<8x1xf32> to vector<8x8xf32>
    %43 = arith.divf %39, %42 : vector<8x8xf32>
    %44 = arith.truncf %43 : vector<8x8xf32> to vector<8x8xbf16>
    %cst_12 = arith.constant dense<0.000000e+00> : vector<8x4xf32>
    %45 = tpu.matmul %44, %29, %cst_12 {dimension_numbers = #tpu.dot_dimension_numbers<[1], [0], [0], [1], [0, 0, 1, 1], [], []>} : vector<8x8xbf16>, vector<8x4xbf16>, vector<8x4xf32> -> vector<8x4xf32>
    %46 = vector.extract_strided_slice %2 {offsets = [0, 8], sizes = [8, 4], strides = [1, 1]} : vector<8x32xbf16> to vector<8x4xbf16>
    %47 = vector.extract_strided_slice %3 {offsets = [0, 8], sizes = [8, 4], strides = [1, 1]} : vector<8x32xbf16> to vector<8x4xbf16>
    %48 = vector.extract_strided_slice %4 {offsets = [0, 8], sizes = [8, 4], strides = [1, 1]} : vector<8x32xbf16> to vector<8x4xbf16>
    %cst_13 = arith.constant dense<0.000000e+00> : vector<8x8xf32>
    %49 = tpu.matmul %46, %47, %cst_13 {dimension_numbers = #tpu.dot_dimension_numbers<[1], [1], [0], [0], [0, 0, 1, 0], [], []>} : vector<8x4xbf16>, vector<8x4xbf16>, vector<8x8xf32> -> vector<8x8xf32>
    %cst_14 = arith.constant 2.500000e-01 : f32
    %50 = vector.broadcast %cst_14 : f32 to vector<8x8xf32>
    %51 = arith.mulf %49, %50 : vector<8x8xf32>
    %cst_15 = arith.constant 0xFF800000 : f32
    %52 = vector.broadcast %cst_15 : f32 to vector<8x8xf32>
    %53 = arith.select %7, %51, %52 : vector<8x8xi1>, vector<8x8xf32>
    %cst_16 = arith.constant dense<0xFF800000> : vector<8xf32>
    %54 = vector.multi_reduction <maximumf>, %53, %cst_16 [1] : vector<8x8xf32> to vector<8xf32>
    %55 = vector.shape_cast %54 : vector<8xf32> to vector<8x1xf32>
    %56 = vector.broadcast %55 : vector<8x1xf32> to vector<8x8xf32>
    %57 = arith.subf %53, %56 : vector<8x8xf32>
    %58 = math.exp %57 : vector<8x8xf32>
    %cst_17 = arith.constant dense<0.000000e+00> : vector<8xf32>
    %59 = vector.multi_reduction <add>, %58, %cst_17 [1] : vector<8x8xf32> to vector<8xf32>
    %60 = vector.shape_cast %59 : vector<8xf32> to vector<8x1xf32>
    %61 = vector.broadcast %60 : vector<8x1xf32> to vector<8x8xf32>
    %62 = arith.divf %58, %61 : vector<8x8xf32>
    %63 = arith.truncf %62 : vector<8x8xf32> to vector<8x8xbf16>
    %cst_18 = arith.constant dense<0.000000e+00> : vector<8x4xf32>
    %64 = tpu.matmul %63, %48, %cst_18 {dimension_numbers = #tpu.dot_dimension_numbers<[1], [0], [0], [1], [0, 0, 1, 1], [], []>} : vector<8x8xbf16>, vector<8x4xbf16>, vector<8x4xf32> -> vector<8x4xf32>
    %65 = vector.extract_strided_slice %2 {offsets = [0, 12], sizes = [8, 4], strides = [1, 1]} : vector<8x32xbf16> to vector<8x4xbf16>
    %66 = vector.extract_strided_slice %3 {offsets = [0, 12], sizes = [8, 4], strides = [1, 1]} : vector<8x32xbf16> to vector<8x4xbf16>
    %67 = vector.extract_strided_slice %4 {offsets = [0, 12], sizes = [8, 4], strides = [1, 1]} : vector<8x32xbf16> to vector<8x4xbf16>
    %cst_19 = arith.constant dense<0.000000e+00> : vector<8x8xf32>
    %68 = tpu.matmul %65, %66, %cst_19 {dimension_numbers = #tpu.dot_dimension_numbers<[1], [1], [0], [0], [0, 0, 1, 0], [], []>} : vector<8x4xbf16>, vector<8x4xbf16>, vector<8x8xf32> -> vector<8x8xf32>
    %cst_20 = arith.constant 2.500000e-01 : f32
    %69 = vector.broadcast %cst_20 : f32 to vector<8x8xf32>
    %70 = arith.mulf %68, %69 : vector<8x8xf32>
    %cst_21 = arith.constant 0xFF800000 : f32
    %71 = vector.broadcast %cst_21 : f32 to vector<8x8xf32>
    %72 = arith.select %7, %70, %71 : vector<8x8xi1>, vector<8x8xf32>
    %cst_22 = arith.constant dense<0xFF800000> : vector<8xf32>
    %73 = vector.multi_reduction <maximumf>, %72, %cst_22 [1] : vector<8x8xf32> to vector<8xf32>
    %74 = vector.shape_cast %73 : vector<8xf32> to vector<8x1xf32>
    %75 = vector.broadcast %74 : vector<8x1xf32> to vector<8x8xf32>
    %76 = arith.subf %72, %75 : vector<8x8xf32>
    %77 = math.exp %76 : vector<8x8xf32>
    %cst_23 = arith.constant dense<0.000000e+00> : vector<8xf32>
    %78 = vector.multi_reduction <add>, %77, %cst_23 [1] : vector<8x8xf32> to vector<8xf32>
    %79 = vector.shape_cast %78 : vector<8xf32> to vector<8x1xf32>
    %80 = vector.broadcast %79 : vector<8x1xf32> to vector<8x8xf32>
    %81 = arith.divf %77, %80 : vector<8x8xf32>
    %82 = arith.truncf %81 : vector<8x8xf32> to vector<8x8xbf16>
    %cst_24 = arith.constant dense<0.000000e+00> : vector<8x4xf32>
    %83 = tpu.matmul %82, %67, %cst_24 {dimension_numbers = #tpu.dot_dimension_numbers<[1], [0], [0], [1], [0, 0, 1, 1], [], []>} : vector<8x8xbf16>, vector<8x4xbf16>, vector<8x4xf32> -> vector<8x4xf32>
    %84 = vector.extract_strided_slice %2 {offsets = [0, 16], sizes = [8, 4], strides = [1, 1]} : vector<8x32xbf16> to vector<8x4xbf16>
    %85 = vector.extract_strided_slice %3 {offsets = [0, 16], sizes = [8, 4], strides = [1, 1]} : vector<8x32xbf16> to vector<8x4xbf16>
    %86 = vector.extract_strided_slice %4 {offsets = [0, 16], sizes = [8, 4], strides = [1, 1]} : vector<8x32xbf16> to vector<8x4xbf16>
    %cst_25 = arith.constant dense<0.000000e+00> : vector<8x8xf32>
    %87 = tpu.matmul %84, %85, %cst_25 {dimension_numbers = #tpu.dot_dimension_numbers<[1], [1], [0], [0], [0, 0, 1, 0], [], []>} : vector<8x4xbf16>, vector<8x4xbf16>, vector<8x8xf32> -> vector<8x8xf32>
    %cst_26 = arith.constant 2.500000e-01 : f32
    %88 = vector.broadcast %cst_26 : f32 to vector<8x8xf32>
    %89 = arith.mulf %87, %88 : vector<8x8xf32>
    %cst_27 = arith.constant 0xFF800000 : f32
    %90 = vector.broadcast %cst_27 : f32 to vector<8x8xf32>
    %91 = arith.select %7, %89, %90 : vector<8x8xi1>, vector<8x8xf32>
    %cst_28 = arith.constant dense<0xFF800000> : vector<8xf32>
    %92 = vector.multi_reduction <maximumf>, %91, %cst_28 [1] : vector<8x8xf32> to vector<8xf32>
    %93 = vector.shape_cast %92 : vector<8xf32> to vector<8x1xf32>
    %94 = vector.broadcast %93 : vector<8x1xf32> to vector<8x8xf32>
    %95 = arith.subf %91, %94 : vector<8x8xf32>
    %96 = math.exp %95 : vector<8x8xf32>
    %cst_29 = arith.constant dense<0.000000e+00> : vector<8xf32>
    %97 = vector.multi_reduction <add>, %96, %cst_29 [1] : vector<8x8xf32> to vector<8xf32>
    %98 = vector.shape_cast %97 : vector<8xf32> to vector<8x1xf32>
    %99 = vector.broadcast %98 : vector<8x1xf32> to vector<8x8xf32>
    %100 = arith.divf %96, %99 : vector<8x8xf32>
    %101 = arith.truncf %100 : vector<8x8xf32> to vector<8x8xbf16>
    %cst_30 = arith.constant dense<0.000000e+00> : vector<8x4xf32>
    %102 = tpu.matmul %101, %86, %cst_30 {dimension_numbers = #tpu.dot_dimension_numbers<[1], [0], [0], [1], [0, 0, 1, 1], [], []>} : vector<8x8xbf16>, vector<8x4xbf16>, vector<8x4xf32> -> vector<8x4xf32>
    %103 = vector.extract_strided_slice %2 {offsets = [0, 20], sizes = [8, 4], strides = [1, 1]} : vector<8x32xbf16> to vector<8x4xbf16>
    %104 = vector.extract_strided_slice %3 {offsets = [0, 20], sizes = [8, 4], strides = [1, 1]} : vector<8x32xbf16> to vector<8x4xbf16>
    %105 = vector.extract_strided_slice %4 {offsets = [0, 20], sizes = [8, 4], strides = [1, 1]} : vector<8x32xbf16> to vector<8x4xbf16>
    %cst_31 = arith.constant dense<0.000000e+00> : vector<8x8xf32>
    %106 = tpu.matmul %103, %104, %cst_31 {dimension_numbers = #tpu.dot_dimension_numbers<[1], [1], [0], [0], [0, 0, 1, 0], [], []>} : vector<8x4xbf16>, vector<8x4xbf16>, vector<8x8xf32> -> vector<8x8xf32>
    %cst_32 = arith.constant 2.500000e-01 : f32
    %107 = vector.broadcast %cst_32 : f32 to vector<8x8xf32>
    %108 = arith.mulf %106, %107 : vector<8x8xf32>
    %cst_33 = arith.constant 0xFF800000 : f32
    %109 = vector.broadcast %cst_33 : f32 to vector<8x8xf32>
    %110 = arith.select %7, %108, %109 : vector<8x8xi1>, vector<8x8xf32>
    %cst_34 = arith.constant dense<0xFF800000> : vector<8xf32>
    %111 = vector.multi_reduction <maximumf>, %110, %cst_34 [1] : vector<8x8xf32> to vector<8xf32>
    %112 = vector.shape_cast %111 : vector<8xf32> to vector<8x1xf32>
    %113 = vector.broadcast %112 : vector<8x1xf32> to vector<8x8xf32>
    %114 = arith.subf %110, %113 : vector<8x8xf32>
    %115 = math.exp %114 : vector<8x8xf32>
    %cst_35 = arith.constant dense<0.000000e+00> : vector<8xf32>
    %116 = vector.multi_reduction <add>, %115, %cst_35 [1] : vector<8x8xf32> to vector<8xf32>
    %117 = vector.shape_cast %116 : vector<8xf32> to vector<8x1xf32>
    %118 = vector.broadcast %117 : vector<8x1xf32> to vector<8x8xf32>
    %119 = arith.divf %115, %118 : vector<8x8xf32>
    %120 = arith.truncf %119 : vector<8x8xf32> to vector<8x8xbf16>
    %cst_36 = arith.constant dense<0.000000e+00> : vector<8x4xf32>
    %121 = tpu.matmul %120, %105, %cst_36 {dimension_numbers = #tpu.dot_dimension_numbers<[1], [0], [0], [1], [0, 0, 1, 1], [], []>} : vector<8x8xbf16>, vector<8x4xbf16>, vector<8x4xf32> -> vector<8x4xf32>
    %122 = vector.extract_strided_slice %2 {offsets = [0, 24], sizes = [8, 4], strides = [1, 1]} : vector<8x32xbf16> to vector<8x4xbf16>
    %123 = vector.extract_strided_slice %3 {offsets = [0, 24], sizes = [8, 4], strides = [1, 1]} : vector<8x32xbf16> to vector<8x4xbf16>
    %124 = vector.extract_strided_slice %4 {offsets = [0, 24], sizes = [8, 4], strides = [1, 1]} : vector<8x32xbf16> to vector<8x4xbf16>
    %cst_37 = arith.constant dense<0.000000e+00> : vector<8x8xf32>
    %125 = tpu.matmul %122, %123, %cst_37 {dimension_numbers = #tpu.dot_dimension_numbers<[1], [1], [0], [0], [0, 0, 1, 0], [], []>} : vector<8x4xbf16>, vector<8x4xbf16>, vector<8x8xf32> -> vector<8x8xf32>
    %cst_38 = arith.constant 2.500000e-01 : f32
    %126 = vector.broadcast %cst_38 : f32 to vector<8x8xf32>
    %127 = arith.mulf %125, %126 : vector<8x8xf32>
    %cst_39 = arith.constant 0xFF800000 : f32
    %128 = vector.broadcast %cst_39 : f32 to vector<8x8xf32>
    %129 = arith.select %7, %127, %128 : vector<8x8xi1>, vector<8x8xf32>
    %cst_40 = arith.constant dense<0xFF800000> : vector<8xf32>
    %130 = vector.multi_reduction <maximumf>, %129, %cst_40 [1] : vector<8x8xf32> to vector<8xf32>
    %131 = vector.shape_cast %130 : vector<8xf32> to vector<8x1xf32>
    %132 = vector.broadcast %131 : vector<8x1xf32> to vector<8x8xf32>
    %133 = arith.subf %129, %132 : vector<8x8xf32>
    %134 = math.exp %133 : vector<8x8xf32>
    %cst_41 = arith.constant dense<0.000000e+00> : vector<8xf32>
    %135 = vector.multi_reduction <add>, %134, %cst_41 [1] : vector<8x8xf32> to vector<8xf32>
    %136 = vector.shape_cast %135 : vector<8xf32> to vector<8x1xf32>
    %137 = vector.broadcast %136 : vector<8x1xf32> to vector<8x8xf32>
    %138 = arith.divf %134, %137 : vector<8x8xf32>
    %139 = arith.truncf %138 : vector<8x8xf32> to vector<8x8xbf16>
    %cst_42 = arith.constant dense<0.000000e+00> : vector<8x4xf32>
    %140 = tpu.matmul %139, %124, %cst_42 {dimension_numbers = #tpu.dot_dimension_numbers<[1], [0], [0], [1], [0, 0, 1, 1], [], []>} : vector<8x8xbf16>, vector<8x4xbf16>, vector<8x4xf32> -> vector<8x4xf32>
    %141 = vector.extract_strided_slice %2 {offsets = [0, 28], sizes = [8, 4], strides = [1, 1]} : vector<8x32xbf16> to vector<8x4xbf16>
    %142 = vector.extract_strided_slice %3 {offsets = [0, 28], sizes = [8, 4], strides = [1, 1]} : vector<8x32xbf16> to vector<8x4xbf16>
    %143 = vector.extract_strided_slice %4 {offsets = [0, 28], sizes = [8, 4], strides = [1, 1]} : vector<8x32xbf16> to vector<8x4xbf16>
    %cst_43 = arith.constant dense<0.000000e+00> : vector<8x8xf32>
    %144 = tpu.matmul %141, %142, %cst_43 {dimension_numbers = #tpu.dot_dimension_numbers<[1], [1], [0], [0], [0, 0, 1, 0], [], []>} : vector<8x4xbf16>, vector<8x4xbf16>, vector<8x8xf32> -> vector<8x8xf32>
    %cst_44 = arith.constant 2.500000e-01 : f32
    %145 = vector.broadcast %cst_44 : f32 to vector<8x8xf32>
    %146 = arith.mulf %144, %145 : vector<8x8xf32>
    %cst_45 = arith.constant 0xFF800000 : f32
    %147 = vector.broadcast %cst_45 : f32 to vector<8x8xf32>
    %148 = arith.select %7, %146, %147 : vector<8x8xi1>, vector<8x8xf32>
    %cst_46 = arith.constant dense<0xFF800000> : vector<8xf32>
    %149 = vector.multi_reduction <maximumf>, %148, %cst_46 [1] : vector<8x8xf32> to vector<8xf32>
    %150 = vector.shape_cast %149 : vector<8xf32> to vector<8x1xf32>
    %151 = vector.broadcast %150 : vector<8x1xf32> to vector<8x8xf32>
    %152 = arith.subf %148, %151 : vector<8x8xf32>
    %153 = math.exp %152 : vector<8x8xf32>
    %cst_47 = arith.constant dense<0.000000e+00> : vector<8xf32>
    %154 = vector.multi_reduction <add>, %153, %cst_47 [1] : vector<8x8xf32> to vector<8xf32>
    %155 = vector.shape_cast %154 : vector<8xf32> to vector<8x1xf32>
    %156 = vector.broadcast %155 : vector<8x1xf32> to vector<8x8xf32>
    %157 = arith.divf %153, %156 : vector<8x8xf32>
    %158 = arith.truncf %157 : vector<8x8xf32> to vector<8x8xbf16>
    %cst_48 = arith.constant dense<0.000000e+00> : vector<8x4xf32>
    %159 = tpu.matmul %158, %143, %cst_48 {dimension_numbers = #tpu.dot_dimension_numbers<[1], [0], [0], [1], [0, 0, 1, 1], [], []>} : vector<8x8xbf16>, vector<8x4xbf16>, vector<8x4xf32> -> vector<8x4xf32>
    %160 = tpu.concatenate %26, %45, %64, %83, %102, %121, %140, %159 in 1 : vector<8x4xf32>, vector<8x4xf32>, vector<8x4xf32>, vector<8x4xf32>, vector<8x4xf32>, vector<8x4xf32>, vector<8x4xf32>, vector<8x4xf32> -> vector<8x32xf32>
    %161 = arith.truncf %160 : vector<8x32xf32> to vector<8x32xbf16>
    %c0_49 = arith.constant 0 : index
    %c0_50 = arith.constant 0 : index
    %c0_51 = arith.constant 0 : index
    %162 = vector.load %arg2[%c0_49, %c0_50, %c0_51] : memref<1x8x32xbf16, #tpu.memory_space<vmem>>, vector<1x8x32xbf16>
    %163 = vector.shape_cast %162 : vector<1x8x32xbf16> to vector<8x32xbf16>
    %164 = vector.shape_cast %161 : vector<8x32xbf16> to vector<1x8x32xbf16>
    tpu.vector_store %arg2[%c0_49, %c0_50, %c0_51], %164 {strides = array<i32>} : memref<1x8x32xbf16, #tpu.memory_space<vmem>>, vector<1x8x32xbf16>,
    return
  }
  func.func @transform_0(%arg0: i32) -> (i32, i32, i32) {
    %c0_i32 = arith.constant 0 : i32
    %c0_i32_0 = arith.constant 0 : i32
    %c0_i32_1 = arith.constant 0 : i32
    return %arg0, %c0_i32, %c0_i32_0 : i32, i32, i32
  }
  func.func @transform_1(%arg0: i32) -> (i32, i32, i32) {
    %c0_i32 = arith.constant 0 : i32
    %c0_i32_0 = arith.constant 0 : i32
    %c0_i32_1 = arith.constant 0 : i32
    return %arg0, %c0_i32, %c0_i32_0 : i32, i32, i32
  }
}

module attributes {stable_mosaic.version = 11 : i64} {
  func.func @_ffn_res_ln_kernel(%arg0: i32, %arg1: i32, %arg2: memref<8x32xf32, #tpu.memory_space<vmem>>, %arg3: memref<32x64xbf16, #tpu.memory_space<vmem>>, %arg4: memref<1x64xf32, #tpu.memory_space<vmem>>, %arg5: memref<64x32xbf16, #tpu.memory_space<vmem>>, %arg6: memref<1x32xf32, #tpu.memory_space<vmem>>, %arg7: memref<1x32xf32, #tpu.memory_space<vmem>>, %arg8: memref<1x32xf32, #tpu.memory_space<vmem>>, %arg9: memref<8x32xf32, #tpu.memory_space<vmem>>, %arg10: memref<8x32xf32, #tpu.memory_space<vmem>>) attributes {dimension_semantics = [#tpu.dimension_semantics<parallel>, #tpu.dimension_semantics<arbitrary>], iteration_bounds = array<i64: 2, 1>, scalar_prefetch = 0 : i64, scratch_operands = 1 : i64, tpu.core_type = #tpu.core_type<tc>, window_params = [{transform_indices = @transform_0, window_bounds = array<i64: 8, 32>}, {transform_indices = @transform_1, window_bounds = array<i64: 32, 64>}, {transform_indices = @transform_2, window_bounds = array<i64: 1, 64>}, {transform_indices = @transform_3, window_bounds = array<i64: 64, 32>}, {pipeline_mode = #tpu.pipeline_mode<synchronous>, transform_indices = @transform_4, window_bounds = array<i64: 1, 32>}, {pipeline_mode = #tpu.pipeline_mode<synchronous>, transform_indices = @transform_5, window_bounds = array<i64: 1, 32>}, {pipeline_mode = #tpu.pipeline_mode<synchronous>, transform_indices = @transform_6, window_bounds = array<i64: 1, 32>}, {transform_indices = @transform_7, window_bounds = array<i64: 8, 32>}]} {
    %c0_i32 = arith.constant 0 : i32
    %0 = arith.cmpi eq, %arg1, %c0_i32 : i32
    %1 = arith.extui %0 : i1 to i32
    %c0_i32_0 = arith.constant 0 : i32
    %2 = arith.cmpi ne, %1, %c0_i32_0 : i32
    scf.if %2 {
      %cst_16 = arith.constant 0.000000e+00 : f32
      %21 = vector.broadcast %cst_16 : f32 to vector<8x32xf32>
      %c0_17 = arith.constant 0 : index
      %c0_18 = arith.constant 0 : index
      %22 = vector.load %arg10[%c0_17, %c0_18] : memref<8x32xf32, #tpu.memory_space<vmem>>, vector<8x32xf32>
      tpu.vector_store %arg10[%c0_17, %c0_18], %21 {strides = array<i32>} : memref<8x32xf32, #tpu.memory_space<vmem>>, vector<8x32xf32>,
    } else {
    }
    %c0 = arith.constant 0 : index
    %c0_1 = arith.constant 0 : index
    %3 = vector.load %arg2[%c0, %c0_1] : memref<8x32xf32, #tpu.memory_space<vmem>>, vector<8x32xf32>
    %4 = arith.truncf %3 : vector<8x32xf32> to vector<8x32xbf16>
    %c0_2 = arith.constant 0 : index
    %c0_3 = arith.constant 0 : index
    %5 = vector.load %arg3[%c0_2, %c0_3] : memref<32x64xbf16, #tpu.memory_space<vmem>>, vector<32x64xbf16>
    %cst = arith.constant dense<0.000000e+00> : vector<8x64xf32>
    %6 = tpu.matmul %4, %5, %cst {dimension_numbers = #tpu.dot_dimension_numbers<[1], [0], [0], [1], [0, 0, 1, 1], [], []>} : vector<8x32xbf16>, vector<32x64xbf16>, vector<8x64xf32> -> vector<8x64xf32>
    %c0_4 = arith.constant 0 : index
    %c0_5 = arith.constant 0 : index
    %7 = vector.load %arg4[%c0_4, %c0_5] : memref<1x64xf32, #tpu.memory_space<vmem>>, vector<1x64xf32>
    %8 = vector.broadcast %7 : vector<1x64xf32> to vector<8x64xf32>
    %9 = arith.addf %6, %8 : vector<8x64xf32>
    %cst_6 = arith.constant 0.000000e+00 : f32
    %10 = vector.broadcast %cst_6 : f32 to vector<8x64xf32>
    %11 = arith.maximumf %9, %10 : vector<8x64xf32>
    %12 = arith.truncf %11 : vector<8x64xf32> to vector<8x64xbf16>
    %c0_7 = arith.constant 0 : index
    %c0_8 = arith.constant 0 : index
    %13 = vector.load %arg10[%c0_7, %c0_8] : memref<8x32xf32, #tpu.memory_space<vmem>>, vector<8x32xf32>
    %c0_9 = arith.constant 0 : index
    %c0_10 = arith.constant 0 : index
    %14 = vector.load %arg5[%c0_9, %c0_10] : memref<64x32xbf16, #tpu.memory_space<vmem>>, vector<64x32xbf16>
    %cst_11 = arith.constant dense<0.000000e+00> : vector<8x32xf32>
    %15 = tpu.matmul %12, %14, %cst_11 {dimension_numbers = #tpu.dot_dimension_numbers<[1], [0], [0], [1], [0, 0, 1, 1], [], []>} : vector<8x64xbf16>, vector<64x32xbf16>, vector<8x32xf32> -> vector<8x32xf32>
    %16 = arith.addf %13, %15 : vector<8x32xf32>
    %c0_12 = arith.constant 0 : index
    %c0_13 = arith.constant 0 : index
    %17 = vector.load %arg10[%c0_12, %c0_13] : memref<8x32xf32, #tpu.memory_space<vmem>>, vector<8x32xf32>
    tpu.vector_store %arg10[%c0_12, %c0_13], %16 {strides = array<i32>} : memref<8x32xf32, #tpu.memory_space<vmem>>, vector<8x32xf32>,
    %c0_i32_14 = arith.constant 0 : i32
    %18 = arith.cmpi eq, %arg1, %c0_i32_14 : i32
    %19 = arith.extui %18 : i1 to i32
    %c0_i32_15 = arith.constant 0 : i32
    %20 = arith.cmpi ne, %19, %c0_i32_15 : i32
    scf.if %20 {
      %c0_16 = arith.constant 0 : index
      %c0_17 = arith.constant 0 : index
      %21 = vector.load %arg10[%c0_16, %c0_17] : memref<8x32xf32, #tpu.memory_space<vmem>>, vector<8x32xf32>
      %c0_18 = arith.constant 0 : index
      %c0_19 = arith.constant 0 : index
      %22 = vector.load %arg6[%c0_18, %c0_19] : memref<1x32xf32, #tpu.memory_space<vmem>>, vector<1x32xf32>
      %23 = vector.broadcast %22 : vector<1x32xf32> to vector<8x32xf32>
      %24 = arith.addf %21, %23 : vector<8x32xf32>
      %c0_20 = arith.constant 0 : index
      %c0_21 = arith.constant 0 : index
      %25 = vector.load %arg2[%c0_20, %c0_21] : memref<8x32xf32, #tpu.memory_space<vmem>>, vector<8x32xf32>
      %26 = arith.addf %24, %25 : vector<8x32xf32>
      %c0_22 = arith.constant 0 : index
      %c0_23 = arith.constant 0 : index
      %27 = vector.load %arg7[%c0_22, %c0_23] : memref<1x32xf32, #tpu.memory_space<vmem>>, vector<1x32xf32>
      %c0_24 = arith.constant 0 : index
      %c0_25 = arith.constant 0 : index
      %28 = vector.load %arg8[%c0_24, %c0_25] : memref<1x32xf32, #tpu.memory_space<vmem>>, vector<1x32xf32>
      %cst_26 = arith.constant dense<0.000000e+00> : vector<8xf32>
      %29 = vector.multi_reduction <add>, %26, %cst_26 [1] : vector<8x32xf32> to vector<8xf32>
      %30 = vector.shape_cast %29 : vector<8xf32> to vector<8x1xf32>
      %31 = arith.mulf %26, %26 : vector<8x32xf32>
      %cst_27 = arith.constant dense<0.000000e+00> : vector<8xf32>
      %32 = vector.multi_reduction <add>, %31, %cst_27 [1] : vector<8x32xf32> to vector<8xf32>
      %33 = vector.shape_cast %32 : vector<8xf32> to vector<8x1xf32>
      %cst_28 = arith.constant 3.125000e-02 : f32
      %34 = vector.broadcast %cst_28 : f32 to vector<8x1xf32>
      %35 = arith.mulf %30, %34 : vector<8x1xf32>
      %36 = arith.mulf %30, %35 : vector<8x1xf32>
      %37 = arith.subf %33, %36 : vector<8x1xf32>
      %cst_29 = arith.constant 0.0322580636 : f32
      %38 = vector.broadcast %cst_29 : f32 to vector<8x1xf32>
      %39 = arith.mulf %37, %38 : vector<8x1xf32>
      %40 = vector.broadcast %35 : vector<8x1xf32> to vector<8x32xf32>
      %41 = arith.subf %26, %40 : vector<8x32xf32>
      %cst_30 = arith.constant 9.99999974E-6 : f32
      %42 = vector.broadcast %cst_30 : f32 to vector<8x1xf32>
      %43 = arith.addf %39, %42 : vector<8x1xf32>
      %44 = math.rsqrt %43 : vector<8x1xf32>
      %45 = vector.broadcast %44 : vector<8x1xf32> to vector<8x32xf32>
      %46 = arith.mulf %41, %45 : vector<8x32xf32>
      %47 = vector.broadcast %27 : vector<1x32xf32> to vector<8x32xf32>
      %48 = arith.mulf %46, %47 : vector<8x32xf32>
      %49 = vector.broadcast %28 : vector<1x32xf32> to vector<8x32xf32>
      %50 = arith.addf %48, %49 : vector<8x32xf32>
      %c0_31 = arith.constant 0 : index
      %c0_32 = arith.constant 0 : index
      %51 = vector.load %arg9[%c0_31, %c0_32] : memref<8x32xf32, #tpu.memory_space<vmem>>, vector<8x32xf32>
      tpu.vector_store %arg9[%c0_31, %c0_32], %50 {strides = array<i32>} : memref<8x32xf32, #tpu.memory_space<vmem>>, vector<8x32xf32>,
    } else {
    }
    return
  }
  func.func @transform_0(%arg0: i32, %arg1: i32) -> (i32, i32) {
    %c0_i32 = arith.constant 0 : i32
    %c0_i32_0 = arith.constant 0 : i32
    return %arg0, %c0_i32 : i32, i32
  }
  func.func @transform_1(%arg0: i32, %arg1: i32) -> (i32, i32) {
    %c0_i32 = arith.constant 0 : i32
    %c0_i32_0 = arith.constant 0 : i32
    return %c0_i32, %arg1 : i32, i32
  }
  func.func @transform_2(%arg0: i32, %arg1: i32) -> (i32, i32) {
    %c0_i32 = arith.constant 0 : i32
    %c0_i32_0 = arith.constant 0 : i32
    return %c0_i32, %arg1 : i32, i32
  }
  func.func @transform_3(%arg0: i32, %arg1: i32) -> (i32, i32) {
    %c0_i32 = arith.constant 0 : i32
    %c0_i32_0 = arith.constant 0 : i32
    return %arg1, %c0_i32 : i32, i32
  }
  func.func @transform_4(%arg0: i32, %arg1: i32) -> (i32, i32) {
    %c0_i32 = arith.constant 0 : i32
    %c0_i32_0 = arith.constant 0 : i32
    %c0_i32_1 = arith.constant 0 : i32
    return %c0_i32, %c0_i32_0 : i32, i32
  }
  func.func @transform_5(%arg0: i32, %arg1: i32) -> (i32, i32) {
    %c0_i32 = arith.constant 0 : i32
    %c0_i32_0 = arith.constant 0 : i32
    %c0_i32_1 = arith.constant 0 : i32
    return %c0_i32, %c0_i32_0 : i32, i32
  }
  func.func @transform_6(%arg0: i32, %arg1: i32) -> (i32, i32) {
    %c0_i32 = arith.constant 0 : i32
    %c0_i32_0 = arith.constant 0 : i32
    %c0_i32_1 = arith.constant 0 : i32
    return %c0_i32, %c0_i32_0 : i32, i32
  }
  func.func @transform_7(%arg0: i32, %arg1: i32) -> (i32, i32) {
    %c0_i32 = arith.constant 0 : i32
    %c0_i32_0 = arith.constant 0 : i32
    return %arg0, %c0_i32 : i32, i32
  }
}

module attributes {stable_mosaic.version = 11 : i64} {
  func.func @_ln_mm_bias_kernel(%arg0: i32, %arg1: i32, %arg2: memref<8x32xf32, #tpu.memory_space<vmem>>, %arg3: memref<1x32xf32, #tpu.memory_space<vmem>>, %arg4: memref<1x32xf32, #tpu.memory_space<vmem>>, %arg5: memref<32x64xbf16, #tpu.memory_space<vmem>>, %arg6: memref<1x64xf32, #tpu.memory_space<vmem>>, %arg7: memref<8x64xf32, #tpu.memory_space<vmem>>, %arg8: memref<8x32xbf16, #tpu.memory_space<vmem>>) attributes {dimension_semantics = [#tpu.dimension_semantics<parallel>, #tpu.dimension_semantics<arbitrary>], iteration_bounds = array<i64: 2, 1>, scalar_prefetch = 0 : i64, scratch_operands = 1 : i64, tpu.core_type = #tpu.core_type<tc>, window_params = [{transform_indices = @transform_0, window_bounds = array<i64: 8, 32>}, {pipeline_mode = #tpu.pipeline_mode<synchronous>, transform_indices = @transform_1, window_bounds = array<i64: 1, 32>}, {pipeline_mode = #tpu.pipeline_mode<synchronous>, transform_indices = @transform_2, window_bounds = array<i64: 1, 32>}, {transform_indices = @transform_3, window_bounds = array<i64: 32, 64>}, {transform_indices = @transform_4, window_bounds = array<i64: 1, 64>}, {transform_indices = @transform_5, window_bounds = array<i64: 8, 64>}]} {
    %c0_i32 = arith.constant 0 : i32
    %0 = arith.cmpi eq, %arg1, %c0_i32 : i32
    %1 = arith.extui %0 : i1 to i32
    %c0_i32_0 = arith.constant 0 : i32
    %2 = arith.cmpi ne, %1, %c0_i32_0 : i32
    scf.if %2 {
      %c0_8 = arith.constant 0 : index
      %c0_9 = arith.constant 0 : index
      %10 = vector.load %arg2[%c0_8, %c0_9] : memref<8x32xf32, #tpu.memory_space<vmem>>, vector<8x32xf32>
      %c0_10 = arith.constant 0 : index
      %c0_11 = arith.constant 0 : index
      %11 = vector.load %arg3[%c0_10, %c0_11] : memref<1x32xf32, #tpu.memory_space<vmem>>, vector<1x32xf32>
      %c0_12 = arith.constant 0 : index
      %c0_13 = arith.constant 0 : index
      %12 = vector.load %arg4[%c0_12, %c0_13] : memref<1x32xf32, #tpu.memory_space<vmem>>, vector<1x32xf32>
      %cst_14 = arith.constant dense<0.000000e+00> : vector<8xf32>
      %13 = vector.multi_reduction <add>, %10, %cst_14 [1] : vector<8x32xf32> to vector<8xf32>
      %14 = vector.shape_cast %13 : vector<8xf32> to vector<8x1xf32>
      %15 = arith.mulf %10, %10 : vector<8x32xf32>
      %cst_15 = arith.constant dense<0.000000e+00> : vector<8xf32>
      %16 = vector.multi_reduction <add>, %15, %cst_15 [1] : vector<8x32xf32> to vector<8xf32>
      %17 = vector.shape_cast %16 : vector<8xf32> to vector<8x1xf32>
      %cst_16 = arith.constant 3.125000e-02 : f32
      %18 = vector.broadcast %cst_16 : f32 to vector<8x1xf32>
      %19 = arith.mulf %14, %18 : vector<8x1xf32>
      %20 = arith.mulf %14, %19 : vector<8x1xf32>
      %21 = arith.subf %17, %20 : vector<8x1xf32>
      %cst_17 = arith.constant 0.0322580636 : f32
      %22 = vector.broadcast %cst_17 : f32 to vector<8x1xf32>
      %23 = arith.mulf %21, %22 : vector<8x1xf32>
      %24 = vector.broadcast %19 : vector<8x1xf32> to vector<8x32xf32>
      %25 = arith.subf %10, %24 : vector<8x32xf32>
      %cst_18 = arith.constant 9.99999974E-6 : f32
      %26 = vector.broadcast %cst_18 : f32 to vector<8x1xf32>
      %27 = arith.addf %23, %26 : vector<8x1xf32>
      %28 = math.rsqrt %27 : vector<8x1xf32>
      %29 = vector.broadcast %28 : vector<8x1xf32> to vector<8x32xf32>
      %30 = arith.mulf %25, %29 : vector<8x32xf32>
      %31 = vector.broadcast %11 : vector<1x32xf32> to vector<8x32xf32>
      %32 = arith.mulf %30, %31 : vector<8x32xf32>
      %33 = vector.broadcast %12 : vector<1x32xf32> to vector<8x32xf32>
      %34 = arith.addf %32, %33 : vector<8x32xf32>
      %35 = arith.truncf %34 : vector<8x32xf32> to vector<8x32xbf16>
      %c0_19 = arith.constant 0 : index
      %c0_20 = arith.constant 0 : index
      %36 = vector.load %arg8[%c0_19, %c0_20] : memref<8x32xbf16, #tpu.memory_space<vmem>>, vector<8x32xbf16>
      tpu.vector_store %arg8[%c0_19, %c0_20], %35 {strides = array<i32>} : memref<8x32xbf16, #tpu.memory_space<vmem>>, vector<8x32xbf16>,
    } else {
    }
    %c0 = arith.constant 0 : index
    %c0_1 = arith.constant 0 : index
    %3 = vector.load %arg8[%c0, %c0_1] : memref<8x32xbf16, #tpu.memory_space<vmem>>, vector<8x32xbf16>
    %c0_2 = arith.constant 0 : index
    %c0_3 = arith.constant 0 : index
    %4 = vector.load %arg5[%c0_2, %c0_3] : memref<32x64xbf16, #tpu.memory_space<vmem>>, vector<32x64xbf16>
    %cst = arith.constant dense<0.000000e+00> : vector<8x64xf32>
    %5 = tpu.matmul %3, %4, %cst {dimension_numbers = #tpu.dot_dimension_numbers<[1], [0], [0], [1], [0, 0, 1, 1], [], []>} : vector<8x32xbf16>, vector<32x64xbf16>, vector<8x64xf32> -> vector<8x64xf32>
    %c0_4 = arith.constant 0 : index
    %c0_5 = arith.constant 0 : index
    %6 = vector.load %arg6[%c0_4, %c0_5] : memref<1x64xf32, #tpu.memory_space<vmem>>, vector<1x64xf32>
    %7 = vector.broadcast %6 : vector<1x64xf32> to vector<8x64xf32>
    %8 = arith.addf %5, %7 : vector<8x64xf32>
    %c0_6 = arith.constant 0 : index
    %c0_7 = arith.constant 0 : index
    %9 = vector.load %arg7[%c0_6, %c0_7] : memref<8x64xf32, #tpu.memory_space<vmem>>, vector<8x64xf32>
    tpu.vector_store %arg7[%c0_6, %c0_7], %8 {strides = array<i32>} : memref<8x64xf32, #tpu.memory_space<vmem>>, vector<8x64xf32>,
    return
  }
  func.func @transform_0(%arg0: i32, %arg1: i32) -> (i32, i32) {
    %c0_i32 = arith.constant 0 : i32
    %c0_i32_0 = arith.constant 0 : i32
    return %arg0, %c0_i32 : i32, i32
  }
  func.func @transform_1(%arg0: i32, %arg1: i32) -> (i32, i32) {
    %c0_i32 = arith.constant 0 : i32
    %c0_i32_0 = arith.constant 0 : i32
    %c0_i32_1 = arith.constant 0 : i32
    return %c0_i32, %c0_i32_0 : i32, i32
  }
  func.func @transform_2(%arg0: i32, %arg1: i32) -> (i32, i32) {
    %c0_i32 = arith.constant 0 : i32
    %c0_i32_0 = arith.constant 0 : i32
    %c0_i32_1 = arith.constant 0 : i32
    return %c0_i32, %c0_i32_0 : i32, i32
  }
  func.func @transform_3(%arg0: i32, %arg1: i32) -> (i32, i32) {
    %c0_i32 = arith.constant 0 : i32
    %c0_i32_0 = arith.constant 0 : i32
    return %c0_i32, %arg1 : i32, i32
  }
  func.func @transform_4(%arg0: i32, %arg1: i32) -> (i32, i32) {
    %c0_i32 = arith.constant 0 : i32
    %c0_i32_0 = arith.constant 0 : i32
    return %c0_i32, %arg1 : i32, i32
  }
  func.func @transform_5(%arg0: i32, %arg1: i32) -> (i32, i32) {
    %c0_i32 = arith.constant 0 : i32
    return %arg0, %arg1 : i32, i32
  }
}

</mosaic_0001>

<llo_original>
// kernel: sharded_transformer_forward.11
$region0: #{sharded_transformer_forward.11}
  #allocation0 [shape = 'u32[]', space=smem, size = 0x4, offset = 0x4, fixed_abs, tag = 'smem constant byte address 0x4 - core index']
  #allocation1 [shape = 'u32[144,128]{1,0:T(1,128)}', space=vmem, size = 0x12000, scoped, tag = 'internal scratch']
  #allocation2 [shape = 'f32[8,32]{1,0:T(8,128)}', space=vmem, size = 0x1000, scoped, tag = 'scratch operand']
  %s0 = inlined_call_operand.vmem [shape: bf16[16,32], index: 0, kind: input, shape index: {}]
  %s1 = inlined_call_operand.vmem [shape: bf16[32,32], index: 1, kind: input, shape index: {}]
  %s2 = inlined_call_operand.vmem [shape: f32[1,32], index: 2, kind: input, shape index: {}]
  %s3 = inlined_call_operand.vmem [shape: f32[16,32], index: 3, kind: input, shape index: {}]
  %s4 = inlined_call_operand.vmem [shape: f32[1,32], index: 4, kind: input, shape index: {}]
  %s5 = inlined_call_operand.vmem [shape: f32[1,32], index: 5, kind: input, shape index: {}]
  %s6 = inlined_call_operand.vmem [shape: f32[16,32], index: 6, kind: output, shape index: {}]
  %s7 = sld [smem:[#allocation0]]
  $region65: #{sharded_transformer_forward.11} parent=0
    _
  %s9 = ssub.s32 1, %s7
  %s10 = scalar_select 0, %s9, %s7
  loop: start=0, step=1, limit=4
  $region2: #{sharded_transformer_forward.11} parent=0 // loop_pre_header
    _
  $region3: #{sharded_transformer_forward.11} parent=0 // loop_header
    %s12 = sphi 0, %s16
    %p13 = scmp.ge.s32.totalorder %s12, 4
    %s19 = sphi 0, %s31
    %s20 = sphi 0, %s27
    %s21 = sphi 0, %s19
    %s22 = sphi 0, %s20
    %s23 = sphi 0, %s21
    %s24 = sphi 0, %s22
    %s36 = sphi 0, %s38
    %s39 = sphi 0, %s36
    %s40 = sphi 0, %s39
    %s56 = sphi 0, %s40
    %s62 = sphi 0, %s64
    %s65 = sphi 0, %s62
    %s66 = sphi 0, %s65
    %s82 = sphi 0, %s66
    %s86 = sphi 0, %s86
    %s88 = sphi 0, %s86
    %s89 = sphi 0, %s88
    %s103 = sphi 0, %s89
    %s109 = sphi 0, %s111
    %s112 = sphi 0, %s109
    %s113 = sphi 0, %s112
    %s129 = sphi 0, %s113
    %s133 = sphi 0, %s133
    %s135 = sphi 0, %s133
    %s136 = sphi 0, %s135
    %s150 = sphi 0, %s136
    %s154 = sphi 0, %s154
    %s156 = sphi 0, %s154
    %s157 = sphi 0, %s156
    %s171 = sphi 0, %s157
    %s177 = sphi 0, %s179
    %s180 = sphi 0, %s177
    %s181 = sphi 0, %s180
    %s197 = sphi 0, %s181
  $region4: #{sharded_transformer_forward.11} parent=0 // loop_header_branch
    %15 = sbr.rel (%p13) target = $region8
  $region5: #{sharded_transformer_forward.11} parent=0 // loop_body
    %s17 = ssub.s32 %s12, 1
    %s18 = ssub.s32 %s12, 2
    %s25 = sadd.s32 1, %s20
    %p26 = scmp.ge.s32.totalorder %s25, 1
    %s27 = scalar_select %p26, 0, %s25
    %s28 = sadd.s32 1, %s19
    %s29 = scalar_select %p26, %s28, %s19
    %p30 = scmp.ge.s32.totalorder %s29, 2
    %s31 = scalar_select %p30, 0, %s29
    %s32 = ssub.s32 %s19, %s31
    %s33 = ssub.s32 %s20, %s27
    %s34 = sor.u32 %s32, %s33
    %p35 = scmp.eq.s32.totalorder %s34, 0
    %s37 = sadd.s32 %s36, 1
    %s38 = scalar_select %p35, %s36, %s37
    %p41 = pneg %p35
    %p42 = scmp.eq.s32.totalorder %s12, 1
    %p43 = por %p41, %p42
    %p44 = scmp.ne.s32.totalorder %s36, %s39
    %p45 = scmp.eq.s32.totalorder %s12, 0
    %p46 = por %p44, %p45
    %p47 = scmp.ne.s32.totalorder %s36, %s39
    %p48 = scmp.eq.s32.totalorder %s17, 1
    %p49 = por %p47, %p48
    %p50 = scmp.ne.s32.totalorder %s39, %s40
    %p51 = scmp.eq.s32.totalorder %s17, 0
    %p52 = por %p50, %p51
    %p53 = scmp.ne.s32.totalorder %s39, %s40
    %p54 = scmp.eq.s32.totalorder %s18, 1
    %p55 = por %p53, %p54
    %p57 = scmp.ne.s32.totalorder %s40, %s56
    %p58 = scmp.eq.s32.totalorder %s18, 0
    %p59 = por %p57, %p58
    %s60 = ssub.s32 %s20, %s27
    %p61 = scmp.eq.s32.totalorder %s60, 0
    %s63 = sadd.s32 %s62, 1
    %s64 = scalar_select %p61, %s62, %s63
    %p67 = pneg %p61
    %p68 = scmp.eq.s32.totalorder %s12, 1
    %p69 = por %p67, %p68
    %p70 = scmp.ne.s32.totalorder %s62, %s65
    %p71 = scmp.eq.s32.totalorder %s12, 0
    %p72 = por %p70, %p71
    %p73 = scmp.ne.s32.totalorder %s62, %s65
    %p74 = scmp.eq.s32.totalorder %s17, 1
    %p75 = por %p73, %p74
    %p76 = scmp.ne.s32.totalorder %s65, %s66
    %p77 = scmp.eq.s32.totalorder %s17, 0
    %p78 = por %p76, %p77
    %p79 = scmp.ne.s32.totalorder %s65, %s66
    %p80 = scmp.eq.s32.totalorder %s18, 1
    %p81 = por %p79, %p80
    %p83 = scmp.ne.s32.totalorder %s66, %s82
    %p84 = scmp.eq.s32.totalorder %s18, 0
    %p85 = por %p83, %p84
    %s87 = sadd.s32 %s86, 1
    %p90 = scmp.eq.s32.totalorder %s12, 1
    %p91 = scmp.ne.s32.totalorder %s86, %s88
    %p92 = scmp.eq.s32.totalorder %s12, 0
    %p93 = por %p91, %p92
    %p94 = scmp.ne.s32.totalorder %s86, %s88
    %p95 = scmp.eq.s32.totalorder %s17, 1
    %p96 = por %p94, %p95
    %p97 = scmp.ne.s32.totalorder %s88, %s89
    %p98 = scmp.eq.s32.totalorder %s17, 0
    %p99 = por %p97, %p98
    %p100 = scmp.ne.s32.totalorder %s88, %s89
    %p101 = scmp.eq.s32.totalorder %s18, 1
    %p102 = por %p100, %p101
    %p104 = scmp.ne.s32.totalorder %s89, %s103
    %p105 = scmp.eq.s32.totalorder %s18, 0
    %p106 = por %p104, %p105
    %s107 = ssub.s32 %s19, %s31
    %p108 = scmp.eq.s32.totalorder %s107, 0
    %s110 = sadd.s32 %s109, 1
    %s111 = scalar_select %p108, %s109, %s110
    %p114 = pneg %p108
    %p115 = scmp.eq.s32.totalorder %s12, 1
    %p116 = por %p114, %p115
    %p117 = scmp.ne.s32.totalorder %s109, %s112
    %p118 = scmp.eq.s32.totalorder %s12, 0
    %p119 = por %p117, %p118
    %p120 = scmp.ne.s32.totalorder %s109, %s112
    %p121 = scmp.eq.s32.totalorder %s17, 1
    %p122 = por %p120, %p121
    %p123 = scmp.ne.s32.totalorder %s112, %s113
    %p124 = scmp.eq.s32.totalorder %s17, 0
    %p125 = por %p123, %p124
    %p126 = scmp.ne.s32.totalorder %s112, %s113
    %p127 = scmp.eq.s32.totalorder %s18, 1
    %p128 = por %p126, %p127
    %p130 = scmp.ne.s32.totalorder %s113, %s129
    %p131 = scmp.eq.s32.totalorder %s18, 0
    %p132 = por %p130, %p131
    %s134 = sadd.s32 %s133, 1
    %p137 = scmp.eq.s32.totalorder %s12, 1
    %p138 = scmp.ne.s32.totalorder %s133, %s135
    %p139 = scmp.eq.s32.totalorder %s12, 0
    %p140 = por %p138, %p139
    %p141 = scmp.ne.s32.totalorder %s133, %s135
    %p142 = scmp.eq.s32.totalorder %s17, 1
    %p143 = por %p141, %p142
    %p144 = scmp.ne.s32.totalorder %s135, %s136
    %p145 = scmp.eq.s32.totalorder %s17, 0
    %p146 = por %p144, %p145
    %p147 = scmp.ne.s32.totalorder %s135, %s136
    %p148 = scmp.eq.s32.totalorder %s18, 1
    %p149 = por %p147, %p148
    %p151 = scmp.ne.s32.totalorder %s136, %s150
    %p152 = scmp.eq.s32.totalorder %s18, 0
    %p153 = por %p151, %p152
    %s155 = sadd.s32 %s154, 1
    %p158 = scmp.eq.s32.totalorder %s12, 1
    %p159 = scmp.ne.s32.totalorder %s154, %s156
    %p160 = scmp.eq.s32.totalorder %s12, 0
    %p161 = por %p159, %p160
    %p162 = scmp.ne.s32.totalorder %s154, %s156
    %p163 = scmp.eq.s32.totalorder %s17, 1
    %p164 = por %p162, %p163
    %p165 = scmp.ne.s32.totalorder %s156, %s157
    %p166 = scmp.eq.s32.totalorder %s17, 0
    %p167 = por %p165, %p166
    %p168 = scmp.ne.s32.totalorder %s156, %s157
    %p169 = scmp.eq.s32.totalorder %s18, 1
    %p170 = por %p168, %p169
    %p172 = scmp.ne.s32.totalorder %s157, %s171
    %p173 = scmp.eq.s32.totalorder %s18, 0
    %p174 = por %p172, %p173
    %s175 = ssub.s32 %s19, %s31
    %p176 = scmp.eq.s32.totalorder %s175, 0
    %s178 = sadd.s32 %s177, 1
    %s179 = scalar_select %p176, %s177, %s178
    %p182 = pneg %p176
    %p183 = scmp.eq.s32.totalorder %s12, 1
    %p184 = por %p182, %p183
    %p185 = scmp.ne.s32.totalorder %s177, %s180
    %p186 = scmp.eq.s32.totalorder %s12, 0
    %p187 = por %p185, %p186
    %p188 = scmp.ne.s32.totalorder %s177, %s180
    %p189 = scmp.eq.s32.totalorder %s17, 1
    %p190 = por %p188, %p189
    %p191 = scmp.ne.s32.totalorder %s180, %s181
    %p192 = scmp.eq.s32.totalorder %s17, 0
    %p193 = por %p191, %p192
    %p194 = scmp.ne.s32.totalorder %s180, %s181
    %p195 = scmp.eq.s32.totalorder %s18, 1
    %p196 = por %p194, %p195
    %p198 = scmp.ne.s32.totalorder %s181, %s197
    %p199 = scmp.eq.s32.totalorder %s18, 0
    %p200 = por %p198, %p199
    %p201 = scmp.le.s32.totalorder 1, %s12
    %p202 = scmp.lt.s32.totalorder %s12, 3
    %p203 = pnand %p201, %p202
    %p204 = pneg %p203
    // Predicated region
    $region9: #{sharded_transformer_forward.11} parent=5 // pred_check
      _
    $region10: #{sharded_transformer_forward.11} parent=5 // pred_check_branch
      %206 = sbr.rel (%p203) target = $region12
    $region11: #{sharded_transformer_forward.11} parent=5 // pred_region
      %s207 = ssub.s32 %s12, 1
      // Predicated region
      $region13: #{sharded_transformer_forward.11} parent=11 // pred_check
        %p208 = pneg %p78
      $region14: #{sharded_transformer_forward.11} parent=11 // pred_check_branch
        %210 = sbr.rel (%p208) target = $region16
      $region15: #{sharded_transformer_forward.11} parent=11 // pred_region
        %s211 = smul.u32 4, %s22
        %p212 = scmp.lt.s32.totalorder %s211, 3
        %s213 = scalar_select %p212, %s211, 3
        %s214 = smul.addr %s213, 4
        %s215 = scalar_lea.vmem %s1, %s214
        %s216 = smul.u32 4, %s22
      $region16: #{sharded_transformer_forward.11} parent=11 // pred_fallthru
        _
      // Predicated region
      $region17: #{sharded_transformer_forward.11} parent=11 // pred_check
        %p217 = pneg %p99
      $region18: #{sharded_transformer_forward.11} parent=11 // pred_check_branch
        %219 = sbr.rel (%p217) target = $region20
      $region19: #{sharded_transformer_forward.11} parent=11 // pred_region
        _
      $region20: #{sharded_transformer_forward.11} parent=11 // pred_fallthru
        _
      // Predicated region
      $region21: #{sharded_transformer_forward.11} parent=11 // pred_check
        %p220 = pneg %p146
      $region22: #{sharded_transformer_forward.11} parent=11 // pred_check_branch
        %222 = sbr.rel (%p220) target = $region24
      $region23: #{sharded_transformer_forward.11} parent=11 // pred_region
        _
      $region24: #{sharded_transformer_forward.11} parent=11 // pred_fallthru
        _
      // Predicated region
      $region25: #{sharded_transformer_forward.11} parent=11 // pred_check
        %p223 = pneg %p167
      $region26: #{sharded_transformer_forward.11} parent=11 // pred_check_branch
        %225 = sbr.rel (%p223) target = $region28
      $region27: #{sharded_transformer_forward.11} parent=11 // pred_region
        _
      $region28: #{sharded_transformer_forward.11} parent=11 // pred_fallthru
        _
    $region12: #{sharded_transformer_forward.11} parent=5 // pred_fallthru
      _
    %p226 = scmp.lt.s32.totalorder %s12, 2
    // Predicated region
    $region29: #{sharded_transformer_forward.11} parent=5 // pred_check
      %p227 = pneg %p226
    $region30: #{sharded_transformer_forward.11} parent=5 // pred_check_branch
      %229 = sbr.rel (%p227) target = $region32
    $region31: #{sharded_transformer_forward.11} parent=5 // pred_region
      // Predicated region
      $region33: #{sharded_transformer_forward.11} parent=31 // pred_check
        %p230 = pneg %p46
      $region34: #{sharded_transformer_forward.11} parent=31 // pred_check_branch
        %232 = sbr.rel (%p230) target = $region36
      $region35: #{sharded_transformer_forward.11} parent=31 // pred_region
        %p233 = scmp.lt.s32.totalorder %s19, 1
        %s234 = scalar_select %p233, %s19, 1
        %p235 = scmp.lt.s32.totalorder %s20, 0
        %s236 = scalar_select %p235, %s20, 0
        %s237 = sadd.s32 %s236, %s234
        %s238 = smul.addr %s237, 4
        %s239 = scalar_lea.vmem %s0, %s238
      $region36: #{sharded_transformer_forward.11} parent=31 // pred_fallthru
        _
      // Predicated region
      $region37: #{sharded_transformer_forward.11} parent=31 // pred_check
        %p240 = pneg %p119
      $region38: #{sharded_transformer_forward.11} parent=31 // pred_check_branch
        %242 = sbr.rel (%p240) target = $region40
      $region39: #{sharded_transformer_forward.11} parent=31 // pred_region
        %p243 = scmp.lt.s32.totalorder %s19, 1
        %s244 = scalar_select %p243, %s19, 1
        %s245 = smul.addr %s244, 8
        %s246 = scalar_lea.vmem %s3, %s245
      $region40: #{sharded_transformer_forward.11} parent=31 // pred_fallthru
        _
    $region32: #{sharded_transformer_forward.11} parent=5 // pred_fallthru
      _
    %p247 = scmp.le.s32.totalorder 1, %s12
    %p248 = scmp.lt.s32.totalorder %s12, 3
    %p249 = pnand %p247, %p248
    %p250 = pneg %p249
    // Predicated region
    $region41: #{sharded_transformer_forward.11} parent=5 // pred_check
      _
    $region42: #{sharded_transformer_forward.11} parent=5 // pred_check_branch
      %252 = sbr.rel (%p249) target = $region44
    $region43: #{sharded_transformer_forward.11} parent=5 // pred_region
      %s253 = ssub.s32 %s12, 1
      %p254 = scmp.lt.s32.totalorder %s21, 1
      %s255 = scalar_select %p254, %s21, 1
      %p256 = scmp.lt.s32.totalorder %s22, 0
      %s257 = scalar_select %p256, %s22, 0
      %s258 = sadd.s32 %s257, %s255
      %s259 = smul.addr %s258, 4
      %s260 = scalar_lea.vmem %s0, %s259
      %p261 = pneg %p52
      %p262 = pneg %p49
      %s263 = smul.u32 4, %s22
      %p264 = scmp.lt.s32.totalorder %s263, 3
      %s265 = scalar_select %p264, %s263, 3
      %s266 = smul.addr %s265, 4
      %s267 = scalar_lea.vmem %s1, %s266
      %p268 = pneg %p78
      %p269 = pneg %p75
      %p270 = pneg %p99
      %p271 = pneg %p96
      %p272 = scmp.lt.s32.totalorder %s21, 1
      %s273 = scalar_select %p272, %s21, 1
      %s274 = smul.addr %s273, 8
      %s275 = scalar_lea.vmem %s3, %s274
      %p276 = pneg %p125
      %p277 = pneg %p122
      %p278 = pneg %p146
      %p279 = pneg %p143
      %p280 = pneg %p167
      %p281 = pneg %p164
      %p282 = pneg %p193
      %p283 = pneg %p190
      %p284 = scmp.lt.s32.totalorder %s21, 1
      %s285 = scalar_select %p284, %s21, 1
      %s286 = smul.addr %s285, 8
      %s287 = scalar_lea.vmem %s6, %s286
      %p288 = scmp.lt.s32.totalorder %s21, 1
      %s289 = scalar_select %p288, %s21, 1
      %p290 = scmp.lt.s32.totalorder %s22, 0
      %s291 = scalar_select %p290, %s22, 0
      %s292 = sadd.s32 %s291, %s289
      %s293 = smul.addr %s292, 4
      %s294 = scalar_lea.vmem %s0, %s293
      %s295 = smul.u32 4, %s22
      %p296 = scmp.lt.s32.totalorder %s295, 3
      %s297 = scalar_select %p296, %s295, 3
      %s298 = smul.addr %s297, 4
      %s299 = scalar_lea.vmem %s1, %s298
      %s300 = smul.u32 4, %s22
      %p301 = scmp.lt.s32.totalorder %s21, 1
      %s302 = scalar_select %p301, %s21, 1
      %s303 = smul.addr %s302, 8
      %s304 = scalar_lea.vmem %s3, %s303
      %p305 = scmp.lt.s32.totalorder %s21, 1
      %s306 = scalar_select %p305, %s21, 1
      %s307 = smul.addr %s306, 8
      %s308 = scalar_lea.vmem %s6, %s307
      %p310 = scmp.eq.s32.totalorder %s22, 0
      // Predicated region
      $region45: #{sharded_transformer_forward.11} parent=43 // pred_check
        %p311 = pneg %p310
      $region46: #{sharded_transformer_forward.11} parent=43 // pred_check_branch
        %313 = sbr.rel (%p311) target = $region48
      $region47: #{sharded_transformer_forward.11} parent=43 // pred_region
        %vm314 = vcmask 261120
        %315 = vst.msk [vmem:[#allocation2] sm:$0xff] %vm314, 0.0
      $region48: #{sharded_transformer_forward.11} parent=43 // pred_fallthru
        _
      %v316 = vld [vmem:[#allocation2] sm:$0xff]
      %v317 = vld [vmem:[%s294] sm:$0xf]
      %v318 = vld [vmem:[%s299] sm:$0xf]
      %v319 = vld [vmem:[%s299 + $0x4] sm:$0xf]
      %v320 = vld [vmem:[%s299 + $0x8] sm:$0xf]
      %v321 = vld [vmem:[%s299 + $0xc] sm:$0xf]
      %v326 = vunpack.c.l.b16 %v318
      %v327 = vunpack.c.l.b16 %v319
      %v328 = vunpack.c.l.b16 %v320
      %v329 = vunpack.c.l.b16 %v321
      %v330 = vpack.c.b16 %v327, %v326
      %v331 = vpack.c.b16 %v329, %v328
      %vm334 = vcmask 261120
      %v336 = vsel %vm334, %v317, 0
      %338 = vmatprep.subr.bf16.mxu0 0
      %339 = vmatpush1.bf16.msra.mxu0 %v330
      %340 = vmatprep.subr.bf16.mxu0 0
      %341 = vmatpush1.bf16.msra.mxu0 %v331
      %342 = vmatprep.subr.bf16.mxu0 0
      %343 = vmatpush1.bf16.msra.mxu0 0
      %344 = vmatprep.subr.bf16.mxu0 0
      %345 = vmatpush1.bf16.msra.mxu0 0
      %346 = vmatprep.subr.bf16.mxu0 0
      %347 = vmatpush1.bf16.msra.mxu0 0
      %348 = vmatprep.subr.bf16.mxu0 0
      %349 = vmatpush1.bf16.msra.mxu0 0
      %350 = vmatprep.subr.bf16.mxu0 0
      %351 = vmatpush1.bf16.msra.mxu0 0
      %352 = vmatprep.subr.bf16.mxu0 0
      %353 = vmatpush1.bf16.msra.mxu0 0
      %354 = vmatprep.subr.bf16.mxu0 0
      %355 = vmatpush1.bf16.msra.mxu0 0
      %356 = vmatprep.subr.bf16.mxu0 0
      %357 = vmatpush1.bf16.msra.mxu0 0
      %358 = vmatprep.subr.bf16.mxu0 0
      %359 = vmatpush1.bf16.msra.mxu0 0
      %360 = vmatprep.subr.bf16.mxu0 0
      %361 = vmatpush1.bf16.msra.mxu0 0
      %362 = vmatprep.subr.bf16.mxu0 0
      %363 = vmatpush1.bf16.msra.mxu0 0
      %364 = vmatprep.subr.bf16.mxu0 0
      %365 = vmatpush1.bf16.msra.mxu0 0
      %366 = vmatprep.subr.bf16.mxu0 0
      %367 = vmatpush1.bf16.msra.mxu0 0
      %368 = vmatprep.subr.bf16.mxu0 0
      %369 = vmatpush1.bf16.msra.mxu0 0
      %370 = vmatprep.mubr.bf16.mxu0 0
      %371 = vmatmul.mubr.bf16.gmra.mrb[0].mxu0 %v336
      %v372 = vpop.f32.mrb[0].mxu0
      %v373 = vadd.f32 0.0, %v372
      %v374 = vpop.f32.mrb[0].mxu0
      %v375 = vpop.f32.mrb[0].mxu0
      %v376 = vpop.f32.mrb[0].mxu0
      %377 = vdwg.mxu0
      %v378 = vadd.f32 %v316, %v373
      %379 = vst.msk [vmem:[#allocation2] sm:$0xff] %vm334, %v378
      // Predicated region
      $region49: #{sharded_transformer_forward.11} parent=43 // pred_check
        %p380 = pneg %p310
      $region50: #{sharded_transformer_forward.11} parent=43 // pred_check_branch
        %382 = sbr.rel (%p380) target = $region52
      $region51: #{sharded_transformer_forward.11} parent=43 // pred_region
        %v383 = vld [vmem:[#allocation2] sm:$0xff]
        %v384 = vld [vmem:[%s2] sm:$0x1]
        %v386 = vlaneseq
        %v387 = vshrl.u32 %v386, 7
        %v388 = vsub.s32 0, %v387
        %v389 = vrot.slane %v384, %v388
        %v391 = vadd.f32 %v383, %v389
        %v392 = vld [vmem:[%s304] sm:$0xff]
        %v393 = vadd.f32 %v391, %v392
        %v394 = vld [vmem:[%s4] sm:$0x1]
        %v395 = vld [vmem:[%s5] sm:$0x1]
        %v396 = vsel %vm334, %v393, 0.0
        %397 = vadd.xlane.f32.xlu0 %v396
        %v398 = vpop.xlane.xlu0 %397
        %v399 = vmul.f32 %v393, %v393
        %v400 = vsel %vm334, %v399, 0.0
        %401 = vadd.xlane.f32.xlu0 %v400
        %v402 = vpop.xlane.xlu0 %401
        %v403 = vmul.f32 %v398, 0.03125
        %v404 = vmul.f32 %v398, %v403
        %v405 = vsub.f32 %v402, %v404
        %v406 = vmul.f32 %v405, 0.032258064
        %v407 = vsub.f32 %v393, %v403
        %v408 = vadd.f32 %v406, 1e-05
        %v409 = vrsqrt.pop %v408
        %v410 = vmul.f32 %v407, %v409
        %v412 = vlaneseq
        %v413 = vshrl.u32 %v412, 7
        %v414 = vsub.s32 0, %v413
        %v415 = vrot.slane %v394, %v414
        %v417 = vmul.f32 %v410, %v415
        %v419 = vlaneseq
        %v420 = vshrl.u32 %v419, 7
        %v421 = vsub.s32 0, %v420
        %v422 = vrot.slane %v395, %v421
        %v424 = vadd.f32 %v417, %v422
        %425 = vst.msk [vmem:[%s308] sm:$0xff] %vm334, %v424
      $region52: #{sharded_transformer_forward.11} parent=43 // pred_fallthru
        _
      %p426 = scmp.lt.s32.totalorder %s21, 1
      %s427 = scalar_select %p426, %s21, 1
      %s428 = smul.addr %s427, 8
      %s429 = scalar_lea.vmem %s6, %s428
      // Predicated region
      $region53: #{sharded_transformer_forward.11} parent=43 // pred_check
        %p430 = pneg %p190
      $region54: #{sharded_transformer_forward.11} parent=43 // pred_check_branch
        %432 = sbr.rel (%p430) target = $region56
      $region55: #{sharded_transformer_forward.11} parent=43 // pred_region
        _
      $region56: #{sharded_transformer_forward.11} parent=43 // pred_fallthru
        _
    $region44: #{sharded_transformer_forward.11} parent=5 // pred_fallthru
      _
    %p433 = scmp.le.s32.totalorder 2, %s12
    // Predicated region
    $region57: #{sharded_transformer_forward.11} parent=5 // pred_check
      %p434 = pneg %p433
    $region58: #{sharded_transformer_forward.11} parent=5 // pred_check_branch
      %436 = sbr.rel (%p434) target = $region60
    $region59: #{sharded_transformer_forward.11} parent=5 // pred_region
      %s437 = ssub.s32 %s12, 2
      // Predicated region
      $region61: #{sharded_transformer_forward.11} parent=59 // pred_check
        %p438 = pneg %p196
      $region62: #{sharded_transformer_forward.11} parent=59 // pred_check_branch
        %440 = sbr.rel (%p438) target = $region64
      $region63: #{sharded_transformer_forward.11} parent=59 // pred_region
        %p441 = scmp.lt.s32.totalorder %s23, 1
        %s442 = scalar_select %p441, %s23, 1
        %s443 = smul.addr %s442, 8
        %s444 = scalar_lea.vmem %s6, %s443
      $region64: #{sharded_transformer_forward.11} parent=59 // pred_fallthru
        _
    $region60: #{sharded_transformer_forward.11} parent=5 // pred_fallthru
      _
  $region6: #{sharded_transformer_forward.11} parent=0 // loop_footer
    %s16 = sadd.s32 1, %s12
  $region7: #{sharded_transformer_forward.11} parent=0 // loop_footer_branch
    %11 = sbr.rel target = $region3
  $region8: #{sharded_transformer_forward.11} parent=0 // loop_exit
    _

// kernel: sharded_transformer_forward.9
$region0: #{sharded_transformer_forward.9}
  #allocation0 [shape = 'u32[]', space=smem, size = 0x4, offset = 0x4, fixed_abs, tag = 'smem constant byte address 0x4 - core index']
  #allocation1 [shape = 'u32[144,128]{1,0:T(1,128)}', space=vmem, size = 0x12000, scoped, tag = 'internal scratch']
  #allocation2 [shape = 'f32[8,96]{1,0:T(8,128)}', space=vmem, size = 0x1000, scoped, tag = 'scratch operand']
  %s0 = inlined_call_operand.vmem [shape: f32[16,32], index: 0, kind: input, shape index: {}]
  %s1 = inlined_call_operand.vmem [shape: bf16[32,96], index: 1, kind: input, shape index: {}]
  %s2 = inlined_call_operand.vmem [shape: f32[1,96], index: 2, kind: input, shape index: {}]
  %s3 = inlined_call_operand.vmem [shape: bf16[16,96], index: 3, kind: output, shape index: {}]
  %s4 = sld [smem:[#allocation0]]
  $region53: #{sharded_transformer_forward.9} parent=0
    _
  %s6 = ssub.s32 1, %s4
  %s7 = scalar_select 0, %s6, %s4
  loop: start=0, step=1, limit=4
  $region2: #{sharded_transformer_forward.9} parent=0 // loop_pre_header
    _
  $region3: #{sharded_transformer_forward.9} parent=0 // loop_header
    %s9 = sphi 0, %s13
    %p10 = scmp.ge.s32.totalorder %s9, 4
    %s16 = sphi 0, %s35
    %s17 = sphi 0, %s31
    %s18 = sphi 0, %s27
    %s19 = sphi 0, %s16
    %s20 = sphi 0, %s17
    %s21 = sphi 0, %s18
    %s22 = sphi 0, %s19
    %s23 = sphi 0, %s20
    %s24 = sphi 0, %s21
    %s40 = sphi 0, %s42
    %s43 = sphi 0, %s40
    %s44 = sphi 0, %s43
    %s60 = sphi 0, %s44
    %s68 = sphi 0, %s70
    %s71 = sphi 0, %s68
    %s72 = sphi 0, %s71
    %s88 = sphi 0, %s72
    %s94 = sphi 0, %s96
    %s97 = sphi 0, %s94
    %s98 = sphi 0, %s97
    %s114 = sphi 0, %s98
    %s122 = sphi 0, %s124
    %s125 = sphi 0, %s122
    %s126 = sphi 0, %s125
    %s142 = sphi 0, %s126
  $region4: #{sharded_transformer_forward.9} parent=0 // loop_header_branch
    %12 = sbr.rel (%p10) target = $region8
  $region5: #{sharded_transformer_forward.9} parent=0 // loop_body
    %s14 = ssub.s32 %s9, 1
    %s15 = ssub.s32 %s9, 2
    %s25 = sadd.s32 1, %s18
    %p26 = scmp.ge.s32.totalorder %s25, 1
    %s27 = scalar_select %p26, 0, %s25
    %s28 = sadd.s32 1, %s17
    %s29 = scalar_select %p26, %s28, %s17
    %p30 = scmp.ge.s32.totalorder %s29, 1
    %s31 = scalar_select %p30, 0, %s29
    %s32 = sadd.s32 1, %s16
    %s33 = scalar_select %p30, %s32, %s16
    %p34 = scmp.ge.s32.totalorder %s33, 2
    %s35 = scalar_select %p34, 0, %s33
    %s36 = ssub.s32 %s16, %s35
    %s37 = ssub.s32 %s18, %s27
    %s38 = sor.u32 %s36, %s37
    %p39 = scmp.eq.s32.totalorder %s38, 0
    %s41 = sadd.s32 %s40, 1
    %s42 = scalar_select %p39, %s40, %s41
    %p45 = pneg %p39
    %p46 = scmp.eq.s32.totalorder %s9, 1
    %p47 = por %p45, %p46
    %p48 = scmp.ne.s32.totalorder %s40, %s43
    %p49 = scmp.eq.s32.totalorder %s9, 0
    %p50 = por %p48, %p49
    %p51 = scmp.ne.s32.totalorder %s40, %s43
    %p52 = scmp.eq.s32.totalorder %s14, 1
    %p53 = por %p51, %p52
    %p54 = scmp.ne.s32.totalorder %s43, %s44
    %p55 = scmp.eq.s32.totalorder %s14, 0
    %p56 = por %p54, %p55
    %p57 = scmp.ne.s32.totalorder %s43, %s44
    %p58 = scmp.eq.s32.totalorder %s15, 1
    %p59 = por %p57, %p58
    %p61 = scmp.ne.s32.totalorder %s44, %s60
    %p62 = scmp.eq.s32.totalorder %s15, 0
    %p63 = por %p61, %p62
    %s64 = ssub.s32 %s18, %s27
    %s65 = ssub.s32 %s17, %s31
    %s66 = sor.u32 %s64, %s65
    %p67 = scmp.eq.s32.totalorder %s66, 0
    %s69 = sadd.s32 %s68, 1
    %s70 = scalar_select %p67, %s68, %s69
    %p73 = pneg %p67
    %p74 = scmp.eq.s32.totalorder %s9, 1
    %p75 = por %p73, %p74
    %p76 = scmp.ne.s32.totalorder %s68, %s71
    %p77 = scmp.eq.s32.totalorder %s9, 0
    %p78 = por %p76, %p77
    %p79 = scmp.ne.s32.totalorder %s68, %s71
    %p80 = scmp.eq.s32.totalorder %s14, 1
    %p81 = por %p79, %p80
    %p82 = scmp.ne.s32.totalorder %s71, %s72
    %p83 = scmp.eq.s32.totalorder %s14, 0
    %p84 = por %p82, %p83
    %p85 = scmp.ne.s32.totalorder %s71, %s72
    %p86 = scmp.eq.s32.totalorder %s15, 1
    %p87 = por %p85, %p86
    %p89 = scmp.ne.s32.totalorder %s72, %s88
    %p90 = scmp.eq.s32.totalorder %s15, 0
    %p91 = por %p89, %p90
    %s92 = ssub.s32 %s17, %s31
    %p93 = scmp.eq.s32.totalorder %s92, 0
    %s95 = sadd.s32 %s94, 1
    %s96 = scalar_select %p93, %s94, %s95
    %p99 = pneg %p93
    %p100 = scmp.eq.s32.totalorder %s9, 1
    %p101 = por %p99, %p100
    %p102 = scmp.ne.s32.totalorder %s94, %s97
    %p103 = scmp.eq.s32.totalorder %s9, 0
    %p104 = por %p102, %p103
    %p105 = scmp.ne.s32.totalorder %s94, %s97
    %p106 = scmp.eq.s32.totalorder %s14, 1
    %p107 = por %p105, %p106
    %p108 = scmp.ne.s32.totalorder %s97, %s98
    %p109 = scmp.eq.s32.totalorder %s14, 0
    %p110 = por %p108, %p109
    %p111 = scmp.ne.s32.totalorder %s97, %s98
    %p112 = scmp.eq.s32.totalorder %s15, 1
    %p113 = por %p111, %p112
    %p115 = scmp.ne.s32.totalorder %s98, %s114
    %p116 = scmp.eq.s32.totalorder %s15, 0
    %p117 = por %p115, %p116
    %s118 = ssub.s32 %s16, %s35
    %s119 = ssub.s32 %s17, %s31
    %s120 = sor.u32 %s118, %s119
    %p121 = scmp.eq.s32.totalorder %s120, 0
    %s123 = sadd.s32 %s122, 1
    %s124 = scalar_select %p121, %s122, %s123
    %p127 = pneg %p121
    %p128 = scmp.eq.s32.totalorder %s9, 1
    %p129 = por %p127, %p128
    %p130 = scmp.ne.s32.totalorder %s122, %s125
    %p131 = scmp.eq.s32.totalorder %s9, 0
    %p132 = por %p130, %p131
    %p133 = scmp.ne.s32.totalorder %s122, %s125
    %p134 = scmp.eq.s32.totalorder %s14, 1
    %p135 = por %p133, %p134
    %p136 = scmp.ne.s32.totalorder %s125, %s126
    %p137 = scmp.eq.s32.totalorder %s14, 0
    %p138 = por %p136, %p137
    %p139 = scmp.ne.s32.totalorder %s125, %s126
    %p140 = scmp.eq.s32.totalorder %s15, 1
    %p141 = por %p139, %p140
    %p143 = scmp.ne.s32.totalorder %s126, %s142
    %p144 = scmp.eq.s32.totalorder %s15, 0
    %p145 = por %p143, %p144
    %p146 = scmp.le.s32.totalorder 1, %s9
    %p147 = scmp.lt.s32.totalorder %s9, 3
    %p148 = pnand %p146, %p147
    %p149 = pneg %p148
    // Predicated region
    $region9: #{sharded_transformer_forward.9} parent=5 // pred_check
      _
    $region10: #{sharded_transformer_forward.9} parent=5 // pred_check_branch
      %151 = sbr.rel (%p148) target = $region12
    $region11: #{sharded_transformer_forward.9} parent=5 // pred_region
      %s152 = ssub.s32 %s9, 1
      // Predicated region
      $region13: #{sharded_transformer_forward.9} parent=11 // pred_check
        %p153 = pneg %p84
      $region14: #{sharded_transformer_forward.9} parent=11 // pred_check_branch
        %155 = sbr.rel (%p153) target = $region16
      $region15: #{sharded_transformer_forward.9} parent=11 // pred_region
        %s156 = smul.u32 4, %s21
        %p157 = scmp.lt.s32.totalorder %s156, 3
        %s158 = scalar_select %p157, %s156, 3
        %p159 = scmp.lt.s32.totalorder %s20, 0
        %s160 = scalar_select %p159, %s20, 0
        %s161 = sadd.s32 %s160, %s158
        %s162 = smul.addr %s161, 4
        %s163 = scalar_lea.vmem %s1, %s162
        %s164 = smul.u32 4, %s21
      $region16: #{sharded_transformer_forward.9} parent=11 // pred_fallthru
        _
      // Predicated region
      $region17: #{sharded_transformer_forward.9} parent=11 // pred_check
        %p165 = pneg %p110
      $region18: #{sharded_transformer_forward.9} parent=11 // pred_check_branch
        %167 = sbr.rel (%p165) target = $region20
      $region19: #{sharded_transformer_forward.9} parent=11 // pred_region
        %p168 = scmp.lt.s32.totalorder %s20, 0
        %s169 = scalar_select %p168, %s20, 0
        %s170 = scalar_lea.vmem %s2, %s169
      $region20: #{sharded_transformer_forward.9} parent=11 // pred_fallthru
        _
    $region12: #{sharded_transformer_forward.9} parent=5 // pred_fallthru
      _
    %p171 = scmp.lt.s32.totalorder %s9, 2
    // Predicated region
    $region21: #{sharded_transformer_forward.9} parent=5 // pred_check
      %p172 = pneg %p171
    $region22: #{sharded_transformer_forward.9} parent=5 // pred_check_branch
      %174 = sbr.rel (%p172) target = $region24
    $region23: #{sharded_transformer_forward.9} parent=5 // pred_region
      // Predicated region
      $region25: #{sharded_transformer_forward.9} parent=23 // pred_check
        %p175 = pneg %p50
      $region26: #{sharded_transformer_forward.9} parent=23 // pred_check_branch
        %177 = sbr.rel (%p175) target = $region28
      $region27: #{sharded_transformer_forward.9} parent=23 // pred_region
        %p178 = scmp.lt.s32.totalorder %s16, 1
        %s179 = scalar_select %p178, %s16, 1
        %p180 = scmp.lt.s32.totalorder %s18, 0
        %s181 = scalar_select %p180, %s18, 0
        %s182 = sadd.s32 %s181, %s179
        %s183 = smul.addr %s182, 8
        %s184 = scalar_lea.vmem %s0, %s183
      $region28: #{sharded_transformer_forward.9} parent=23 // pred_fallthru
        _
    $region24: #{sharded_transformer_forward.9} parent=5 // pred_fallthru
      _
    %p185 = scmp.le.s32.totalorder 1, %s9
    %p186 = scmp.lt.s32.totalorder %s9, 3
    %p187 = pnand %p185, %p186
    %p188 = pneg %p187
    // Predicated region
    $region29: #{sharded_transformer_forward.9} parent=5 // pred_check
      _
    $region30: #{sharded_transformer_forward.9} parent=5 // pred_check_branch
      %190 = sbr.rel (%p187) target = $region32
    $region31: #{sharded_transformer_forward.9} parent=5 // pred_region
      %s191 = ssub.s32 %s9, 1
      %p192 = scmp.lt.s32.totalorder %s19, 1
      %s193 = scalar_select %p192, %s19, 1
      %p194 = scmp.lt.s32.totalorder %s21, 0
      %s195 = scalar_select %p194, %s21, 0
      %s196 = sadd.s32 %s195, %s193
      %s197 = smul.addr %s196, 8
      %s198 = scalar_lea.vmem %s0, %s197
      %p199 = pneg %p56
      %p200 = pneg %p53
      %s201 = smul.u32 4, %s21
      %p202 = scmp.lt.s32.totalorder %s201, 3
      %s203 = scalar_select %p202, %s201, 3
      %p204 = scmp.lt.s32.totalorder %s20, 0
      %s205 = scalar_select %p204, %s20, 0
      %s206 = sadd.s32 %s205, %s203
      %s207 = smul.addr %s206, 4
      %s208 = scalar_lea.vmem %s1, %s207
      %p209 = pneg %p84
      %p210 = pneg %p81
      %p211 = scmp.lt.s32.totalorder %s20, 0
      %s212 = scalar_select %p211, %s20, 0
      %s213 = scalar_lea.vmem %s2, %s212
      %p214 = pneg %p110
      %p215 = pneg %p107
      %p216 = pneg %p138
      %p217 = pneg %p135
      %p218 = scmp.lt.s32.totalorder %s19, 1
      %s219 = scalar_select %p218, %s19, 1
      %p220 = scmp.lt.s32.totalorder %s20, 0
      %s221 = scalar_select %p220, %s20, 0
      %s222 = sadd.s32 %s221, %s219
      %s223 = smul.addr %s222, 4
      %s224 = scalar_lea.vmem %s3, %s223
      %p225 = scmp.lt.s32.totalorder %s19, 1
      %s226 = scalar_select %p225, %s19, 1
      %p227 = scmp.lt.s32.totalorder %s21, 0
      %s228 = scalar_select %p227, %s21, 0
      %s229 = sadd.s32 %s228, %s226
      %s230 = smul.addr %s229, 8
      %s231 = scalar_lea.vmem %s0, %s230
      %s232 = smul.u32 4, %s21
      %p233 = scmp.lt.s32.totalorder %s232, 3
      %s234 = scalar_select %p233, %s232, 3
      %p235 = scmp.lt.s32.totalorder %s20, 0
      %s236 = scalar_select %p235, %s20, 0
      %s237 = sadd.s32 %s236, %s234
      %s238 = smul.addr %s237, 4
      %s239 = scalar_lea.vmem %s1, %s238
      %s240 = smul.u32 4, %s21
      %p241 = scmp.lt.s32.totalorder %s20, 0
      %s242 = scalar_select %p241, %s20, 0
      %s243 = scalar_lea.vmem %s2, %s242
      %p244 = scmp.lt.s32.totalorder %s19, 1
      %s245 = scalar_select %p244, %s19, 1
      %p246 = scmp.lt.s32.totalorder %s20, 0
      %s247 = scalar_select %p246, %s20, 0
      %s248 = sadd.s32 %s247, %s245
      %s249 = smul.addr %s248, 4
      %s250 = scalar_lea.vmem %s3, %s249
      %p252 = scmp.eq.s32.totalorder %s21, 0
      // Predicated region
      $region33: #{sharded_transformer_forward.9} parent=31 // pred_check
        %p253 = pneg %p252
      $region34: #{sharded_transformer_forward.9} parent=31 // pred_check_branch
        %255 = sbr.rel (%p253) target = $region36
      $region35: #{sharded_transformer_forward.9} parent=31 // pred_region
        %vm256 = vcmask 785408
        %257 = vst.msk [vmem:[#allocation2] sm:$0xff] %vm256, 0.0
      $region36: #{sharded_transformer_forward.9} parent=31 // pred_fallthru
        _
      %v258 = vld [vmem:[#allocation2] sm:$0xff]
      %v259 = vld [vmem:[%s231] sm:$0xff]
      %v260 = vpack.c.bf16 %v259, %v259
      %v261 = vld [vmem:[%s239] sm:$0xf]
      %v262 = vld [vmem:[%s239 + $0x4] sm:$0xf]
      %v263 = vld [vmem:[%s239 + $0x8] sm:$0xf]
      %v264 = vld [vmem:[%s239 + $0xc] sm:$0xf]
      %v269 = vunpack.c.l.b16 %v261
      %v270 = vunpack.c.l.b16 %v262
      %v271 = vunpack.c.l.b16 %v263
      %v272 = vunpack.c.l.b16 %v264
      %v273 = vpack.c.b16 %v270, %v269
      %v274 = vpack.c.b16 %v272, %v271
      %vm277 = vcmask 261120
      %v279 = vsel %vm277, %v260, 0
      %281 = vmatprep.subr.bf16.mxu0 0
      %282 = vmatpush1.bf16.msra.mxu0 %v273
      %283 = vmatprep.subr.bf16.mxu0 0
      %284 = vmatpush1.bf16.msra.mxu0 %v274
      %285 = vmatprep.subr.bf16.mxu0 0
      %286 = vmatpush1.bf16.msra.mxu0 0
      %287 = vmatprep.subr.bf16.mxu0 0
      %288 = vmatpush1.bf16.msra.mxu0 0
      %289 = vmatprep.subr.bf16.mxu0 0
      %290 = vmatpush1.bf16.msra.mxu0 0
      %291 = vmatprep.subr.bf16.mxu0 0
      %292 = vmatpush1.bf16.msra.mxu0 0
      %293 = vmatprep.subr.bf16.mxu0 0
      %294 = vmatpush1.bf16.msra.mxu0 0
      %295 = vmatprep.subr.bf16.mxu0 0
      %296 = vmatpush1.bf16.msra.mxu0 0
      %297 = vmatprep.subr.bf16.mxu0 0
      %298 = vmatpush1.bf16.msra.mxu0 0
      %299 = vmatprep.subr.bf16.mxu0 0
      %300 = vmatpush1.bf16.msra.mxu0 0
      %301 = vmatprep.subr.bf16.mxu0 0
      %302 = vmatpush1.bf16.msra.mxu0 0
      %303 = vmatprep.subr.bf16.mxu0 0
      %304 = vmatpush1.bf16.msra.mxu0 0
      %305 = vmatprep.subr.bf16.mxu0 0
      %306 = vmatpush1.bf16.msra.mxu0 0
      %307 = vmatprep.subr.bf16.mxu0 0
      %308 = vmatpush1.bf16.msra.mxu0 0
      %309 = vmatprep.subr.bf16.mxu0 0
      %310 = vmatpush1.bf16.msra.mxu0 0
      %311 = vmatprep.subr.bf16.mxu0 0
      %312 = vmatpush1.bf16.msra.mxu0 0
      %313 = vmatprep.mubr.bf16.mxu0 0
      %314 = vmatmul.mubr.bf16.gmra.mrb[0].mxu0 %v279
      %v315 = vpop.f32.mrb[0].mxu0
      %v316 = vadd.f32 0.0, %v315
      %v317 = vpop.f32.mrb[0].mxu0
      %v318 = vpop.f32.mrb[0].mxu0
      %v319 = vpop.f32.mrb[0].mxu0
      %320 = vdwg.mxu0
      %v321 = vadd.f32 %v258, %v316
      %vm322 = vcmask 785408
      %323 = vst.msk [vmem:[#allocation2] sm:$0xff] %vm322, %v321
      // Predicated region
      $region37: #{sharded_transformer_forward.9} parent=31 // pred_check
        %p324 = pneg %p252
      $region38: #{sharded_transformer_forward.9} parent=31 // pred_check_branch
        %326 = sbr.rel (%p324) target = $region40
      $region39: #{sharded_transformer_forward.9} parent=31 // pred_region
        %v327 = vld [vmem:[#allocation2] sm:$0xff]
        %v328 = vld [vmem:[%s243] sm:$0x1]
        %v330 = vlaneseq
        %v331 = vshrl.u32 %v330, 7
        %v332 = vsub.s32 0, %v331
        %v333 = vrot.slane %v328, %v332
        %v335 = vadd.f32 %v327, %v333
        %v336 = vpack.c.bf16 %v335, %v335
        %vm337 = vcmask 781312
        %338 = vst.msk [vmem:[%s250] sm:$0xf] %vm337, %v336
      $region40: #{sharded_transformer_forward.9} parent=31 // pred_fallthru
        _
      %p339 = scmp.lt.s32.totalorder %s19, 1
      %s340 = scalar_select %p339, %s19, 1
      %p341 = scmp.lt.s32.totalorder %s20, 0
      %s342 = scalar_select %p341, %s20, 0
      %s343 = sadd.s32 %s342, %s340
      %s344 = smul.addr %s343, 4
      %s345 = scalar_lea.vmem %s3, %s344
      // Predicated region
      $region41: #{sharded_transformer_forward.9} parent=31 // pred_check
        %p346 = pneg %p135
      $region42: #{sharded_transformer_forward.9} parent=31 // pred_check_branch
        %348 = sbr.rel (%p346) target = $region44
      $region43: #{sharded_transformer_forward.9} parent=31 // pred_region
        _
      $region44: #{sharded_transformer_forward.9} parent=31 // pred_fallthru
        _
    $region32: #{sharded_transformer_forward.9} parent=5 // pred_fallthru
      _
    %p349 = scmp.le.s32.totalorder 2, %s9
    // Predicated region
    $region45: #{sharded_transformer_forward.9} parent=5 // pred_check
      %p350 = pneg %p349
    $region46: #{sharded_transformer_forward.9} parent=5 // pred_check_branch
      %352 = sbr.rel (%p350) target = $region48
    $region47: #{sharded_transformer_forward.9} parent=5 // pred_region
      %s353 = ssub.s32 %s9, 2
      // Predicated region
      $region49: #{sharded_transformer_forward.9} parent=47 // pred_check
        %p354 = pneg %p141
      $region50: #{sharded_transformer_forward.9} parent=47 // pred_check_branch
        %356 = sbr.rel (%p354) target = $region52
      $region51: #{sharded_transformer_forward.9} parent=47 // pred_region
        %p357 = scmp.lt.s32.totalorder %s22, 1
        %s358 = scalar_select %p357, %s22, 1
        %p359 = scmp.lt.s32.totalorder %s23, 0
        %s360 = scalar_select %p359, %s23, 0
        %s361 = sadd.s32 %s360, %s358
        %s362 = smul.addr %s361, 4
        %s363 = scalar_lea.vmem %s3, %s362
      $region52: #{sharded_transformer_forward.9} parent=47 // pred_fallthru
        _
    $region48: #{sharded_transformer_forward.9} parent=5 // pred_fallthru
      _
  $region6: #{sharded_transformer_forward.9} parent=0 // loop_footer
    %s13 = sadd.s32 1, %s9
  $region7: #{sharded_transformer_forward.9} parent=0 // loop_footer_branch
    %8 = sbr.rel target = $region3
  $region8: #{sharded_transformer_forward.9} parent=0 // loop_exit
    _

// kernel: sharded_transformer_forward.12
$region0: #{sharded_transformer_forward.12}
  #allocation0 [shape = 'u32[]', space=smem, size = 0x4, offset = 0x4, fixed_abs, tag = 'smem constant byte address 0x4 - core index']
  #allocation1 [shape = 'u32[144,128]{1,0:T(1,128)}', space=vmem, size = 0x12000, scoped, tag = 'internal scratch']
  #allocation2 [shape = 'f32[8,32]{1,0:T(8,128)}', space=vmem, size = 0x1000, scoped, tag = 'scratch operand']
  %s0 = inlined_call_operand.vmem [shape: f32[16,32], index: 0, kind: input, shape index: {}]
  %s1 = inlined_call_operand.vmem [shape: bf16[32,64], index: 1, kind: input, shape index: {}]
  %s2 = inlined_call_operand.vmem [shape: f32[1,64], index: 2, kind: input, shape index: {}]
  %s3 = inlined_call_operand.vmem [shape: bf16[64,32], index: 3, kind: input, shape index: {}]
  %s4 = inlined_call_operand.vmem [shape: f32[1,32], index: 4, kind: input, shape index: {}]
  %s5 = inlined_call_operand.vmem [shape: f32[1,32], index: 5, kind: input, shape index: {}]
  %s6 = inlined_call_operand.vmem [shape: f32[1,32], index: 6, kind: input, shape index: {}]
  %s7 = inlined_call_operand.vmem [shape: f32[16,32], index: 7, kind: output, shape index: {}]
  %s8 = sld [smem:[#allocation0]]
  $region69: #{sharded_transformer_forward.12} parent=0
    _
  %s10 = ssub.s32 1, %s8
  %s11 = scalar_select 0, %s10, %s8
  loop: start=0, step=1, limit=4
  $region2: #{sharded_transformer_forward.12} parent=0 // loop_pre_header
    _
  $region3: #{sharded_transformer_forward.12} parent=0 // loop_header
    %s13 = sphi 0, %s17
    %p14 = scmp.ge.s32.totalorder %s13, 4
    %s20 = sphi 0, %s32
    %s21 = sphi 0, %s28
    %s22 = sphi 0, %s20
    %s23 = sphi 0, %s21
    %s24 = sphi 0, %s22
    %s25 = sphi 0, %s23
    %s35 = sphi 0, %s37
    %s38 = sphi 0, %s35
    %s39 = sphi 0, %s38
    %s55 = sphi 0, %s39
    %s61 = sphi 0, %s63
    %s64 = sphi 0, %s61
    %s65 = sphi 0, %s64
    %s81 = sphi 0, %s65
    %s87 = sphi 0, %s89
    %s90 = sphi 0, %s87
    %s91 = sphi 0, %s90
    %s107 = sphi 0, %s91
    %s113 = sphi 0, %s115
    %s116 = sphi 0, %s113
    %s117 = sphi 0, %s116
    %s133 = sphi 0, %s117
    %s137 = sphi 0, %s137
    %s139 = sphi 0, %s137
    %s140 = sphi 0, %s139
    %s154 = sphi 0, %s140
    %s158 = sphi 0, %s158
    %s160 = sphi 0, %s158
    %s161 = sphi 0, %s160
    %s175 = sphi 0, %s161
    %s179 = sphi 0, %s179
    %s181 = sphi 0, %s179
    %s182 = sphi 0, %s181
    %s196 = sphi 0, %s182
    %s202 = sphi 0, %s204
    %s205 = sphi 0, %s202
    %s206 = sphi 0, %s205
    %s222 = sphi 0, %s206
  $region4: #{sharded_transformer_forward.12} parent=0 // loop_header_branch
    %16 = sbr.rel (%p14) target = $region8
  $region5: #{sharded_transformer_forward.12} parent=0 // loop_body
    %s18 = ssub.s32 %s13, 1
    %s19 = ssub.s32 %s13, 2
    %s26 = sadd.s32 1, %s21
    %p27 = scmp.ge.s32.totalorder %s26, 1
    %s28 = scalar_select %p27, 0, %s26
    %s29 = sadd.s32 1, %s20
    %s30 = scalar_select %p27, %s29, %s20
    %p31 = scmp.ge.s32.totalorder %s30, 2
    %s32 = scalar_select %p31, 0, %s30
    %s33 = ssub.s32 %s20, %s32
    %p34 = scmp.eq.s32.totalorder %s33, 0
    %s36 = sadd.s32 %s35, 1
    %s37 = scalar_select %p34, %s35, %s36
    %p40 = pneg %p34
    %p41 = scmp.eq.s32.totalorder %s13, 1
    %p42 = por %p40, %p41
    %p43 = scmp.ne.s32.totalorder %s35, %s38
    %p44 = scmp.eq.s32.totalorder %s13, 0
    %p45 = por %p43, %p44
    %p46 = scmp.ne.s32.totalorder %s35, %s38
    %p47 = scmp.eq.s32.totalorder %s18, 1
    %p48 = por %p46, %p47
    %p49 = scmp.ne.s32.totalorder %s38, %s39
    %p50 = scmp.eq.s32.totalorder %s18, 0
    %p51 = por %p49, %p50
    %p52 = scmp.ne.s32.totalorder %s38, %s39
    %p53 = scmp.eq.s32.totalorder %s19, 1
    %p54 = por %p52, %p53
    %p56 = scmp.ne.s32.totalorder %s39, %s55
    %p57 = scmp.eq.s32.totalorder %s19, 0
    %p58 = por %p56, %p57
    %s59 = ssub.s32 %s21, %s28
    %p60 = scmp.eq.s32.totalorder %s59, 0
    %s62 = sadd.s32 %s61, 1
    %s63 = scalar_select %p60, %s61, %s62
    %p66 = pneg %p60
    %p67 = scmp.eq.s32.totalorder %s13, 1
    %p68 = por %p66, %p67
    %p69 = scmp.ne.s32.totalorder %s61, %s64
    %p70 = scmp.eq.s32.totalorder %s13, 0
    %p71 = por %p69, %p70
    %p72 = scmp.ne.s32.totalorder %s61, %s64
    %p73 = scmp.eq.s32.totalorder %s18, 1
    %p74 = por %p72, %p73
    %p75 = scmp.ne.s32.totalorder %s64, %s65
    %p76 = scmp.eq.s32.totalorder %s18, 0
    %p77 = por %p75, %p76
    %p78 = scmp.ne.s32.totalorder %s64, %s65
    %p79 = scmp.eq.s32.totalorder %s19, 1
    %p80 = por %p78, %p79
    %p82 = scmp.ne.s32.totalorder %s65, %s81
    %p83 = scmp.eq.s32.totalorder %s19, 0
    %p84 = por %p82, %p83
    %s85 = ssub.s32 %s21, %s28
    %p86 = scmp.eq.s32.totalorder %s85, 0
    %s88 = sadd.s32 %s87, 1
    %s89 = scalar_select %p86, %s87, %s88
    %p92 = pneg %p86
    %p93 = scmp.eq.s32.totalorder %s13, 1
    %p94 = por %p92, %p93
    %p95 = scmp.ne.s32.totalorder %s87, %s90
    %p96 = scmp.eq.s32.totalorder %s13, 0
    %p97 = por %p95, %p96
    %p98 = scmp.ne.s32.totalorder %s87, %s90
    %p99 = scmp.eq.s32.totalorder %s18, 1
    %p100 = por %p98, %p99
    %p101 = scmp.ne.s32.totalorder %s90, %s91
    %p102 = scmp.eq.s32.totalorder %s18, 0
    %p103 = por %p101, %p102
    %p104 = scmp.ne.s32.totalorder %s90, %s91
    %p105 = scmp.eq.s32.totalorder %s19, 1
    %p106 = por %p104, %p105
    %p108 = scmp.ne.s32.totalorder %s91, %s107
    %p109 = scmp.eq.s32.totalorder %s19, 0
    %p110 = por %p108, %p109
    %s111 = ssub.s32 %s21, %s28
    %p112 = scmp.eq.s32.totalorder %s111, 0
    %s114 = sadd.s32 %s113, 1
    %s115 = scalar_select %p112, %s113, %s114
    %p118 = pneg %p112
    %p119 = scmp.eq.s32.totalorder %s13, 1
    %p120 = por %p118, %p119
    %p121 = scmp.ne.s32.totalorder %s113, %s116
    %p122 = scmp.eq.s32.totalorder %s13, 0
    %p123 = por %p121, %p122
    %p124 = scmp.ne.s32.totalorder %s113, %s116
    %p125 = scmp.eq.s32.totalorder %s18, 1
    %p126 = por %p124, %p125
    %p127 = scmp.ne.s32.totalorder %s116, %s117
    %p128 = scmp.eq.s32.totalorder %s18, 0
    %p129 = por %p127, %p128
    %p130 = scmp.ne.s32.totalorder %s116, %s117
    %p131 = scmp.eq.s32.totalorder %s19, 1
    %p132 = por %p130, %p131
    %p134 = scmp.ne.s32.totalorder %s117, %s133
    %p135 = scmp.eq.s32.totalorder %s19, 0
    %p136 = por %p134, %p135
    %s138 = sadd.s32 %s137, 1
    %p141 = scmp.eq.s32.totalorder %s13, 1
    %p142 = scmp.ne.s32.totalorder %s137, %s139
    %p143 = scmp.eq.s32.totalorder %s13, 0
    %p144 = por %p142, %p143
    %p145 = scmp.ne.s32.totalorder %s137, %s139
    %p146 = scmp.eq.s32.totalorder %s18, 1
    %p147 = por %p145, %p146
    %p148 = scmp.ne.s32.totalorder %s139, %s140
    %p149 = scmp.eq.s32.totalorder %s18, 0
    %p150 = por %p148, %p149
    %p151 = scmp.ne.s32.totalorder %s139, %s140
    %p152 = scmp.eq.s32.totalorder %s19, 1
    %p153 = por %p151, %p152
    %p155 = scmp.ne.s32.totalorder %s140, %s154
    %p156 = scmp.eq.s32.totalorder %s19, 0
    %p157 = por %p155, %p156
    %s159 = sadd.s32 %s158, 1
    %p162 = scmp.eq.s32.totalorder %s13, 1
    %p163 = scmp.ne.s32.totalorder %s158, %s160
    %p164 = scmp.eq.s32.totalorder %s13, 0
    %p165 = por %p163, %p164
    %p166 = scmp.ne.s32.totalorder %s158, %s160
    %p167 = scmp.eq.s32.totalorder %s18, 1
    %p168 = por %p166, %p167
    %p169 = scmp.ne.s32.totalorder %s160, %s161
    %p170 = scmp.eq.s32.totalorder %s18, 0
    %p171 = por %p169, %p170
    %p172 = scmp.ne.s32.totalorder %s160, %s161
    %p173 = scmp.eq.s32.totalorder %s19, 1
    %p174 = por %p172, %p173
    %p176 = scmp.ne.s32.totalorder %s161, %s175
    %p177 = scmp.eq.s32.totalorder %s19, 0
    %p178 = por %p176, %p177
    %s180 = sadd.s32 %s179, 1
    %p183 = scmp.eq.s32.totalorder %s13, 1
    %p184 = scmp.ne.s32.totalorder %s179, %s181
    %p185 = scmp.eq.s32.totalorder %s13, 0
    %p186 = por %p184, %p185
    %p187 = scmp.ne.s32.totalorder %s179, %s181
    %p188 = scmp.eq.s32.totalorder %s18, 1
    %p189 = por %p187, %p188
    %p190 = scmp.ne.s32.totalorder %s181, %s182
    %p191 = scmp.eq.s32.totalorder %s18, 0
    %p192 = por %p190, %p191
    %p193 = scmp.ne.s32.totalorder %s181, %s182
    %p194 = scmp.eq.s32.totalorder %s19, 1
    %p195 = por %p193, %p194
    %p197 = scmp.ne.s32.totalorder %s182, %s196
    %p198 = scmp.eq.s32.totalorder %s19, 0
    %p199 = por %p197, %p198
    %s200 = ssub.s32 %s20, %s32
    %p201 = scmp.eq.s32.totalorder %s200, 0
    %s203 = sadd.s32 %s202, 1
    %s204 = scalar_select %p201, %s202, %s203
    %p207 = pneg %p201
    %p208 = scmp.eq.s32.totalorder %s13, 1
    %p209 = por %p207, %p208
    %p210 = scmp.ne.s32.totalorder %s202, %s205
    %p211 = scmp.eq.s32.totalorder %s13, 0
    %p212 = por %p210, %p211
    %p213 = scmp.ne.s32.totalorder %s202, %s205
    %p214 = scmp.eq.s32.totalorder %s18, 1
    %p215 = por %p213, %p214
    %p216 = scmp.ne.s32.totalorder %s205, %s206
    %p217 = scmp.eq.s32.totalorder %s18, 0
    %p218 = por %p216, %p217
    %p219 = scmp.ne.s32.totalorder %s205, %s206
    %p220 = scmp.eq.s32.totalorder %s19, 1
    %p221 = por %p219, %p220
    %p223 = scmp.ne.s32.totalorder %s206, %s222
    %p224 = scmp.eq.s32.totalorder %s19, 0
    %p225 = por %p223, %p224
    %p226 = scmp.le.s32.totalorder 1, %s13
    %p227 = scmp.lt.s32.totalorder %s13, 3
    %p228 = pnand %p226, %p227
    %p229 = pneg %p228
    // Predicated region
    $region9: #{sharded_transformer_forward.12} parent=5 // pred_check
      _
    $region10: #{sharded_transformer_forward.12} parent=5 // pred_check_branch
      %231 = sbr.rel (%p228) target = $region12
    $region11: #{sharded_transformer_forward.12} parent=5 // pred_region
      %s232 = ssub.s32 %s13, 1
      // Predicated region
      $region13: #{sharded_transformer_forward.12} parent=11 // pred_check
        %p233 = pneg %p77
      $region14: #{sharded_transformer_forward.12} parent=11 // pred_check_branch
        %235 = sbr.rel (%p233) target = $region16
      $region15: #{sharded_transformer_forward.12} parent=11 // pred_region
        %p236 = scmp.lt.s32.totalorder %s23, 0
        %s237 = scalar_select %p236, %s23, 0
        %s238 = smul.addr %s237, 4
        %s239 = scalar_lea.vmem %s1, %s238
      $region16: #{sharded_transformer_forward.12} parent=11 // pred_fallthru
        _
      // Predicated region
      $region17: #{sharded_transformer_forward.12} parent=11 // pred_check
        %p240 = pneg %p103
      $region18: #{sharded_transformer_forward.12} parent=11 // pred_check_branch
        %242 = sbr.rel (%p240) target = $region20
      $region19: #{sharded_transformer_forward.12} parent=11 // pred_region
        %p243 = scmp.lt.s32.totalorder %s23, 0
        %s244 = scalar_select %p243, %s23, 0
        %s245 = scalar_lea.vmem %s2, %s244
      $region20: #{sharded_transformer_forward.12} parent=11 // pred_fallthru
        _
      // Predicated region
      $region21: #{sharded_transformer_forward.12} parent=11 // pred_check
        %p246 = pneg %p129
      $region22: #{sharded_transformer_forward.12} parent=11 // pred_check_branch
        %248 = sbr.rel (%p246) target = $region24
      $region23: #{sharded_transformer_forward.12} parent=11 // pred_region
        %s249 = smul.u32 8, %s23
        %p250 = scmp.lt.s32.totalorder %s249, 7
        %s251 = scalar_select %p250, %s249, 7
        %s252 = smul.addr %s251, 4
        %s253 = scalar_lea.vmem %s3, %s252
        %s254 = smul.u32 8, %s23
      $region24: #{sharded_transformer_forward.12} parent=11 // pred_fallthru
        _
      // Predicated region
      $region25: #{sharded_transformer_forward.12} parent=11 // pred_check
        %p255 = pneg %p150
      $region26: #{sharded_transformer_forward.12} parent=11 // pred_check_branch
        %257 = sbr.rel (%p255) target = $region28
      $region27: #{sharded_transformer_forward.12} parent=11 // pred_region
        _
      $region28: #{sharded_transformer_forward.12} parent=11 // pred_fallthru
        _
      // Predicated region
      $region29: #{sharded_transformer_forward.12} parent=11 // pred_check
        %p258 = pneg %p171
      $region30: #{sharded_transformer_forward.12} parent=11 // pred_check_branch
        %260 = sbr.rel (%p258) target = $region32
      $region31: #{sharded_transformer_forward.12} parent=11 // pred_region
        _
      $region32: #{sharded_transformer_forward.12} parent=11 // pred_fallthru
        _
      // Predicated region
      $region33: #{sharded_transformer_forward.12} parent=11 // pred_check
        %p261 = pneg %p192
      $region34: #{sharded_transformer_forward.12} parent=11 // pred_check_branch
        %263 = sbr.rel (%p261) target = $region36
      $region35: #{sharded_transformer_forward.12} parent=11 // pred_region
        _
      $region36: #{sharded_transformer_forward.12} parent=11 // pred_fallthru
        _
    $region12: #{sharded_transformer_forward.12} parent=5 // pred_fallthru
      _
    %p264 = scmp.lt.s32.totalorder %s13, 2
    // Predicated region
    $region37: #{sharded_transformer_forward.12} parent=5 // pred_check
      %p265 = pneg %p264
    $region38: #{sharded_transformer_forward.12} parent=5 // pred_check_branch
      %267 = sbr.rel (%p265) target = $region40
    $region39: #{sharded_transformer_forward.12} parent=5 // pred_region
      // Predicated region
      $region41: #{sharded_transformer_forward.12} parent=39 // pred_check
        %p268 = pneg %p45
      $region42: #{sharded_transformer_forward.12} parent=39 // pred_check_branch
        %270 = sbr.rel (%p268) target = $region44
      $region43: #{sharded_transformer_forward.12} parent=39 // pred_region
        %p271 = scmp.lt.s32.totalorder %s20, 1
        %s272 = scalar_select %p271, %s20, 1
        %s273 = smul.addr %s272, 8
        %s274 = scalar_lea.vmem %s0, %s273
      $region44: #{sharded_transformer_forward.12} parent=39 // pred_fallthru
        _
    $region40: #{sharded_transformer_forward.12} parent=5 // pred_fallthru
      _
    %p275 = scmp.le.s32.totalorder 1, %s13
    %p276 = scmp.lt.s32.totalorder %s13, 3
    %p277 = pnand %p275, %p276
    %p278 = pneg %p277
    // Predicated region
    $region45: #{sharded_transformer_forward.12} parent=5 // pred_check
      _
    $region46: #{sharded_transformer_forward.12} parent=5 // pred_check_branch
      %280 = sbr.rel (%p277) target = $region48
    $region47: #{sharded_transformer_forward.12} parent=5 // pred_region
      %s281 = ssub.s32 %s13, 1
      %p282 = scmp.lt.s32.totalorder %s22, 1
      %s283 = scalar_select %p282, %s22, 1
      %s284 = smul.addr %s283, 8
      %s285 = scalar_lea.vmem %s0, %s284
      %p286 = pneg %p51
      %p287 = pneg %p48
      %p288 = scmp.lt.s32.totalorder %s23, 0
      %s289 = scalar_select %p288, %s23, 0
      %s290 = smul.addr %s289, 4
      %s291 = scalar_lea.vmem %s1, %s290
      %p292 = pneg %p77
      %p293 = pneg %p74
      %p294 = scmp.lt.s32.totalorder %s23, 0
      %s295 = scalar_select %p294, %s23, 0
      %s296 = scalar_lea.vmem %s2, %s295
      %p297 = pneg %p103
      %p298 = pneg %p100
      %s299 = smul.u32 8, %s23
      %p300 = scmp.lt.s32.totalorder %s299, 7
      %s301 = scalar_select %p300, %s299, 7
      %s302 = smul.addr %s301, 4
      %s303 = scalar_lea.vmem %s3, %s302
      %p304 = pneg %p129
      %p305 = pneg %p126
      %p306 = pneg %p150
      %p307 = pneg %p147
      %p308 = pneg %p171
      %p309 = pneg %p168
      %p310 = pneg %p192
      %p311 = pneg %p189
      %p312 = pneg %p218
      %p313 = pneg %p215
      %p314 = scmp.lt.s32.totalorder %s22, 1
      %s315 = scalar_select %p314, %s22, 1
      %s316 = smul.addr %s315, 8
      %s317 = scalar_lea.vmem %s7, %s316
      %p318 = scmp.lt.s32.totalorder %s22, 1
      %s319 = scalar_select %p318, %s22, 1
      %s320 = smul.addr %s319, 8
      %s321 = scalar_lea.vmem %s0, %s320
      %p322 = scmp.lt.s32.totalorder %s23, 0
      %s323 = scalar_select %p322, %s23, 0
      %s324 = smul.addr %s323, 4
      %s325 = scalar_lea.vmem %s1, %s324
      %p326 = scmp.lt.s32.totalorder %s23, 0
      %s327 = scalar_select %p326, %s23, 0
      %s328 = scalar_lea.vmem %s2, %s327
      %s329 = smul.u32 8, %s23
      %p330 = scmp.lt.s32.totalorder %s329, 7
      %s331 = scalar_select %p330, %s329, 7
      %s332 = smul.addr %s331, 4
      %s333 = scalar_lea.vmem %s3, %s332
      %s334 = smul.u32 8, %s23
      %p335 = scmp.lt.s32.totalorder %s22, 1
      %s336 = scalar_select %p335, %s22, 1
      %s337 = smul.addr %s336, 8
      %s338 = scalar_lea.vmem %s7, %s337
      %p340 = scmp.eq.s32.totalorder %s23, 0
      // Predicated region
      $region49: #{sharded_transformer_forward.12} parent=47 // pred_check
        %p341 = pneg %p340
      $region50: #{sharded_transformer_forward.12} parent=47 // pred_check_branch
        %343 = sbr.rel (%p341) target = $region52
      $region51: #{sharded_transformer_forward.12} parent=47 // pred_region
        %vm344 = vcmask 261120
        %345 = vst.msk [vmem:[#allocation2] sm:$0xff] %vm344, 0.0
      $region52: #{sharded_transformer_forward.12} parent=47 // pred_fallthru
        _
      %v346 = vld [vmem:[%s321] sm:$0xff]
      %v347 = vpack.c.bf16 %v346, %v346
      %v348 = vld [vmem:[%s325] sm:$0xf]
      %v349 = vld [vmem:[%s325 + $0x4] sm:$0xf]
      %v350 = vld [vmem:[%s325 + $0x8] sm:$0xf]
      %v351 = vld [vmem:[%s325 + $0xc] sm:$0xf]
      %v352 = vld [vmem:[%s328] sm:$0x1]
      %v354 = vlaneseq
      %v355 = vshrl.u32 %v354, 7
      %v356 = vsub.s32 0, %v355
      %v357 = vrot.slane %v352, %v356
      %v363 = vunpack.c.l.b16 %v348
      %v364 = vunpack.c.l.b16 %v349
      %v365 = vunpack.c.l.b16 %v350
      %v366 = vunpack.c.l.b16 %v351
      %v367 = vpack.c.b16 %v364, %v363
      %v368 = vpack.c.b16 %v366, %v365
      %vm371 = vcmask 261120
      %v373 = vsel %vm371, %v347, 0
      %375 = vmatprep.subr.bf16.mxu0 0
      %376 = vmatpush1.bf16.msra.mxu0 %v367
      %377 = vmatprep.subr.bf16.mxu0 0
      %378 = vmatpush1.bf16.msra.mxu0 %v368
      %379 = vmatprep.subr.bf16.mxu0 0
      %380 = vmatpush1.bf16.msra.mxu0 0
      %381 = vmatprep.subr.bf16.mxu0 0
      %382 = vmatpush1.bf16.msra.mxu0 0
      %383 = vmatprep.subr.bf16.mxu0 0
      %384 = vmatpush1.bf16.msra.mxu0 0
      %385 = vmatprep.subr.bf16.mxu0 0
      %386 = vmatpush1.bf16.msra.mxu0 0
      %387 = vmatprep.subr.bf16.mxu0 0
      %388 = vmatpush1.bf16.msra.mxu0 0
      %389 = vmatprep.subr.bf16.mxu0 0
      %390 = vmatpush1.bf16.msra.mxu0 0
      %391 = vmatprep.subr.bf16.mxu0 0
      %392 = vmatpush1.bf16.msra.mxu0 0
      %393 = vmatprep.subr.bf16.mxu0 0
      %394 = vmatpush1.bf16.msra.mxu0 0
      %395 = vmatprep.subr.bf16.mxu0 0
      %396 = vmatpush1.bf16.msra.mxu0 0
      %397 = vmatprep.subr.bf16.mxu0 0
      %398 = vmatpush1.bf16.msra.mxu0 0
      %399 = vmatprep.subr.bf16.mxu0 0
      %400 = vmatpush1.bf16.msra.mxu0 0
      %401 = vmatprep.subr.bf16.mxu0 0
      %402 = vmatpush1.bf16.msra.mxu0 0
      %403 = vmatprep.subr.bf16.mxu0 0
      %404 = vmatpush1.bf16.msra.mxu0 0
      %405 = vmatprep.subr.bf16.mxu0 0
      %406 = vmatpush1.bf16.msra.mxu0 0
      %407 = vmatprep.mubr.bf16.mxu0 0
      %408 = vmatmul.mubr.bf16.gmra.mrb[0].mxu0 %v373
      %v409 = vpop.f32.mrb[0].mxu0
      %v410 = vadd.f32 %v357, %v409
      %v411 = vpop.f32.mrb[0].mxu0
      %v412 = vpop.f32.mrb[0].mxu0
      %v413 = vpop.f32.mrb[0].mxu0
      %414 = vdwg.mxu0
      %v415 = vmax.f32 %v410, 0.0
      %v416 = vpack.c.bf16 %v415, %v415
      %v417 = vld [vmem:[#allocation2] sm:$0xff]
      %v418 = vld [vmem:[%s333] sm:$0xf]
      %v419 = vld [vmem:[%s333 + $0x4] sm:$0xf]
      %v420 = vld [vmem:[%s333 + $0x8] sm:$0xf]
      %v421 = vld [vmem:[%s333 + $0xc] sm:$0xf]
      %v422 = vld [vmem:[%s333 + $0x10] sm:$0xf]
      %v423 = vld [vmem:[%s333 + $0x14] sm:$0xf]
      %v424 = vld [vmem:[%s333 + $0x18] sm:$0xf]
      %v425 = vld [vmem:[%s333 + $0x1c] sm:$0xf]
      %v434 = vunpack.c.l.b16 %v418
      %v435 = vunpack.c.l.b16 %v419
      %v436 = vunpack.c.l.b16 %v420
      %v437 = vunpack.c.l.b16 %v421
      %v438 = vunpack.c.l.b16 %v422
      %v439 = vunpack.c.l.b16 %v423
      %v440 = vunpack.c.l.b16 %v424
      %v441 = vunpack.c.l.b16 %v425
      %v442 = vpack.c.b16 %v435, %v434
      %v443 = vpack.c.b16 %v437, %v436
      %v444 = vpack.c.b16 %v439, %v438
      %v445 = vpack.c.b16 %v441, %v440
      %vm450 = vcmask 523264
      %v452 = vsel %vm450, %v416, 0
      %454 = vmatprep.subr.bf16.mxu0 0
      %455 = vmatpush1.bf16.msra.mxu0 %v442
      %456 = vmatprep.subr.bf16.mxu0 0
      %457 = vmatpush1.bf16.msra.mxu0 %v443
      %458 = vmatprep.subr.bf16.mxu0 0
      %459 = vmatpush1.bf16.msra.mxu0 %v444
      %460 = vmatprep.subr.bf16.mxu0 0
      %461 = vmatpush1.bf16.msra.mxu0 %v445
      %462 = vmatprep.subr.bf16.mxu0 0
      %463 = vmatpush1.bf16.msra.mxu0 0
      %464 = vmatprep.subr.bf16.mxu0 0
      %465 = vmatpush1.bf16.msra.mxu0 0
      %466 = vmatprep.subr.bf16.mxu0 0
      %467 = vmatpush1.bf16.msra.mxu0 0
      %468 = vmatprep.subr.bf16.mxu0 0
      %469 = vmatpush1.bf16.msra.mxu0 0
      %470 = vmatprep.subr.bf16.mxu0 0
      %471 = vmatpush1.bf16.msra.mxu0 0
      %472 = vmatprep.subr.bf16.mxu0 0
      %473 = vmatpush1.bf16.msra.mxu0 0
      %474 = vmatprep.subr.bf16.mxu0 0
      %475 = vmatpush1.bf16.msra.mxu0 0
      %476 = vmatprep.subr.bf16.mxu0 0
      %477 = vmatpush1.bf16.msra.mxu0 0
      %478 = vmatprep.subr.bf16.mxu0 0
      %479 = vmatpush1.bf16.msra.mxu0 0
      %480 = vmatprep.subr.bf16.mxu0 0
      %481 = vmatpush1.bf16.msra.mxu0 0
      %482 = vmatprep.subr.bf16.mxu0 0
      %483 = vmatpush1.bf16.msra.mxu0 0
      %484 = vmatprep.subr.bf16.mxu0 0
      %485 = vmatpush1.bf16.msra.mxu0 0
      %486 = vmatprep.mubr.bf16.mxu0 0
      %487 = vmatmul.mubr.bf16.gmra.mrb[0].mxu0 %v452
      %v488 = vpop.f32.mrb[0].mxu0
      %v489 = vadd.f32 0.0, %v488
      %v490 = vpop.f32.mrb[0].mxu0
      %v491 = vpop.f32.mrb[0].mxu0
      %v492 = vpop.f32.mrb[0].mxu0
      %493 = vdwg.mxu0
      %v494 = vadd.f32 %v417, %v489
      %495 = vst.msk [vmem:[#allocation2] sm:$0xff] %vm371, %v494
      // Predicated region
      $region53: #{sharded_transformer_forward.12} parent=47 // pred_check
        %p496 = pneg %p340
      $region54: #{sharded_transformer_forward.12} parent=47 // pred_check_branch
        %498 = sbr.rel (%p496) target = $region56
      $region55: #{sharded_transformer_forward.12} parent=47 // pred_region
        %v499 = vld [vmem:[#allocation2] sm:$0xff]
        %v500 = vld [vmem:[%s4] sm:$0x1]
        %v502 = vlaneseq
        %v503 = vshrl.u32 %v502, 7
        %v504 = vsub.s32 0, %v503
        %v505 = vrot.slane %v500, %v504
        %v507 = vadd.f32 %v499, %v505
        %v508 = vld [vmem:[%s321] sm:$0xff]
        %v509 = vadd.f32 %v507, %v508
        %v510 = vld [vmem:[%s5] sm:$0x1]
        %v511 = vld [vmem:[%s6] sm:$0x1]
        %v512 = vsel %vm371, %v509, 0.0
        %513 = vadd.xlane.f32.xlu0 %v512
        %v514 = vpop.xlane.xlu0 %513
        %v515 = vmul.f32 %v509, %v509
        %v516 = vsel %vm371, %v515, 0.0
        %517 = vadd.xlane.f32.xlu0 %v516
        %v518 = vpop.xlane.xlu0 %517
        %v519 = vmul.f32 %v514, 0.03125
        %v520 = vmul.f32 %v514, %v519
        %v521 = vsub.f32 %v518, %v520
        %v522 = vmul.f32 %v521, 0.032258064
        %v523 = vsub.f32 %v509, %v519
        %v524 = vadd.f32 %v522, 1e-05
        %v525 = vrsqrt.pop %v524
        %v526 = vmul.f32 %v523, %v525
        %v528 = vlaneseq
        %v529 = vshrl.u32 %v528, 7
        %v530 = vsub.s32 0, %v529
        %v531 = vrot.slane %v510, %v530
        %v533 = vmul.f32 %v526, %v531
        %v535 = vlaneseq
        %v536 = vshrl.u32 %v535, 7
        %v537 = vsub.s32 0, %v536
        %v538 = vrot.slane %v511, %v537
        %v540 = vadd.f32 %v533, %v538
        %541 = vst.msk [vmem:[%s338] sm:$0xff] %vm371, %v540
      $region56: #{sharded_transformer_forward.12} parent=47 // pred_fallthru
        _
      %p542 = scmp.lt.s32.totalorder %s22, 1
      %s543 = scalar_select %p542, %s22, 1
      %s544 = smul.addr %s543, 8
      %s545 = scalar_lea.vmem %s7, %s544
      // Predicated region
      $region57: #{sharded_transformer_forward.12} parent=47 // pred_check
        %p546 = pneg %p215
      $region58: #{sharded_transformer_forward.12} parent=47 // pred_check_branch
        %548 = sbr.rel (%p546) target = $region60
      $region59: #{sharded_transformer_forward.12} parent=47 // pred_region
        _
      $region60: #{sharded_transformer_forward.12} parent=47 // pred_fallthru
        _
    $region48: #{sharded_transformer_forward.12} parent=5 // pred_fallthru
      _
    %p549 = scmp.le.s32.totalorder 2, %s13
    // Predicated region
    $region61: #{sharded_transformer_forward.12} parent=5 // pred_check
      %p550 = pneg %p549
    $region62: #{sharded_transformer_forward.12} parent=5 // pred_check_branch
      %552 = sbr.rel (%p550) target = $region64
    $region63: #{sharded_transformer_forward.12} parent=5 // pred_region
      %s553 = ssub.s32 %s13, 2
      // Predicated region
      $region65: #{sharded_transformer_forward.12} parent=63 // pred_check
        %p554 = pneg %p221
      $region66: #{sharded_transformer_forward.12} parent=63 // pred_check_branch
        %556 = sbr.rel (%p554) target = $region68
      $region67: #{sharded_transformer_forward.12} parent=63 // pred_region
        %p557 = scmp.lt.s32.totalorder %s24, 1
        %s558 = scalar_select %p557, %s24, 1
        %s559 = smul.addr %s558, 8
        %s560 = scalar_lea.vmem %s7, %s559
      $region68: #{sharded_transformer_forward.12} parent=63 // pred_fallthru
        _
    $region64: #{sharded_transformer_forward.12} parent=5 // pred_fallthru
      _
  $region6: #{sharded_transformer_forward.12} parent=0 // loop_footer
    %s17 = sadd.s32 1, %s13
  $region7: #{sharded_transformer_forward.12} parent=0 // loop_footer_branch
    %12 = sbr.rel target = $region3
  $region8: #{sharded_transformer_forward.12} parent=0 // loop_exit
    _

// kernel: sharded_transformer_forward.10
$region0: #{sharded_transformer_forward.10}
  #allocation0 [shape = 'u32[]', space=smem, size = 0x4, offset = 0x4, fixed_abs, tag = 'smem constant byte address 0x4 - core index']
  #allocation1 [shape = 'u32[144,128]{1,0:T(1,128)}', space=vmem, size = 0x12000, scoped, tag = 'internal scratch']
  %s0 = inlined_call_operand.vmem [shape: bf16[2,8,96], index: 0, kind: input, shape index: {}]
  %s1 = inlined_call_operand.vmem [shape: bf16[2,8,32], index: 1, kind: output, shape index: {}]
  %s2 = sld [smem:[#allocation0]]
  $region37: #{sharded_transformer_forward.10} parent=0
    _
  %s4 = ssub.s32 1, %s2
  %s5 = scalar_select 0, %s4, %s2
  loop: start=0, step=1, limit=4
  $region2: #{sharded_transformer_forward.10} parent=0 // loop_pre_header
    _
  $region3: #{sharded_transformer_forward.10} parent=0 // loop_header
    %s7 = sphi 0, %s11
    %p8 = scmp.ge.s32.totalorder %s7, 4
    %s17 = sphi 0, %s19
    %s20 = sphi 0, %s17
    %s21 = sphi 0, %s20
    %s37 = sphi 0, %s21
    %s43 = sphi 0, %s45
    %s46 = sphi 0, %s43
    %s47 = sphi 0, %s46
    %s63 = sphi 0, %s47
  $region4: #{sharded_transformer_forward.10} parent=0 // loop_header_branch
    %10 = sbr.rel (%p8) target = $region8
  $region5: #{sharded_transformer_forward.10} parent=0 // loop_body
    %s12 = ssub.s32 %s7, 1
    %s13 = ssub.s32 %s7, 2
    %s14 = sadd.s32 %s7, 1
    %s15 = ssub.s32 %s7, %s14
    %p16 = scmp.eq.s32.totalorder %s15, 0
    %s18 = sadd.s32 %s17, 1
    %s19 = scalar_select %p16, %s17, %s18
    %p22 = pneg %p16
    %p23 = scmp.eq.s32.totalorder %s7, 1
    %p24 = por %p22, %p23
    %p25 = scmp.ne.s32.totalorder %s17, %s20
    %p26 = scmp.eq.s32.totalorder %s7, 0
    %p27 = por %p25, %p26
    %p28 = scmp.ne.s32.totalorder %s17, %s20
    %p29 = scmp.eq.s32.totalorder %s12, 1
    %p30 = por %p28, %p29
    %p31 = scmp.ne.s32.totalorder %s20, %s21
    %p32 = scmp.eq.s32.totalorder %s12, 0
    %p33 = por %p31, %p32
    %p34 = scmp.ne.s32.totalorder %s20, %s21
    %p35 = scmp.eq.s32.totalorder %s13, 1
    %p36 = por %p34, %p35
    %p38 = scmp.ne.s32.totalorder %s21, %s37
    %p39 = scmp.eq.s32.totalorder %s13, 0
    %p40 = por %p38, %p39
    %s41 = ssub.s32 %s7, %s14
    %p42 = scmp.eq.s32.totalorder %s41, 0
    %s44 = sadd.s32 %s43, 1
    %s45 = scalar_select %p42, %s43, %s44
    %p48 = pneg %p42
    %p49 = scmp.eq.s32.totalorder %s7, 1
    %p50 = por %p48, %p49
    %p51 = scmp.ne.s32.totalorder %s43, %s46
    %p52 = scmp.eq.s32.totalorder %s7, 0
    %p53 = por %p51, %p52
    %p54 = scmp.ne.s32.totalorder %s43, %s46
    %p55 = scmp.eq.s32.totalorder %s12, 1
    %p56 = por %p54, %p55
    %p57 = scmp.ne.s32.totalorder %s46, %s47
    %p58 = scmp.eq.s32.totalorder %s12, 0
    %p59 = por %p57, %p58
    %p60 = scmp.ne.s32.totalorder %s46, %s47
    %p61 = scmp.eq.s32.totalorder %s13, 1
    %p62 = por %p60, %p61
    %p64 = scmp.ne.s32.totalorder %s47, %s63
    %p65 = scmp.eq.s32.totalorder %s13, 0
    %p66 = por %p64, %p65
    %p67 = scmp.le.s32.totalorder 1, %s7
    %p68 = scmp.lt.s32.totalorder %s7, 3
    %p69 = pnand %p67, %p68
    %p70 = pneg %p69
    // Predicated region
    $region9: #{sharded_transformer_forward.10} parent=5 // pred_check
      _
    $region10: #{sharded_transformer_forward.10} parent=5 // pred_check_branch
      %72 = sbr.rel (%p69) target = $region12
    $region11: #{sharded_transformer_forward.10} parent=5 // pred_region
      %s73 = ssub.s32 %s7, 1
    $region12: #{sharded_transformer_forward.10} parent=5 // pred_fallthru
      _
    %p74 = scmp.lt.s32.totalorder %s7, 2
    // Predicated region
    $region13: #{sharded_transformer_forward.10} parent=5 // pred_check
      %p75 = pneg %p74
    $region14: #{sharded_transformer_forward.10} parent=5 // pred_check_branch
      %77 = sbr.rel (%p75) target = $region16
    $region15: #{sharded_transformer_forward.10} parent=5 // pred_region
      // Predicated region
      $region17: #{sharded_transformer_forward.10} parent=15 // pred_check
        %p78 = pneg %p27
      $region18: #{sharded_transformer_forward.10} parent=15 // pred_check_branch
        %80 = sbr.rel (%p78) target = $region20
      $region19: #{sharded_transformer_forward.10} parent=15 // pred_region
        %p81 = scmp.lt.s32.totalorder %s7, 1
        %s82 = scalar_select %p81, %s7, 1
        %s83 = smul.addr %s82, 4
        %s84 = scalar_lea.vmem %s0, %s83
      $region20: #{sharded_transformer_forward.10} parent=15 // pred_fallthru
        _
    $region16: #{sharded_transformer_forward.10} parent=5 // pred_fallthru
      _
    %p85 = scmp.le.s32.totalorder 1, %s7
    %p86 = scmp.lt.s32.totalorder %s7, 3
    %p87 = pnand %p85, %p86
    %p88 = pneg %p87
    // Predicated region
    $region21: #{sharded_transformer_forward.10} parent=5 // pred_check
      _
    $region22: #{sharded_transformer_forward.10} parent=5 // pred_check_branch
      %90 = sbr.rel (%p87) target = $region24
    $region23: #{sharded_transformer_forward.10} parent=5 // pred_region
      %s91 = ssub.s32 %s7, 1
      %p92 = scmp.lt.s32.totalorder %s12, 1
      %s93 = scalar_select %p92, %s12, 1
      %s94 = smul.addr %s93, 4
      %s95 = scalar_lea.vmem %s0, %s94
      %p96 = pneg %p33
      %p97 = pneg %p30
      %p98 = pneg %p59
      %p99 = pneg %p56
      %p100 = scmp.lt.s32.totalorder %s12, 1
      %s101 = scalar_select %p100, %s12, 1
      %s102 = smul.addr %s101, 4
      %s103 = scalar_lea.vmem %s1, %s102
      %p104 = scmp.lt.s32.totalorder %s12, 1
      %s105 = scalar_select %p104, %s12, 1
      %s106 = smul.addr %s105, 4
      %s107 = scalar_lea.vmem %s0, %s106
      %p108 = scmp.lt.s32.totalorder %s12, 1
      %s109 = scalar_select %p108, %s12, 1
      %s110 = smul.addr %s109, 4
      %s111 = scalar_lea.vmem %s1, %s110
      %v113 = vld [vmem:[%s107] sm:$0xf]
      %v114 = vlaneseq
      %v115 = vshrl.u32 %v114, 7
      %v116 = vlaneseq
      %v117 = vand.u32 %v116, 127
      %vm118 = vcmp.ge.s32.totalorder %v115, %v117
      %v120 = vunpack.c.l.b16 %v113
      %v121 = vpack.c.b16 %v120, %v120
      %122 = vrot.lane.b32.xlu0 %v121, 96
      %v123 = vpop.permute.xlu0 %122
      %vm124 = vcmask 31744
      %v126 = vsel %vm124, %v113, 0
      %v129 = vsel %vm124, %v123, 0
      %131 = vmatprep.subr.bf16.mxu0 0
      %132 = vmatpush1.bf16.xpose.msra.mxu0 %v129
      %133 = vmatprep.subr.bf16.mxu0 0
      %134 = vmatpush1.bf16.xpose.msra.mxu0 0
      %135 = vmatprep.subr.bf16.mxu0 0
      %136 = vmatpush1.bf16.xpose.msra.mxu0 0
      %137 = vmatprep.subr.bf16.mxu0 0
      %138 = vmatpush1.bf16.xpose.msra.mxu0 0
      %139 = vmatprep.subr.bf16.mxu0 0
      %140 = vmatpush1.bf16.xpose.msra.mxu0 0
      %141 = vmatprep.subr.bf16.mxu0 0
      %142 = vmatpush1.bf16.xpose.msra.mxu0 0
      %143 = vmatprep.subr.bf16.mxu0 0
      %144 = vmatpush1.bf16.xpose.msra.mxu0 0
      %145 = vmatprep.subr.bf16.mxu0 0
      %146 = vmatpush1.bf16.xpose.msra.mxu0 0
      %147 = vmatprep.subr.bf16.mxu0 0
      %148 = vmatpush1.bf16.xpose.msra.mxu0 0
      %149 = vmatprep.subr.bf16.mxu0 0
      %150 = vmatpush1.bf16.xpose.msra.mxu0 0
      %151 = vmatprep.subr.bf16.mxu0 0
      %152 = vmatpush1.bf16.xpose.msra.mxu0 0
      %153 = vmatprep.subr.bf16.mxu0 0
      %154 = vmatpush1.bf16.xpose.msra.mxu0 0
      %155 = vmatprep.subr.bf16.mxu0 0
      %156 = vmatpush1.bf16.xpose.msra.mxu0 0
      %157 = vmatprep.subr.bf16.mxu0 0
      %158 = vmatpush1.bf16.xpose.msra.mxu0 0
      %159 = vmatprep.subr.bf16.mxu0 0
      %160 = vmatpush1.bf16.xpose.msra.mxu0 0
      %161 = vmatprep.subr.bf16.mxu0 0
      %162 = vmatpush1.bf16.xpose.msra.mxu0 0
      %163 = vmatprep.mubr.bf16.mxu0 0
      %164 = vmatmul.mubr.bf16.gmra.mrb[0].mxu0 %v126
      %v165 = vpop.f32.mrb[0].mxu0
      %v166 = vadd.f32 0.0, %v165
      %v167 = vpop.f32.mrb[0].mxu0
      %v168 = vpop.f32.mrb[0].mxu0
      %v169 = vpop.f32.mrb[0].mxu0
      %170 = vdwg.mxu0
      %v171 = vmul.f32 %v166, 0.25
      %v172 = vsel %vm118, %v171, -inf
      %vm173 = vcmask 64512
      %v174 = vsel %vm173, %v172, -inf
      %175 = vmax.xlane.f32.xlu0 %v174
      %v176 = vpop.xlane.xlu0 %175
      %v177 = vsub.f32 %v172, %v176
      %v178 = vmul.f32 %v177, 1.442695
      %v179 = vpow.pop %v178
      %v180 = vsel %vm173, %v179, 0.0
      %181 = vadd.xlane.f32.xlu0 %v180
      %v182 = vpop.xlane.xlu0 %181
      %v183 = vrcp.pop %v182
      %v184 = vmul.f32 %v179, %v183
      %v185 = vpack.c.bf16 %v184, %v184
      %186 = vrot.lane.b32.xlu0 %v121, 64
      %v187 = vpop.permute.xlu0 %186
      %v189 = vsel %vm173, %v185, 0
      %vm191 = vcmask 1043456
      %v193 = vsel %vm191, %v187, 0
      %195 = vmatprep.subr.bf16.mxu0 0
      %196 = vmatpush1.bf16.msra.mxu0 %v193
      %197 = vmatprep.subr.bf16.mxu0 0
      %198 = vmatpush1.bf16.msra.mxu0 0
      %199 = vmatprep.subr.bf16.mxu0 0
      %200 = vmatpush1.bf16.msra.mxu0 0
      %201 = vmatprep.subr.bf16.mxu0 0
      %202 = vmatpush1.bf16.msra.mxu0 0
      %203 = vmatprep.subr.bf16.mxu0 0
      %204 = vmatpush1.bf16.msra.mxu0 0
      %205 = vmatprep.subr.bf16.mxu0 0
      %206 = vmatpush1.bf16.msra.mxu0 0
      %207 = vmatprep.subr.bf16.mxu0 0
      %208 = vmatpush1.bf16.msra.mxu0 0
      %209 = vmatprep.subr.bf16.mxu0 0
      %210 = vmatpush1.bf16.msra.mxu0 0
      %211 = vmatprep.subr.bf16.mxu0 0
      %212 = vmatpush1.bf16.msra.mxu0 0
      %213 = vmatprep.subr.bf16.mxu0 0
      %214 = vmatpush1.bf16.msra.mxu0 0
      %215 = vmatprep.subr.bf16.mxu0 0
      %216 = vmatpush1.bf16.msra.mxu0 0
      %217 = vmatprep.subr.bf16.mxu0 0
      %218 = vmatpush1.bf16.msra.mxu0 0
      %219 = vmatprep.subr.bf16.mxu0 0
      %220 = vmatpush1.bf16.msra.mxu0 0
      %221 = vmatprep.subr.bf16.mxu0 0
      %222 = vmatpush1.bf16.msra.mxu0 0
      %223 = vmatprep.subr.bf16.mxu0 0
      %224 = vmatpush1.bf16.msra.mxu0 0
      %225 = vmatprep.subr.bf16.mxu0 0
      %226 = vmatpush1.bf16.msra.mxu0 0
      %227 = vmatprep.mubr.bf16.mxu0 0
      %228 = vmatmul.mubr.bf16.gmra.mrb[0].mxu0 %v189
      %v229 = vpop.f32.mrb[0].mxu0
      %v230 = vadd.f32 0.0, %v229
      %v231 = vpop.f32.mrb[0].mxu0
      %v232 = vpop.f32.mrb[0].mxu0
      %v233 = vpop.f32.mrb[0].mxu0
      %234 = vdwg.mxu0
      %235 = vrot.lane.b32.xlu0 %v121, 124
      %v236 = vpop.permute.xlu0 %235
      %237 = vrot.lane.b32.xlu0 %v121, 92
      %v238 = vpop.permute.xlu0 %237
      %v240 = vsel %vm124, %v236, 0
      %v243 = vsel %vm124, %v238, 0
      %245 = vmatprep.subr.bf16.mxu0 0
      %246 = vmatpush1.bf16.xpose.msra.mxu0 %v243
      %247 = vmatprep.subr.bf16.mxu0 0
      %248 = vmatpush1.bf16.xpose.msra.mxu0 0
      %249 = vmatprep.subr.bf16.mxu0 0
      %250 = vmatpush1.bf16.xpose.msra.mxu0 0
      %251 = vmatprep.subr.bf16.mxu0 0
      %252 = vmatpush1.bf16.xpose.msra.mxu0 0
      %253 = vmatprep.subr.bf16.mxu0 0
      %254 = vmatpush1.bf16.xpose.msra.mxu0 0
      %255 = vmatprep.subr.bf16.mxu0 0
      %256 = vmatpush1.bf16.xpose.msra.mxu0 0
      %257 = vmatprep.subr.bf16.mxu0 0
      %258 = vmatpush1.bf16.xpose.msra.mxu0 0
      %259 = vmatprep.subr.bf16.mxu0 0
      %260 = vmatpush1.bf16.xpose.msra.mxu0 0
      %261 = vmatprep.subr.bf16.mxu0 0
      %262 = vmatpush1.bf16.xpose.msra.mxu0 0
      %263 = vmatprep.subr.bf16.mxu0 0
      %264 = vmatpush1.bf16.xpose.msra.mxu0 0
      %265 = vmatprep.subr.bf16.mxu0 0
      %266 = vmatpush1.bf16.xpose.msra.mxu0 0
      %267 = vmatprep.subr.bf16.mxu0 0
      %268 = vmatpush1.bf16.xpose.msra.mxu0 0
      %269 = vmatprep.subr.bf16.mxu0 0
      %270 = vmatpush1.bf16.xpose.msra.mxu0 0
      %271 = vmatprep.subr.bf16.mxu0 0
      %272 = vmatpush1.bf16.xpose.msra.mxu0 0
      %273 = vmatprep.subr.bf16.mxu0 0
      %274 = vmatpush1.bf16.xpose.msra.mxu0 0
      %275 = vmatprep.subr.bf16.mxu0 0
      %276 = vmatpush1.bf16.xpose.msra.mxu0 0
      %277 = vmatprep.mubr.bf16.mxu0 0
      %278 = vmatmul.mubr.bf16.gmra.mrb[0].mxu0 %v240
      %v279 = vpop.f32.mrb[0].mxu0
      %v280 = vadd.f32 0.0, %v279
      %v281 = vpop.f32.mrb[0].mxu0
      %v282 = vpop.f32.mrb[0].mxu0
      %v283 = vpop.f32.mrb[0].mxu0
      %284 = vdwg.mxu0
      %v285 = vmul.f32 %v280, 0.25
      %v286 = vsel %vm118, %v285, -inf
      %v287 = vsel %vm173, %v286, -inf
      %288 = vmax.xlane.f32.xlu0 %v287
      %v289 = vpop.xlane.xlu0 %288
      %v290 = vsub.f32 %v286, %v289
      %v291 = vmul.f32 %v290, 1.442695
      %v292 = vpow.pop %v291
      %v293 = vsel %vm173, %v292, 0.0
      %294 = vadd.xlane.f32.xlu0 %v293
      %v295 = vpop.xlane.xlu0 %294
      %v296 = vrcp.pop %v295
      %v297 = vmul.f32 %v292, %v296
      %v298 = vpack.c.bf16 %v297, %v297
      %299 = vrot.lane.b32.xlu0 %v121, 60
      %v300 = vpop.permute.xlu0 %299
      %v302 = vsel %vm173, %v298, 0
      %v305 = vsel %vm191, %v300, 0
      %307 = vmatprep.subr.bf16.mxu0 0
      %308 = vmatpush1.bf16.msra.mxu0 %v305
      %309 = vmatprep.subr.bf16.mxu0 0
      %310 = vmatpush1.bf16.msra.mxu0 0
      %311 = vmatprep.subr.bf16.mxu0 0
      %312 = vmatpush1.bf16.msra.mxu0 0
      %313 = vmatprep.subr.bf16.mxu0 0
      %314 = vmatpush1.bf16.msra.mxu0 0
      %315 = vmatprep.subr.bf16.mxu0 0
      %316 = vmatpush1.bf16.msra.mxu0 0
      %317 = vmatprep.subr.bf16.mxu0 0
      %318 = vmatpush1.bf16.msra.mxu0 0
      %319 = vmatprep.subr.bf16.mxu0 0
      %320 = vmatpush1.bf16.msra.mxu0 0
      %321 = vmatprep.subr.bf16.mxu0 0
      %322 = vmatpush1.bf16.msra.mxu0 0
      %323 = vmatprep.subr.bf16.mxu0 0
      %324 = vmatpush1.bf16.msra.mxu0 0
      %325 = vmatprep.subr.bf16.mxu0 0
      %326 = vmatpush1.bf16.msra.mxu0 0
      %327 = vmatprep.subr.bf16.mxu0 0
      %328 = vmatpush1.bf16.msra.mxu0 0
      %329 = vmatprep.subr.bf16.mxu0 0
      %330 = vmatpush1.bf16.msra.mxu0 0
      %331 = vmatprep.subr.bf16.mxu0 0
      %332 = vmatpush1.bf16.msra.mxu0 0
      %333 = vmatprep.subr.bf16.mxu0 0
      %334 = vmatpush1.bf16.msra.mxu0 0
      %335 = vmatprep.subr.bf16.mxu0 0
      %336 = vmatpush1.bf16.msra.mxu0 0
      %337 = vmatprep.subr.bf16.mxu0 0
      %338 = vmatpush1.bf16.msra.mxu0 0
      %339 = vmatprep.mubr.bf16.mxu0 0
      %340 = vmatmul.mubr.bf16.gmra.mrb[0].mxu0 %v302
      %v341 = vpop.f32.mrb[0].mxu0
      %v342 = vadd.f32 0.0, %v341
      %v343 = vpop.f32.mrb[0].mxu0
      %v344 = vpop.f32.mrb[0].mxu0
      %v345 = vpop.f32.mrb[0].mxu0
      %346 = vdwg.mxu0
      %347 = vrot.lane.b32.xlu0 %v121, 120
      %v348 = vpop.permute.xlu0 %347
      %349 = vrot.lane.b32.xlu0 %v121, 88
      %v350 = vpop.permute.xlu0 %349
      %v352 = vsel %vm124, %v348, 0
      %v355 = vsel %vm124, %v350, 0
      %357 = vmatprep.subr.bf16.mxu0 0
      %358 = vmatpush1.bf16.xpose.msra.mxu0 %v355
      %359 = vmatprep.subr.bf16.mxu0 0
      %360 = vmatpush1.bf16.xpose.msra.mxu0 0
      %361 = vmatprep.subr.bf16.mxu0 0
      %362 = vmatpush1.bf16.xpose.msra.mxu0 0
      %363 = vmatprep.subr.bf16.mxu0 0
      %364 = vmatpush1.bf16.xpose.msra.mxu0 0
      %365 = vmatprep.subr.bf16.mxu0 0
      %366 = vmatpush1.bf16.xpose.msra.mxu0 0
      %367 = vmatprep.subr.bf16.mxu0 0
      %368 = vmatpush1.bf16.xpose.msra.mxu0 0
      %369 = vmatprep.subr.bf16.mxu0 0
      %370 = vmatpush1.bf16.xpose.msra.mxu0 0
      %371 = vmatprep.subr.bf16.mxu0 0
      %372 = vmatpush1.bf16.xpose.msra.mxu0 0
      %373 = vmatprep.subr.bf16.mxu0 0
      %374 = vmatpush1.bf16.xpose.msra.mxu0 0
      %375 = vmatprep.subr.bf16.mxu0 0
      %376 = vmatpush1.bf16.xpose.msra.mxu0 0
      %377 = vmatprep.subr.bf16.mxu0 0
      %378 = vmatpush1.bf16.xpose.msra.mxu0 0
      %379 = vmatprep.subr.bf16.mxu0 0
      %380 = vmatpush1.bf16.xpose.msra.mxu0 0
      %381 = vmatprep.subr.bf16.mxu0 0
      %382 = vmatpush1.bf16.xpose.msra.mxu0 0
      %383 = vmatprep.subr.bf16.mxu0 0
      %384 = vmatpush1.bf16.xpose.msra.mxu0 0
      %385 = vmatprep.subr.bf16.mxu0 0
      %386 = vmatpush1.bf16.xpose.msra.mxu0 0
      %387 = vmatprep.subr.bf16.mxu0 0
      %388 = vmatpush1.bf16.xpose.msra.mxu0 0
      %389 = vmatprep.mubr.bf16.mxu0 0
      %390 = vmatmul.mubr.bf16.gmra.mrb[0].mxu0 %v352
      %v391 = vpop.f32.mrb[0].mxu0
      %v392 = vadd.f32 0.0, %v391
      %v393 = vpop.f32.mrb[0].mxu0
      %v394 = vpop.f32.mrb[0].mxu0
      %v395 = vpop.f32.mrb[0].mxu0
      %396 = vdwg.mxu0
      %v397 = vmul.f32 %v392, 0.25
      %v398 = vsel %vm118, %v397, -inf
      %v399 = vsel %vm173, %v398, -inf
      %400 = vmax.xlane.f32.xlu0 %v399
      %v401 = vpop.xlane.xlu0 %400
      %v402 = vsub.f32 %v398, %v401
      %v403 = vmul.f32 %v402, 1.442695
      %v404 = vpow.pop %v403
      %v405 = vsel %vm173, %v404, 0.0
      %406 = vadd.xlane.f32.xlu0 %v405
      %v407 = vpop.xlane.xlu0 %406
      %v408 = vrcp.pop %v407
      %v409 = vmul.f32 %v404, %v408
      %v410 = vpack.c.bf16 %v409, %v409
      %411 = vrot.lane.b32.xlu0 %v121, 56
      %v412 = vpop.permute.xlu0 %411
      %v414 = vsel %vm173, %v410, 0
      %v417 = vsel %vm191, %v412, 0
      %419 = vmatprep.subr.bf16.mxu0 0
      %420 = vmatpush1.bf16.msra.mxu0 %v417
      %421 = vmatprep.subr.bf16.mxu0 0
      %422 = vmatpush1.bf16.msra.mxu0 0
      %423 = vmatprep.subr.bf16.mxu0 0
      %424 = vmatpush1.bf16.msra.mxu0 0
      %425 = vmatprep.subr.bf16.mxu0 0
      %426 = vmatpush1.bf16.msra.mxu0 0
      %427 = vmatprep.subr.bf16.mxu0 0
      %428 = vmatpush1.bf16.msra.mxu0 0
      %429 = vmatprep.subr.bf16.mxu0 0
      %430 = vmatpush1.bf16.msra.mxu0 0
      %431 = vmatprep.subr.bf16.mxu0 0
      %432 = vmatpush1.bf16.msra.mxu0 0
      %433 = vmatprep.subr.bf16.mxu0 0
      %434 = vmatpush1.bf16.msra.mxu0 0
      %435 = vmatprep.subr.bf16.mxu0 0
      %436 = vmatpush1.bf16.msra.mxu0 0
      %437 = vmatprep.subr.bf16.mxu0 0
      %438 = vmatpush1.bf16.msra.mxu0 0
      %439 = vmatprep.subr.bf16.mxu0 0
      %440 = vmatpush1.bf16.msra.mxu0 0
      %441 = vmatprep.subr.bf16.mxu0 0
      %442 = vmatpush1.bf16.msra.mxu0 0
      %443 = vmatprep.subr.bf16.mxu0 0
      %444 = vmatpush1.bf16.msra.mxu0 0
      %445 = vmatprep.subr.bf16.mxu0 0
      %446 = vmatpush1.bf16.msra.mxu0 0
      %447 = vmatprep.subr.bf16.mxu0 0
      %448 = vmatpush1.bf16.msra.mxu0 0
      %449 = vmatprep.subr.bf16.mxu0 0
      %450 = vmatpush1.bf16.msra.mxu0 0
      %451 = vmatprep.mubr.bf16.mxu0 0
      %452 = vmatmul.mubr.bf16.gmra.mrb[0].mxu0 %v414
      %v453 = vpop.f32.mrb[0].mxu0
      %v454 = vadd.f32 0.0, %v453
      %v455 = vpop.f32.mrb[0].mxu0
      %v456 = vpop.f32.mrb[0].mxu0
      %v457 = vpop.f32.mrb[0].mxu0
      %458 = vdwg.mxu0
      %459 = vrot.lane.b32.xlu0 %v121, 116
      %v460 = vpop.permute.xlu0 %459
      %461 = vrot.lane.b32.xlu0 %v121, 84
      %v462 = vpop.permute.xlu0 %461
      %v464 = vsel %vm124, %v460, 0
      %v467 = vsel %vm124, %v462, 0
      %469 = vmatprep.subr.bf16.mxu0 0
      %470 = vmatpush1.bf16.xpose.msra.mxu0 %v467
      %471 = vmatprep.subr.bf16.mxu0 0
      %472 = vmatpush1.bf16.xpose.msra.mxu0 0
      %473 = vmatprep.subr.bf16.mxu0 0
      %474 = vmatpush1.bf16.xpose.msra.mxu0 0
      %475 = vmatprep.subr.bf16.mxu0 0
      %476 = vmatpush1.bf16.xpose.msra.mxu0 0
      %477 = vmatprep.subr.bf16.mxu0 0
      %478 = vmatpush1.bf16.xpose.msra.mxu0 0
      %479 = vmatprep.subr.bf16.mxu0 0
      %480 = vmatpush1.bf16.xpose.msra.mxu0 0
      %481 = vmatprep.subr.bf16.mxu0 0
      %482 = vmatpush1.bf16.xpose.msra.mxu0 0
      %483 = vmatprep.subr.bf16.mxu0 0
      %484 = vmatpush1.bf16.xpose.msra.mxu0 0
      %485 = vmatprep.subr.bf16.mxu0 0
      %486 = vmatpush1.bf16.xpose.msra.mxu0 0
      %487 = vmatprep.subr.bf16.mxu0 0
      %488 = vmatpush1.bf16.xpose.msra.mxu0 0
      %489 = vmatprep.subr.bf16.mxu0 0
      %490 = vmatpush1.bf16.xpose.msra.mxu0 0
      %491 = vmatprep.subr.bf16.mxu0 0
      %492 = vmatpush1.bf16.xpose.msra.mxu0 0
      %493 = vmatprep.subr.bf16.mxu0 0
      %494 = vmatpush1.bf16.xpose.msra.mxu0 0
      %495 = vmatprep.subr.bf16.mxu0 0
      %496 = vmatpush1.bf16.xpose.msra.mxu0 0
      %497 = vmatprep.subr.bf16.mxu0 0
      %498 = vmatpush1.bf16.xpose.msra.mxu0 0
      %499 = vmatprep.subr.bf16.mxu0 0
      %500 = vmatpush1.bf16.xpose.msra.mxu0 0
      %501 = vmatprep.mubr.bf16.mxu0 0
      %502 = vmatmul.mubr.bf16.gmra.mrb[0].mxu0 %v464
      %v503 = vpop.f32.mrb[0].mxu0
      %v504 = vadd.f32 0.0, %v503
      %v505 = vpop.f32.mrb[0].mxu0
      %v506 = vpop.f32.mrb[0].mxu0
      %v507 = vpop.f32.mrb[0].mxu0
      %508 = vdwg.mxu0
      %v509 = vmul.f32 %v504, 0.25
      %v510 = vsel %vm118, %v509, -inf
      %v511 = vsel %vm173, %v510, -inf
      %512 = vmax.xlane.f32.xlu0 %v511
      %v513 = vpop.xlane.xlu0 %512
      %v514 = vsub.f32 %v510, %v513
      %v515 = vmul.f32 %v514, 1.442695
      %v516 = vpow.pop %v515
      %v517 = vsel %vm173, %v516, 0.0
      %518 = vadd.xlane.f32.xlu0 %v517
      %v519 = vpop.xlane.xlu0 %518
      %v520 = vrcp.pop %v519
      %v521 = vmul.f32 %v516, %v520
      %v522 = vpack.c.bf16 %v521, %v521
      %523 = vrot.lane.b32.xlu0 %v121, 52
      %v524 = vpop.permute.xlu0 %523
      %v526 = vsel %vm173, %v522, 0
      %v529 = vsel %vm191, %v524, 0
      %531 = vmatprep.subr.bf16.mxu0 0
      %532 = vmatpush1.bf16.msra.mxu0 %v529
      %533 = vmatprep.subr.bf16.mxu0 0
      %534 = vmatpush1.bf16.msra.mxu0 0
      %535 = vmatprep.subr.bf16.mxu0 0
      %536 = vmatpush1.bf16.msra.mxu0 0
      %537 = vmatprep.subr.bf16.mxu0 0
      %538 = vmatpush1.bf16.msra.mxu0 0
      %539 = vmatprep.subr.bf16.mxu0 0
      %540 = vmatpush1.bf16.msra.mxu0 0
      %541 = vmatprep.subr.bf16.mxu0 0
      %542 = vmatpush1.bf16.msra.mxu0 0
      %543 = vmatprep.subr.bf16.mxu0 0
      %544 = vmatpush1.bf16.msra.mxu0 0
      %545 = vmatprep.subr.bf16.mxu0 0
      %546 = vmatpush1.bf16.msra.mxu0 0
      %547 = vmatprep.subr.bf16.mxu0 0
      %548 = vmatpush1.bf16.msra.mxu0 0
      %549 = vmatprep.subr.bf16.mxu0 0
      %550 = vmatpush1.bf16.msra.mxu0 0
      %551 = vmatprep.subr.bf16.mxu0 0
      %552 = vmatpush1.bf16.msra.mxu0 0
      %553 = vmatprep.subr.bf16.mxu0 0
      %554 = vmatpush1.bf16.msra.mxu0 0
      %555 = vmatprep.subr.bf16.mxu0 0
      %556 = vmatpush1.bf16.msra.mxu0 0
      %557 = vmatprep.subr.bf16.mxu0 0
      %558 = vmatpush1.bf16.msra.mxu0 0
      %559 = vmatprep.subr.bf16.mxu0 0
      %560 = vmatpush1.bf16.msra.mxu0 0
      %561 = vmatprep.subr.bf16.mxu0 0
      %562 = vmatpush1.bf16.msra.mxu0 0
      %563 = vmatprep.mubr.bf16.mxu0 0
      %564 = vmatmul.mubr.bf16.gmra.mrb[0].mxu0 %v526
      %v565 = vpop.f32.mrb[0].mxu0
      %v566 = vadd.f32 0.0, %v565
      %v567 = vpop.f32.mrb[0].mxu0
      %v568 = vpop.f32.mrb[0].mxu0
      %v569 = vpop.f32.mrb[0].mxu0
      %570 = vdwg.mxu0
      %571 = vrot.lane.b32.xlu0 %v121, 112
      %v572 = vpop.permute.xlu0 %571
      %573 = vrot.lane.b32.xlu0 %v121, 80
      %v574 = vpop.permute.xlu0 %573
      %v576 = vsel %vm124, %v572, 0
      %v579 = vsel %vm124, %v574, 0
      %581 = vmatprep.subr.bf16.mxu0 0
      %582 = vmatpush1.bf16.xpose.msra.mxu0 %v579
      %583 = vmatprep.subr.bf16.mxu0 0
      %584 = vmatpush1.bf16.xpose.msra.mxu0 0
      %585 = vmatprep.subr.bf16.mxu0 0
      %586 = vmatpush1.bf16.xpose.msra.mxu0 0
      %587 = vmatprep.subr.bf16.mxu0 0
      %588 = vmatpush1.bf16.xpose.msra.mxu0 0
      %589 = vmatprep.subr.bf16.mxu0 0
      %590 = vmatpush1.bf16.xpose.msra.mxu0 0
      %591 = vmatprep.subr.bf16.mxu0 0
      %592 = vmatpush1.bf16.xpose.msra.mxu0 0
      %593 = vmatprep.subr.bf16.mxu0 0
      %594 = vmatpush1.bf16.xpose.msra.mxu0 0
      %595 = vmatprep.subr.bf16.mxu0 0
      %596 = vmatpush1.bf16.xpose.msra.mxu0 0
      %597 = vmatprep.subr.bf16.mxu0 0
      %598 = vmatpush1.bf16.xpose.msra.mxu0 0
      %599 = vmatprep.subr.bf16.mxu0 0
      %600 = vmatpush1.bf16.xpose.msra.mxu0 0
      %601 = vmatprep.subr.bf16.mxu0 0
      %602 = vmatpush1.bf16.xpose.msra.mxu0 0
      %603 = vmatprep.subr.bf16.mxu0 0
      %604 = vmatpush1.bf16.xpose.msra.mxu0 0
      %605 = vmatprep.subr.bf16.mxu0 0
      %606 = vmatpush1.bf16.xpose.msra.mxu0 0
      %607 = vmatprep.subr.bf16.mxu0 0
      %608 = vmatpush1.bf16.xpose.msra.mxu0 0
      %609 = vmatprep.subr.bf16.mxu0 0
      %610 = vmatpush1.bf16.xpose.msra.mxu0 0
      %611 = vmatprep.subr.bf16.mxu0 0
      %612 = vmatpush1.bf16.xpose.msra.mxu0 0
      %613 = vmatprep.mubr.bf16.mxu0 0
      %614 = vmatmul.mubr.bf16.gmra.mrb[0].mxu0 %v576
      %v615 = vpop.f32.mrb[0].mxu0
      %v616 = vadd.f32 0.0, %v615
      %v617 = vpop.f32.mrb[0].mxu0
      %v618 = vpop.f32.mrb[0].mxu0
      %v619 = vpop.f32.mrb[0].mxu0
      %620 = vdwg.mxu0
      %v621 = vmul.f32 %v616, 0.25
      %v622 = vsel %vm118, %v621, -inf
      %v623 = vsel %vm173, %v622, -inf
      %624 = vmax.xlane.f32.xlu0 %v623
      %v625 = vpop.xlane.xlu0 %624
      %v626 = vsub.f32 %v622, %v625
      %v627 = vmul.f32 %v626, 1.442695
      %v628 = vpow.pop %v627
      %v629 = vsel %vm173, %v628, 0.0
      %630 = vadd.xlane.f32.xlu0 %v629
      %v631 = vpop.xlane.xlu0 %630
      %v632 = vrcp.pop %v631
      %v633 = vmul.f32 %v628, %v632
      %v634 = vpack.c.bf16 %v633, %v633
      %635 = vrot.lane.b32.xlu0 %v121, 48
      %v636 = vpop.permute.xlu0 %635
      %v638 = vsel %vm173, %v634, 0
      %v641 = vsel %vm191, %v636, 0
      %643 = vmatprep.subr.bf16.mxu0 0
      %644 = vmatpush1.bf16.msra.mxu0 %v641
      %645 = vmatprep.subr.bf16.mxu0 0
      %646 = vmatpush1.bf16.msra.mxu0 0
      %647 = vmatprep.subr.bf16.mxu0 0
      %648 = vmatpush1.bf16.msra.mxu0 0
      %649 = vmatprep.subr.bf16.mxu0 0
      %650 = vmatpush1.bf16.msra.mxu0 0
      %651 = vmatprep.subr.bf16.mxu0 0
      %652 = vmatpush1.bf16.msra.mxu0 0
      %653 = vmatprep.subr.bf16.mxu0 0
      %654 = vmatpush1.bf16.msra.mxu0 0
      %655 = vmatprep.subr.bf16.mxu0 0
      %656 = vmatpush1.bf16.msra.mxu0 0
      %657 = vmatprep.subr.bf16.mxu0 0
      %658 = vmatpush1.bf16.msra.mxu0 0
      %659 = vmatprep.subr.bf16.mxu0 0
      %660 = vmatpush1.bf16.msra.mxu0 0
      %661 = vmatprep.subr.bf16.mxu0 0
      %662 = vmatpush1.bf16.msra.mxu0 0
      %663 = vmatprep.subr.bf16.mxu0 0
      %664 = vmatpush1.bf16.msra.mxu0 0
      %665 = vmatprep.subr.bf16.mxu0 0
      %666 = vmatpush1.bf16.msra.mxu0 0
      %667 = vmatprep.subr.bf16.mxu0 0
      %668 = vmatpush1.bf16.msra.mxu0 0
      %669 = vmatprep.subr.bf16.mxu0 0
      %670 = vmatpush1.bf16.msra.mxu0 0
      %671 = vmatprep.subr.bf16.mxu0 0
      %672 = vmatpush1.bf16.msra.mxu0 0
      %673 = vmatprep.subr.bf16.mxu0 0
      %674 = vmatpush1.bf16.msra.mxu0 0
      %675 = vmatprep.mubr.bf16.mxu0 0
      %676 = vmatmul.mubr.bf16.gmra.mrb[0].mxu0 %v638
      %v677 = vpop.f32.mrb[0].mxu0
      %v678 = vadd.f32 0.0, %v677
      %v679 = vpop.f32.mrb[0].mxu0
      %v680 = vpop.f32.mrb[0].mxu0
      %v681 = vpop.f32.mrb[0].mxu0
      %682 = vdwg.mxu0
      %683 = vrot.lane.b32.xlu0 %v121, 108
      %v684 = vpop.permute.xlu0 %683
      %685 = vrot.lane.b32.xlu0 %v121, 76
      %v686 = vpop.permute.xlu0 %685
      %v688 = vsel %vm124, %v684, 0
      %v691 = vsel %vm124, %v686, 0
      %693 = vmatprep.subr.bf16.mxu0 0
      %694 = vmatpush1.bf16.xpose.msra.mxu0 %v691
      %695 = vmatprep.subr.bf16.mxu0 0
      %696 = vmatpush1.bf16.xpose.msra.mxu0 0
      %697 = vmatprep.subr.bf16.mxu0 0
      %698 = vmatpush1.bf16.xpose.msra.mxu0 0
      %699 = vmatprep.subr.bf16.mxu0 0
      %700 = vmatpush1.bf16.xpose.msra.mxu0 0
      %701 = vmatprep.subr.bf16.mxu0 0
      %702 = vmatpush1.bf16.xpose.msra.mxu0 0
      %703 = vmatprep.subr.bf16.mxu0 0
      %704 = vmatpush1.bf16.xpose.msra.mxu0 0
      %705 = vmatprep.subr.bf16.mxu0 0
      %706 = vmatpush1.bf16.xpose.msra.mxu0 0
      %707 = vmatprep.subr.bf16.mxu0 0
      %708 = vmatpush1.bf16.xpose.msra.mxu0 0
      %709 = vmatprep.subr.bf16.mxu0 0
      %710 = vmatpush1.bf16.xpose.msra.mxu0 0
      %711 = vmatprep.subr.bf16.mxu0 0
      %712 = vmatpush1.bf16.xpose.msra.mxu0 0
      %713 = vmatprep.subr.bf16.mxu0 0
      %714 = vmatpush1.bf16.xpose.msra.mxu0 0
      %715 = vmatprep.subr.bf16.mxu0 0
      %716 = vmatpush1.bf16.xpose.msra.mxu0 0
      %717 = vmatprep.subr.bf16.mxu0 0
      %718 = vmatpush1.bf16.xpose.msra.mxu0 0
      %719 = vmatprep.subr.bf16.mxu0 0
      %720 = vmatpush1.bf16.xpose.msra.mxu0 0
      %721 = vmatprep.subr.bf16.mxu0 0
      %722 = vmatpush1.bf16.xpose.msra.mxu0 0
      %723 = vmatprep.subr.bf16.mxu0 0
      %724 = vmatpush1.bf16.xpose.msra.mxu0 0
      %725 = vmatprep.mubr.bf16.mxu0 0
      %726 = vmatmul.mubr.bf16.gmra.mrb[0].mxu0 %v688
      %v727 = vpop.f32.mrb[0].mxu0
      %v728 = vadd.f32 0.0, %v727
      %v729 = vpop.f32.mrb[0].mxu0
      %v730 = vpop.f32.mrb[0].mxu0
      %v731 = vpop.f32.mrb[0].mxu0
      %732 = vdwg.mxu0
      %v733 = vmul.f32 %v728, 0.25
      %v734 = vsel %vm118, %v733, -inf
      %v735 = vsel %vm173, %v734, -inf
      %736 = vmax.xlane.f32.xlu0 %v735
      %v737 = vpop.xlane.xlu0 %736
      %v738 = vsub.f32 %v734, %v737
      %v739 = vmul.f32 %v738, 1.442695
      %v740 = vpow.pop %v739
      %v741 = vsel %vm173, %v740, 0.0
      %742 = vadd.xlane.f32.xlu0 %v741
      %v743 = vpop.xlane.xlu0 %742
      %v744 = vrcp.pop %v743
      %v745 = vmul.f32 %v740, %v744
      %v746 = vpack.c.bf16 %v745, %v745
      %747 = vrot.lane.b32.xlu0 %v121, 44
      %v748 = vpop.permute.xlu0 %747
      %v750 = vsel %vm173, %v746, 0
      %v753 = vsel %vm191, %v748, 0
      %755 = vmatprep.subr.bf16.mxu0 0
      %756 = vmatpush1.bf16.msra.mxu0 %v753
      %757 = vmatprep.subr.bf16.mxu0 0
      %758 = vmatpush1.bf16.msra.mxu0 0
      %759 = vmatprep.subr.bf16.mxu0 0
      %760 = vmatpush1.bf16.msra.mxu0 0
      %761 = vmatprep.subr.bf16.mxu0 0
      %762 = vmatpush1.bf16.msra.mxu0 0
      %763 = vmatprep.subr.bf16.mxu0 0
      %764 = vmatpush1.bf16.msra.mxu0 0
      %765 = vmatprep.subr.bf16.mxu0 0
      %766 = vmatpush1.bf16.msra.mxu0 0
      %767 = vmatprep.subr.bf16.mxu0 0
      %768 = vmatpush1.bf16.msra.mxu0 0
      %769 = vmatprep.subr.bf16.mxu0 0
      %770 = vmatpush1.bf16.msra.mxu0 0
      %771 = vmatprep.subr.bf16.mxu0 0
      %772 = vmatpush1.bf16.msra.mxu0 0
      %773 = vmatprep.subr.bf16.mxu0 0
      %774 = vmatpush1.bf16.msra.mxu0 0
      %775 = vmatprep.subr.bf16.mxu0 0
      %776 = vmatpush1.bf16.msra.mxu0 0
      %777 = vmatprep.subr.bf16.mxu0 0
      %778 = vmatpush1.bf16.msra.mxu0 0
      %779 = vmatprep.subr.bf16.mxu0 0
      %780 = vmatpush1.bf16.msra.mxu0 0
      %781 = vmatprep.subr.bf16.mxu0 0
      %782 = vmatpush1.bf16.msra.mxu0 0
      %783 = vmatprep.subr.bf16.mxu0 0
      %784 = vmatpush1.bf16.msra.mxu0 0
      %785 = vmatprep.subr.bf16.mxu0 0
      %786 = vmatpush1.bf16.msra.mxu0 0
      %787 = vmatprep.mubr.bf16.mxu0 0
      %788 = vmatmul.mubr.bf16.gmra.mrb[0].mxu0 %v750
      %v789 = vpop.f32.mrb[0].mxu0
      %v790 = vadd.f32 0.0, %v789
      %v791 = vpop.f32.mrb[0].mxu0
      %v792 = vpop.f32.mrb[0].mxu0
      %v793 = vpop.f32.mrb[0].mxu0
      %794 = vdwg.mxu0
      %795 = vrot.lane.b32.xlu0 %v121, 104
      %v796 = vpop.permute.xlu0 %795
      %797 = vrot.lane.b32.xlu0 %v121, 72
      %v798 = vpop.permute.xlu0 %797
      %v800 = vsel %vm124, %v796, 0
      %v803 = vsel %vm124, %v798, 0
      %805 = vmatprep.subr.bf16.mxu0 0
      %806 = vmatpush1.bf16.xpose.msra.mxu0 %v803
      %807 = vmatprep.subr.bf16.mxu0 0
      %808 = vmatpush1.bf16.xpose.msra.mxu0 0
      %809 = vmatprep.subr.bf16.mxu0 0
      %810 = vmatpush1.bf16.xpose.msra.mxu0 0
      %811 = vmatprep.subr.bf16.mxu0 0
      %812 = vmatpush1.bf16.xpose.msra.mxu0 0
      %813 = vmatprep.subr.bf16.mxu0 0
      %814 = vmatpush1.bf16.xpose.msra.mxu0 0
      %815 = vmatprep.subr.bf16.mxu0 0
      %816 = vmatpush1.bf16.xpose.msra.mxu0 0
      %817 = vmatprep.subr.bf16.mxu0 0
      %818 = vmatpush1.bf16.xpose.msra.mxu0 0
      %819 = vmatprep.subr.bf16.mxu0 0
      %820 = vmatpush1.bf16.xpose.msra.mxu0 0
      %821 = vmatprep.subr.bf16.mxu0 0
      %822 = vmatpush1.bf16.xpose.msra.mxu0 0
      %823 = vmatprep.subr.bf16.mxu0 0
      %824 = vmatpush1.bf16.xpose.msra.mxu0 0
      %825 = vmatprep.subr.bf16.mxu0 0
      %826 = vmatpush1.bf16.xpose.msra.mxu0 0
      %827 = vmatprep.subr.bf16.mxu0 0
      %828 = vmatpush1.bf16.xpose.msra.mxu0 0
      %829 = vmatprep.subr.bf16.mxu0 0
      %830 = vmatpush1.bf16.xpose.msra.mxu0 0
      %831 = vmatprep.subr.bf16.mxu0 0
      %832 = vmatpush1.bf16.xpose.msra.mxu0 0
      %833 = vmatprep.subr.bf16.mxu0 0
      %834 = vmatpush1.bf16.xpose.msra.mxu0 0
      %835 = vmatprep.subr.bf16.mxu0 0
      %836 = vmatpush1.bf16.xpose.msra.mxu0 0
      %837 = vmatprep.mubr.bf16.mxu0 0
      %838 = vmatmul.mubr.bf16.gmra.mrb[0].mxu0 %v800
      %v839 = vpop.f32.mrb[0].mxu0
      %v840 = vadd.f32 0.0, %v839
      %v841 = vpop.f32.mrb[0].mxu0
      %v842 = vpop.f32.mrb[0].mxu0
      %v843 = vpop.f32.mrb[0].mxu0
      %844 = vdwg.mxu0
      %v845 = vmul.f32 %v840, 0.25
      %v846 = vsel %vm118, %v845, -inf
      %v847 = vsel %vm173, %v846, -inf
      %848 = vmax.xlane.f32.xlu0 %v847
      %v849 = vpop.xlane.xlu0 %848
      %v850 = vsub.f32 %v846, %v849
      %v851 = vmul.f32 %v850, 1.442695
      %v852 = vpow.pop %v851
      %v853 = vsel %vm173, %v852, 0.0
      %854 = vadd.xlane.f32.xlu0 %v853
      %v855 = vpop.xlane.xlu0 %854
      %v856 = vrcp.pop %v855
      %v857 = vmul.f32 %v852, %v856
      %v858 = vpack.c.bf16 %v857, %v857
      %859 = vrot.lane.b32.xlu0 %v121, 40
      %v860 = vpop.permute.xlu0 %859
      %v862 = vsel %vm173, %v858, 0
      %v865 = vsel %vm191, %v860, 0
      %867 = vmatprep.subr.bf16.mxu0 0
      %868 = vmatpush1.bf16.msra.mxu0 %v865
      %869 = vmatprep.subr.bf16.mxu0 0
      %870 = vmatpush1.bf16.msra.mxu0 0
      %871 = vmatprep.subr.bf16.mxu0 0
      %872 = vmatpush1.bf16.msra.mxu0 0
      %873 = vmatprep.subr.bf16.mxu0 0
      %874 = vmatpush1.bf16.msra.mxu0 0
      %875 = vmatprep.subr.bf16.mxu0 0
      %876 = vmatpush1.bf16.msra.mxu0 0
      %877 = vmatprep.subr.bf16.mxu0 0
      %878 = vmatpush1.bf16.msra.mxu0 0
      %879 = vmatprep.subr.bf16.mxu0 0
      %880 = vmatpush1.bf16.msra.mxu0 0
      %881 = vmatprep.subr.bf16.mxu0 0
      %882 = vmatpush1.bf16.msra.mxu0 0
      %883 = vmatprep.subr.bf16.mxu0 0
      %884 = vmatpush1.bf16.msra.mxu0 0
      %885 = vmatprep.subr.bf16.mxu0 0
      %886 = vmatpush1.bf16.msra.mxu0 0
      %887 = vmatprep.subr.bf16.mxu0 0
      %888 = vmatpush1.bf16.msra.mxu0 0
      %889 = vmatprep.subr.bf16.mxu0 0
      %890 = vmatpush1.bf16.msra.mxu0 0
      %891 = vmatprep.subr.bf16.mxu0 0
      %892 = vmatpush1.bf16.msra.mxu0 0
      %893 = vmatprep.subr.bf16.mxu0 0
      %894 = vmatpush1.bf16.msra.mxu0 0
      %895 = vmatprep.subr.bf16.mxu0 0
      %896 = vmatpush1.bf16.msra.mxu0 0
      %897 = vmatprep.subr.bf16.mxu0 0
      %898 = vmatpush1.bf16.msra.mxu0 0
      %899 = vmatprep.mubr.bf16.mxu0 0
      %900 = vmatmul.mubr.bf16.gmra.mrb[0].mxu0 %v862
      %v901 = vpop.f32.mrb[0].mxu0
      %v902 = vadd.f32 0.0, %v901
      %v903 = vpop.f32.mrb[0].mxu0
      %v904 = vpop.f32.mrb[0].mxu0
      %v905 = vpop.f32.mrb[0].mxu0
      %906 = vdwg.mxu0
      %907 = vrot.lane.b32.xlu0 %v121, 100
      %v908 = vpop.permute.xlu0 %907
      %909 = vrot.lane.b32.xlu0 %v121, 68
      %v910 = vpop.permute.xlu0 %909
      %v912 = vsel %vm124, %v908, 0
      %v915 = vsel %vm124, %v910, 0
      %917 = vmatprep.subr.bf16.mxu0 0
      %918 = vmatpush1.bf16.xpose.msra.mxu0 %v915
      %919 = vmatprep.subr.bf16.mxu0 0
      %920 = vmatpush1.bf16.xpose.msra.mxu0 0
      %921 = vmatprep.subr.bf16.mxu0 0
      %922 = vmatpush1.bf16.xpose.msra.mxu0 0
      %923 = vmatprep.subr.bf16.mxu0 0
      %924 = vmatpush1.bf16.xpose.msra.mxu0 0
      %925 = vmatprep.subr.bf16.mxu0 0
      %926 = vmatpush1.bf16.xpose.msra.mxu0 0
      %927 = vmatprep.subr.bf16.mxu0 0
      %928 = vmatpush1.bf16.xpose.msra.mxu0 0
      %929 = vmatprep.subr.bf16.mxu0 0
      %930 = vmatpush1.bf16.xpose.msra.mxu0 0
      %931 = vmatprep.subr.bf16.mxu0 0
      %932 = vmatpush1.bf16.xpose.msra.mxu0 0
      %933 = vmatprep.subr.bf16.mxu0 0
      %934 = vmatpush1.bf16.xpose.msra.mxu0 0
      %935 = vmatprep.subr.bf16.mxu0 0
      %936 = vmatpush1.bf16.xpose.msra.mxu0 0
      %937 = vmatprep.subr.bf16.mxu0 0
      %938 = vmatpush1.bf16.xpose.msra.mxu0 0
      %939 = vmatprep.subr.bf16.mxu0 0
      %940 = vmatpush1.bf16.xpose.msra.mxu0 0
      %941 = vmatprep.subr.bf16.mxu0 0
      %942 = vmatpush1.bf16.xpose.msra.mxu0 0
      %943 = vmatprep.subr.bf16.mxu0 0
      %944 = vmatpush1.bf16.xpose.msra.mxu0 0
      %945 = vmatprep.subr.bf16.mxu0 0
      %946 = vmatpush1.bf16.xpose.msra.mxu0 0
      %947 = vmatprep.subr.bf16.mxu0 0
      %948 = vmatpush1.bf16.xpose.msra.mxu0 0
      %949 = vmatprep.mubr.bf16.mxu0 0
      %950 = vmatmul.mubr.bf16.gmra.mrb[0].mxu0 %v912
      %v951 = vpop.f32.mrb[0].mxu0
      %v952 = vadd.f32 0.0, %v951
      %v953 = vpop.f32.mrb[0].mxu0
      %v954 = vpop.f32.mrb[0].mxu0
      %v955 = vpop.f32.mrb[0].mxu0
      %956 = vdwg.mxu0
      %v957 = vmul.f32 %v952, 0.25
      %v958 = vsel %vm118, %v957, -inf
      %v959 = vsel %vm173, %v958, -inf
      %960 = vmax.xlane.f32.xlu0 %v959
      %v961 = vpop.xlane.xlu0 %960
      %v962 = vsub.f32 %v958, %v961
      %v963 = vmul.f32 %v962, 1.442695
      %v964 = vpow.pop %v963
      %v965 = vsel %vm173, %v964, 0.0
      %966 = vadd.xlane.f32.xlu0 %v965
      %v967 = vpop.xlane.xlu0 %966
      %v968 = vrcp.pop %v967
      %v969 = vmul.f32 %v964, %v968
      %v970 = vpack.c.bf16 %v969, %v969
      %971 = vrot.lane.b32.xlu0 %v121, 36
      %v972 = vpop.permute.xlu0 %971
      %v974 = vsel %vm173, %v970, 0
      %v977 = vsel %vm191, %v972, 0
      %979 = vmatprep.subr.bf16.mxu0 0
      %980 = vmatpush1.bf16.msra.mxu0 %v977
      %981 = vmatprep.subr.bf16.mxu0 0
      %982 = vmatpush1.bf16.msra.mxu0 0
      %983 = vmatprep.subr.bf16.mxu0 0
      %984 = vmatpush1.bf16.msra.mxu0 0
      %985 = vmatprep.subr.bf16.mxu0 0
      %986 = vmatpush1.bf16.msra.mxu0 0
      %987 = vmatprep.subr.bf16.mxu0 0
      %988 = vmatpush1.bf16.msra.mxu0 0
      %989 = vmatprep.subr.bf16.mxu0 0
      %990 = vmatpush1.bf16.msra.mxu0 0
      %991 = vmatprep.subr.bf16.mxu0 0
      %992 = vmatpush1.bf16.msra.mxu0 0
      %993 = vmatprep.subr.bf16.mxu0 0
      %994 = vmatpush1.bf16.msra.mxu0 0
      %995 = vmatprep.subr.bf16.mxu0 0
      %996 = vmatpush1.bf16.msra.mxu0 0
      %997 = vmatprep.subr.bf16.mxu0 0
      %998 = vmatpush1.bf16.msra.mxu0 0
      %999 = vmatprep.subr.bf16.mxu0 0
      %1000 = vmatpush1.bf16.msra.mxu0 0
      %1001 = vmatprep.subr.bf16.mxu0 0
      %1002 = vmatpush1.bf16.msra.mxu0 0
      %1003 = vmatprep.subr.bf16.mxu0 0
      %1004 = vmatpush1.bf16.msra.mxu0 0
      %1005 = vmatprep.subr.bf16.mxu0 0
      %1006 = vmatpush1.bf16.msra.mxu0 0
      %1007 = vmatprep.subr.bf16.mxu0 0
      %1008 = vmatpush1.bf16.msra.mxu0 0
      %1009 = vmatprep.subr.bf16.mxu0 0
      %1010 = vmatpush1.bf16.msra.mxu0 0
      %1011 = vmatprep.mubr.bf16.mxu0 0
      %1012 = vmatmul.mubr.bf16.gmra.mrb[0].mxu0 %v974
      %v1013 = vpop.f32.mrb[0].mxu0
      %v1014 = vadd.f32 0.0, %v1013
      %v1015 = vpop.f32.mrb[0].mxu0
      %v1016 = vpop.f32.mrb[0].mxu0
      %v1017 = vpop.f32.mrb[0].mxu0
      %1018 = vdwg.mxu0
      %1020 = vrot.lane.b32.xlu0 %v342, 4
      %v1021 = vpop.permute.xlu0 %1020
      %1024 = vrot.lane.b32.xlu0 %v454, 8
      %v1025 = vpop.permute.xlu0 %1024
      %1028 = vrot.lane.b32.xlu0 %v566, 12
      %v1029 = vpop.permute.xlu0 %1028
      %1032 = vrot.lane.b32.xlu0 %v678, 16
      %v1033 = vpop.permute.xlu0 %1032
      %1036 = vrot.lane.b32.xlu0 %v790, 20
      %v1037 = vpop.permute.xlu0 %1036
      %1040 = vrot.lane.b32.xlu0 %v902, 24
      %v1041 = vpop.permute.xlu0 %1040
      %1044 = vrot.lane.b32.xlu0 %v1014, 28
      %v1045 = vpop.permute.xlu0 %1044
      %v1047 = vsel %vm124, %v230, %v1021
      %v1048 = vsel %vm173, %v1047, %v1025
      %vm1049 = vcmask 97280
      %v1050 = vsel %vm1049, %v1048, %v1029
      %vm1051 = vcmask 130048
      %v1052 = vsel %vm1051, %v1050, %v1033
      %vm1053 = vcmask 162816
      %v1054 = vsel %vm1053, %v1052, %v1037
      %vm1055 = vcmask 195584
      %v1056 = vsel %vm1055, %v1054, %v1041
      %vm1057 = vcmask 228352
      %v1058 = vsel %vm1057, %v1056, %v1045
      %v1059 = vpack.c.bf16 %v1058, %v1058
      %vm1060 = vcmask 257024
      %1061 = vst.msk [vmem:[%s111] sm:$0xf] %vm1060, %v1059
      %p1062 = scmp.lt.s32.totalorder %s12, 1
      %s1063 = scalar_select %p1062, %s12, 1
      %s1064 = smul.addr %s1063, 4
      %s1065 = scalar_lea.vmem %s1, %s1064
      // Predicated region
      $region25: #{sharded_transformer_forward.10} parent=23 // pred_check
        %p1066 = pneg %p56
      $region26: #{sharded_transformer_forward.10} parent=23 // pred_check_branch
        %1068 = sbr.rel (%p1066) target = $region28
      $region27: #{sharded_transformer_forward.10} parent=23 // pred_region
        _
      $region28: #{sharded_transformer_forward.10} parent=23 // pred_fallthru
        _
    $region24: #{sharded_transformer_forward.10} parent=5 // pred_fallthru
      _
    %p1069 = scmp.le.s32.totalorder 2, %s7
    // Predicated region
    $region29: #{sharded_transformer_forward.10} parent=5 // pred_check
      %p1070 = pneg %p1069
    $region30: #{sharded_transformer_forward.10} parent=5 // pred_check_branch
      %1072 = sbr.rel (%p1070) target = $region32
    $region31: #{sharded_transformer_forward.10} parent=5 // pred_region
      %s1073 = ssub.s32 %s7, 2
      // Predicated region
      $region33: #{sharded_transformer_forward.10} parent=31 // pred_check
        %p1074 = pneg %p62
      $region34: #{sharded_transformer_forward.10} parent=31 // pred_check_branch
        %1076 = sbr.rel (%p1074) target = $region36
      $region35: #{sharded_transformer_forward.10} parent=31 // pred_region
        %p1077 = scmp.lt.s32.totalorder %s13, 1
        %s1078 = scalar_select %p1077, %s13, 1
        %s1079 = smul.addr %s1078, 4
        %s1080 = scalar_lea.vmem %s1, %s1079
      $region36: #{sharded_transformer_forward.10} parent=31 // pred_fallthru
        _
    $region32: #{sharded_transformer_forward.10} parent=5 // pred_fallthru
      _
  $region6: #{sharded_transformer_forward.10} parent=0 // loop_footer
    %s11 = sadd.s32 1, %s7
  $region7: #{sharded_transformer_forward.10} parent=0 // loop_footer_branch
    %6 = sbr.rel target = $region3
  $region8: #{sharded_transformer_forward.10} parent=0 // loop_exit
    _

// kernel: sharded_transformer_forward.17
$region0: #{sharded_transformer_forward.17}
  #allocation0 [shape = 'u32[]', space=smem, size = 0x4, offset = 0x4, fixed_abs, tag = 'smem constant byte address 0x4 - core index']
  #allocation1 [shape = 'u32[144,128]{1,0:T(1,128)}', space=vmem, size = 0x12000, scoped, tag = 'internal scratch']
  #allocation2 [shape = 'bf16[8,32]{1,0:T(8,128)(2,1)}', space=vmem, size = 0x800, scoped, tag = 'scratch operand']
  %s0 = inlined_call_operand.vmem [shape: f32[16,32], index: 0, kind: input, shape index: {}]
  %s1 = inlined_call_operand.vmem [shape: f32[1,32], index: 1, kind: input, shape index: {}]
  %s2 = inlined_call_operand.vmem [shape: f32[1,32], index: 2, kind: input, shape index: {}]
  %s3 = inlined_call_operand.vmem [shape: bf16[32,64], index: 3, kind: input, shape index: {}]
  %s4 = inlined_call_operand.vmem [shape: f32[1,64], index: 4, kind: input, shape index: {}]
  %s5 = inlined_call_operand.hbm [shape: f32[16,64], index: 5, kind: output, shape index: {}]
  %s6 = sld [smem:[#allocation0]]
  $region57: #{sharded_transformer_forward.17} parent=0
    _
  %s8 = ssub.s32 1, %s6
  %s9 = scalar_select 0, %s8, %s6
  $region1: #{sharded_transformer_forward.17} parent=0
    #allocation3 [shape = 'u8[8192]{0}', space=vmem, size = 0x2000, scoped, tag = 'output window, operand 0']
    #allocation4 [shape = 's32[2]{0}', space=sflag, size = 0x8, scoped, tag = 'scoped memory for sharded_transformer_forward.17']
    %10 = vsyncpa [#allocation4], 0
    %s11 = scalar_lea.sflag [#allocation4], 1
    %12 = vsyncpa %s11, 0
    loop: start=0, step=1, limit=4
    $region2: #{sharded_transformer_forward.17} parent=1 // loop_pre_header
      _
    $region3: #{sharded_transformer_forward.17} parent=1 // loop_header
      %s14 = sphi 0, %s18
      %p15 = scmp.ge.s32.totalorder %s14, 4
      %s21 = sphi 0, %s33
      %s22 = sphi 0, %s29
      %s23 = sphi 0, %s21
      %s24 = sphi 0, %s22
      %s25 = sphi 0, %s23
      %s26 = sphi 0, %s24
      %s36 = sphi 0, %s38
      %s39 = sphi 0, %s36
      %s40 = sphi 0, %s39
      %s56 = sphi 0, %s40
      %s60 = sphi 0, %s60
      %s62 = sphi 0, %s60
      %s63 = sphi 0, %s62
      %s77 = sphi 0, %s63
      %s81 = sphi 0, %s81
      %s83 = sphi 0, %s81
      %s84 = sphi 0, %s83
      %s98 = sphi 0, %s84
      %s104 = sphi 0, %s106
      %s107 = sphi 0, %s104
      %s108 = sphi 0, %s107
      %s124 = sphi 0, %s108
      %s130 = sphi 0, %s132
      %s133 = sphi 0, %s130
      %s134 = sphi 0, %s133
      %s150 = sphi 0, %s134
      %s158 = sphi 0, %s160
      %s161 = sphi 0, %s158
      %s162 = sphi 0, %s161
      %s178 = sphi 0, %s162
    $region4: #{sharded_transformer_forward.17} parent=1 // loop_header_branch
      %17 = sbr.rel (%p15) target = $region8
    $region5: #{sharded_transformer_forward.17} parent=1 // loop_body
      %s19 = ssub.s32 %s14, 1
      %s20 = ssub.s32 %s14, 2
      %s27 = sadd.s32 1, %s22
      %p28 = scmp.ge.s32.totalorder %s27, 1
      %s29 = scalar_select %p28, 0, %s27
      %s30 = sadd.s32 1, %s21
      %s31 = scalar_select %p28, %s30, %s21
      %p32 = scmp.ge.s32.totalorder %s31, 2
      %s33 = scalar_select %p32, 0, %s31
      %s34 = ssub.s32 %s21, %s33
      %p35 = scmp.eq.s32.totalorder %s34, 0
      %s37 = sadd.s32 %s36, 1
      %s38 = scalar_select %p35, %s36, %s37
      %p41 = pneg %p35
      %p42 = scmp.eq.s32.totalorder %s14, 1
      %p43 = por %p41, %p42
      %p44 = scmp.ne.s32.totalorder %s36, %s39
      %p45 = scmp.eq.s32.totalorder %s14, 0
      %p46 = por %p44, %p45
      %p47 = scmp.ne.s32.totalorder %s36, %s39
      %p48 = scmp.eq.s32.totalorder %s19, 1
      %p49 = por %p47, %p48
      %p50 = scmp.ne.s32.totalorder %s39, %s40
      %p51 = scmp.eq.s32.totalorder %s19, 0
      %p52 = por %p50, %p51
      %p53 = scmp.ne.s32.totalorder %s39, %s40
      %p54 = scmp.eq.s32.totalorder %s20, 1
      %p55 = por %p53, %p54
      %p57 = scmp.ne.s32.totalorder %s40, %s56
      %p58 = scmp.eq.s32.totalorder %s20, 0
      %p59 = por %p57, %p58
      %s61 = sadd.s32 %s60, 1
      %p64 = scmp.eq.s32.totalorder %s14, 1
      %p65 = scmp.ne.s32.totalorder %s60, %s62
      %p66 = scmp.eq.s32.totalorder %s14, 0
      %p67 = por %p65, %p66
      %p68 = scmp.ne.s32.totalorder %s60, %s62
      %p69 = scmp.eq.s32.totalorder %s19, 1
      %p70 = por %p68, %p69
      %p71 = scmp.ne.s32.totalorder %s62, %s63
      %p72 = scmp.eq.s32.totalorder %s19, 0
      %p73 = por %p71, %p72
      %p74 = scmp.ne.s32.totalorder %s62, %s63
      %p75 = scmp.eq.s32.totalorder %s20, 1
      %p76 = por %p74, %p75
      %p78 = scmp.ne.s32.totalorder %s63, %s77
      %p79 = scmp.eq.s32.totalorder %s20, 0
      %p80 = por %p78, %p79
      %s82 = sadd.s32 %s81, 1
      %p85 = scmp.eq.s32.totalorder %s14, 1
      %p86 = scmp.ne.s32.totalorder %s81, %s83
      %p87 = scmp.eq.s32.totalorder %s14, 0
      %p88 = por %p86, %p87
      %p89 = scmp.ne.s32.totalorder %s81, %s83
      %p90 = scmp.eq.s32.totalorder %s19, 1
      %p91 = por %p89, %p90
      %p92 = scmp.ne.s32.totalorder %s83, %s84
      %p93 = scmp.eq.s32.totalorder %s19, 0
      %p94 = por %p92, %p93
      %p95 = scmp.ne.s32.totalorder %s83, %s84
      %p96 = scmp.eq.s32.totalorder %s20, 1
      %p97 = por %p95, %p96
      %p99 = scmp.ne.s32.totalorder %s84, %s98
      %p100 = scmp.eq.s32.totalorder %s20, 0
      %p101 = por %p99, %p100
      %s102 = ssub.s32 %s22, %s29
      %p103 = scmp.eq.s32.totalorder %s102, 0
      %s105 = sadd.s32 %s104, 1
      %s106 = scalar_select %p103, %s104, %s105
      %p109 = pneg %p103
      %p110 = scmp.eq.s32.totalorder %s14, 1
      %p111 = por %p109, %p110
      %p112 = scmp.ne.s32.totalorder %s104, %s107
      %p113 = scmp.eq.s32.totalorder %s14, 0
      %p114 = por %p112, %p113
      %p115 = scmp.ne.s32.totalorder %s104, %s107
      %p116 = scmp.eq.s32.totalorder %s19, 1
      %p117 = por %p115, %p116
      %p118 = scmp.ne.s32.totalorder %s107, %s108
      %p119 = scmp.eq.s32.totalorder %s19, 0
      %p120 = por %p118, %p119
      %p121 = scmp.ne.s32.totalorder %s107, %s108
      %p122 = scmp.eq.s32.totalorder %s20, 1
      %p123 = por %p121, %p122
      %p125 = scmp.ne.s32.totalorder %s108, %s124
      %p126 = scmp.eq.s32.totalorder %s20, 0
      %p127 = por %p125, %p126
      %s128 = ssub.s32 %s22, %s29
      %p129 = scmp.eq.s32.totalorder %s128, 0
      %s131 = sadd.s32 %s130, 1
      %s132 = scalar_select %p129, %s130, %s131
      %p135 = pneg %p129
      %p136 = scmp.eq.s32.totalorder %s14, 1
      %p137 = por %p135, %p136
      %p138 = scmp.ne.s32.totalorder %s130, %s133
      %p139 = scmp.eq.s32.totalorder %s14, 0
      %p140 = por %p138, %p139
      %p141 = scmp.ne.s32.totalorder %s130, %s133
      %p142 = scmp.eq.s32.totalorder %s19, 1
      %p143 = por %p141, %p142
      %p144 = scmp.ne.s32.totalorder %s133, %s134
      %p145 = scmp.eq.s32.totalorder %s19, 0
      %p146 = por %p144, %p145
      %p147 = scmp.ne.s32.totalorder %s133, %s134
      %p148 = scmp.eq.s32.totalorder %s20, 1
      %p149 = por %p147, %p148
      %p151 = scmp.ne.s32.totalorder %s134, %s150
      %p152 = scmp.eq.s32.totalorder %s20, 0
      %p153 = por %p151, %p152
      %s154 = ssub.s32 %s21, %s33
      %s155 = ssub.s32 %s22, %s29
      %s156 = sor.u32 %s154, %s155
      %p157 = scmp.eq.s32.totalorder %s156, 0
      %s159 = sadd.s32 %s158, 1
      %s160 = scalar_select %p157, %s158, %s159
      %p163 = pneg %p157
      %p164 = scmp.eq.s32.totalorder %s14, 1
      %p165 = por %p163, %p164
      %p166 = scmp.ne.s32.totalorder %s158, %s161
      %p167 = scmp.eq.s32.totalorder %s14, 0
      %p168 = por %p166, %p167
      %p169 = scmp.ne.s32.totalorder %s158, %s161
      %p170 = scmp.eq.s32.totalorder %s19, 1
      %p171 = por %p169, %p170
      %p172 = scmp.ne.s32.totalorder %s161, %s162
      %p173 = scmp.eq.s32.totalorder %s19, 0
      %p174 = por %p172, %p173
      %p175 = scmp.ne.s32.totalorder %s161, %s162
      %p176 = scmp.eq.s32.totalorder %s20, 1
      %p177 = por %p175, %p176
      %p179 = scmp.ne.s32.totalorder %s162, %s178
      %p180 = scmp.eq.s32.totalorder %s20, 0
      %p181 = por %p179, %p180
      %p182 = scmp.le.s32.totalorder 1, %s14
      %p183 = scmp.lt.s32.totalorder %s14, 3
      %p184 = pnand %p182, %p183
      %p185 = pneg %p184
      // Predicated region
      $region9: #{sharded_transformer_forward.17} parent=5 // pred_check
        _
      $region10: #{sharded_transformer_forward.17} parent=5 // pred_check_branch
        %187 = sbr.rel (%p184) target = $region12
      $region11: #{sharded_transformer_forward.17} parent=5 // pred_region
        %s188 = ssub.s32 %s14, 1
        // Predicated region
        $region13: #{sharded_transformer_forward.17} parent=11 // pred_check
          %p189 = pneg %p73
        $region14: #{sharded_transformer_forward.17} parent=11 // pred_check_branch
          %191 = sbr.rel (%p189) target = $region16
        $region15: #{sharded_transformer_forward.17} parent=11 // pred_region
          _
        $region16: #{sharded_transformer_forward.17} parent=11 // pred_fallthru
          _
        // Predicated region
        $region17: #{sharded_transformer_forward.17} parent=11 // pred_check
          %p192 = pneg %p94
        $region18: #{sharded_transformer_forward.17} parent=11 // pred_check_branch
          %194 = sbr.rel (%p192) target = $region20
        $region19: #{sharded_transformer_forward.17} parent=11 // pred_region
          _
        $region20: #{sharded_transformer_forward.17} parent=11 // pred_fallthru
          _
        // Predicated region
        $region21: #{sharded_transformer_forward.17} parent=11 // pred_check
          %p195 = pneg %p120
        $region22: #{sharded_transformer_forward.17} parent=11 // pred_check_branch
          %197 = sbr.rel (%p195) target = $region24
        $region23: #{sharded_transformer_forward.17} parent=11 // pred_region
          %p198 = scmp.lt.s32.totalorder %s24, 0
          %s199 = scalar_select %p198, %s24, 0
          %s200 = smul.addr %s199, 4
          %s201 = scalar_lea.vmem %s3, %s200
        $region24: #{sharded_transformer_forward.17} parent=11 // pred_fallthru
          _
        // Predicated region
        $region25: #{sharded_transformer_forward.17} parent=11 // pred_check
          %p202 = pneg %p146
        $region26: #{sharded_transformer_forward.17} parent=11 // pred_check_branch
          %204 = sbr.rel (%p202) target = $region28
        $region27: #{sharded_transformer_forward.17} parent=11 // pred_region
          %p205 = scmp.lt.s32.totalorder %s24, 0
          %s206 = scalar_select %p205, %s24, 0
          %s207 = scalar_lea.vmem %s4, %s206
        $region28: #{sharded_transformer_forward.17} parent=11 // pred_fallthru
          _
      $region12: #{sharded_transformer_forward.17} parent=5 // pred_fallthru
        _
      %p208 = scmp.lt.s32.totalorder %s14, 2
      // Predicated region
      $region29: #{sharded_transformer_forward.17} parent=5 // pred_check
        %p209 = pneg %p208
      $region30: #{sharded_transformer_forward.17} parent=5 // pred_check_branch
        %211 = sbr.rel (%p209) target = $region32
      $region31: #{sharded_transformer_forward.17} parent=5 // pred_region
        // Predicated region
        $region33: #{sharded_transformer_forward.17} parent=31 // pred_check
          %p212 = pneg %p46
        $region34: #{sharded_transformer_forward.17} parent=31 // pred_check_branch
          %214 = sbr.rel (%p212) target = $region36
        $region35: #{sharded_transformer_forward.17} parent=31 // pred_region
          %p215 = scmp.lt.s32.totalorder %s21, 1
          %s216 = scalar_select %p215, %s21, 1
          %s217 = smul.addr %s216, 8
          %s218 = scalar_lea.vmem %s0, %s217
        $region36: #{sharded_transformer_forward.17} parent=31 // pred_fallthru
          _
      $region32: #{sharded_transformer_forward.17} parent=5 // pred_fallthru
        _
      %p219 = scmp.le.s32.totalorder 1, %s14
      %p220 = scmp.lt.s32.totalorder %s14, 3
      %p221 = pnand %p219, %p220
      %p222 = pneg %p221
      // Predicated region
      $region37: #{sharded_transformer_forward.17} parent=5 // pred_check
        _
      $region38: #{sharded_transformer_forward.17} parent=5 // pred_check_branch
        %224 = sbr.rel (%p221) target = $region40
      $region39: #{sharded_transformer_forward.17} parent=5 // pred_region
        %s225 = ssub.s32 %s14, 1
        %p226 = scmp.lt.s32.totalorder %s23, 1
        %s227 = scalar_select %p226, %s23, 1
        %s228 = smul.addr %s227, 8
        %s229 = scalar_lea.vmem %s0, %s228
        %p230 = pneg %p52
        %p231 = pneg %p49
        %p232 = pneg %p73
        %p233 = pneg %p70
        %p234 = pneg %p94
        %p235 = pneg %p91
        %p236 = scmp.lt.s32.totalorder %s24, 0
        %s237 = scalar_select %p236, %s24, 0
        %s238 = smul.addr %s237, 4
        %s239 = scalar_lea.vmem %s3, %s238
        %p240 = pneg %p120
        %p241 = pneg %p117
        %p242 = scmp.lt.s32.totalorder %s24, 0
        %s243 = scalar_select %p242, %s24, 0
        %s244 = scalar_lea.vmem %s4, %s243
        %p245 = pneg %p146
        %p246 = pneg %p143
        %p247 = pneg %p174
        %p248 = pneg %p171
        %s249 = sand.u32 %s161, 1
        %s250 = scalar_lea.sflag [#allocation4], %s249
        %s251 = sand.u32 %s161, 1
        %s252 = smul.addr %s251, 8
        %s253 = scalar_lea.vmem [#allocation3], %s252
        %p254 = scmp.lt.s32.totalorder %s23, 1
        %s255 = scalar_select %p254, %s23, 1
        %s256 = smul.addr %s255, 8
        %s257 = scalar_lea.vmem %s0, %s256
        %p258 = scmp.lt.s32.totalorder %s24, 0
        %s259 = scalar_select %p258, %s24, 0
        %s260 = smul.addr %s259, 4
        %s261 = scalar_lea.vmem %s3, %s260
        %p262 = scmp.lt.s32.totalorder %s24, 0
        %s263 = scalar_select %p262, %s24, 0
        %s264 = scalar_lea.vmem %s4, %s263
        %p266 = scmp.eq.s32.totalorder %s24, 0
        // Predicated region
        $region41: #{sharded_transformer_forward.17} parent=39 // pred_check
          %p267 = pneg %p266
        $region42: #{sharded_transformer_forward.17} parent=39 // pred_check_branch
          %269 = sbr.rel (%p267) target = $region44
        $region43: #{sharded_transformer_forward.17} parent=39 // pred_region
          %v270 = vld [vmem:[%s257] sm:$0xff]
          %v271 = vld [vmem:[%s1] sm:$0x1]
          %v272 = vld [vmem:[%s2] sm:$0x1]
          %vm273 = vcmask 261120
          %v274 = vsel %vm273, %v270, 0.0
          %275 = vadd.xlane.f32.xlu0 %v274
          %v276 = vpop.xlane.xlu0 %275
          %v277 = vmul.f32 %v270, %v270
          %v278 = vsel %vm273, %v277, 0.0
          %279 = vadd.xlane.f32.xlu0 %v278
          %v280 = vpop.xlane.xlu0 %279
          %v281 = vmul.f32 %v276, 0.03125
          %v282 = vmul.f32 %v276, %v281
          %v283 = vsub.f32 %v280, %v282
          %v284 = vmul.f32 %v283, 0.032258064
          %v285 = vsub.f32 %v270, %v281
          %v286 = vadd.f32 %v284, 1e-05
          %v287 = vrsqrt.pop %v286
          %v288 = vmul.f32 %v285, %v287
          %v290 = vlaneseq
          %v291 = vshrl.u32 %v290, 7
          %v292 = vsub.s32 0, %v291
          %v293 = vrot.slane %v271, %v292
          %v295 = vmul.f32 %v288, %v293
          %v297 = vlaneseq
          %v298 = vshrl.u32 %v297, 7
          %v299 = vsub.s32 0, %v298
          %v300 = vrot.slane %v272, %v299
          %v302 = vadd.f32 %v295, %v300
          %v303 = vpack.c.bf16 %v302, %v302
          %vm304 = vcmask 257024
          %305 = vst.msk [vmem:[#allocation2] sm:$0xf] %vm304, %v303
        $region44: #{sharded_transformer_forward.17} parent=39 // pred_fallthru
          _
        %v306 = vld [vmem:[#allocation2] sm:$0xf]
        %v307 = vld [vmem:[%s261] sm:$0xf]
        %v308 = vld [vmem:[%s261 + $0x4] sm:$0xf]
        %v309 = vld [vmem:[%s261 + $0x8] sm:$0xf]
        %v310 = vld [vmem:[%s261 + $0xc] sm:$0xf]
        %v311 = vld [vmem:[%s264] sm:$0x1]
        %v313 = vlaneseq
        %v314 = vshrl.u32 %v313, 7
        %v315 = vsub.s32 0, %v314
        %v316 = vrot.slane %v311, %v315
        %v322 = vunpack.c.l.b16 %v307
        %v323 = vunpack.c.l.b16 %v308
        %v324 = vunpack.c.l.b16 %v309
        %v325 = vunpack.c.l.b16 %v310
        %v326 = vpack.c.b16 %v323, %v322
        %v327 = vpack.c.b16 %v325, %v324
        %vm330 = vcmask 261120
        %v332 = vsel %vm330, %v306, 0
        %334 = vmatprep.subr.bf16.mxu0 0
        %335 = vmatpush1.bf16.msra.mxu0 %v326
        %336 = vmatprep.subr.bf16.mxu0 0
        %337 = vmatpush1.bf16.msra.mxu0 %v327
        %338 = vmatprep.subr.bf16.mxu0 0
        %339 = vmatpush1.bf16.msra.mxu0 0
        %340 = vmatprep.subr.bf16.mxu0 0
        %341 = vmatpush1.bf16.msra.mxu0 0
        %342 = vmatprep.subr.bf16.mxu0 0
        %343 = vmatpush1.bf16.msra.mxu0 0
        %344 = vmatprep.subr.bf16.mxu0 0
        %345 = vmatpush1.bf16.msra.mxu0 0
        %346 = vmatprep.subr.bf16.mxu0 0
        %347 = vmatpush1.bf16.msra.mxu0 0
        %348 = vmatprep.subr.bf16.mxu0 0
        %349 = vmatpush1.bf16.msra.mxu0 0
        %350 = vmatprep.subr.bf16.mxu0 0
        %351 = vmatpush1.bf16.msra.mxu0 0
        %352 = vmatprep.subr.bf16.mxu0 0
        %353 = vmatpush1.bf16.msra.mxu0 0
        %354 = vmatprep.subr.bf16.mxu0 0
        %355 = vmatpush1.bf16.msra.mxu0 0
        %356 = vmatprep.subr.bf16.mxu0 0
        %357 = vmatpush1.bf16.msra.mxu0 0
        %358 = vmatprep.subr.bf16.mxu0 0
        %359 = vmatpush1.bf16.msra.mxu0 0
        %360 = vmatprep.subr.bf16.mxu0 0
        %361 = vmatpush1.bf16.msra.mxu0 0
        %362 = vmatprep.subr.bf16.mxu0 0
        %363 = vmatpush1.bf16.msra.mxu0 0
        %364 = vmatprep.subr.bf16.mxu0 0
        %365 = vmatpush1.bf16.msra.mxu0 0
        %366 = vmatprep.mubr.bf16.mxu0 0
        %367 = vmatmul.mubr.bf16.gmra.mrb[0].mxu0 %v332
        %v368 = vpop.f32.mrb[0].mxu0
        %v369 = vadd.f32 %v316, %v368
        %v370 = vpop.f32.mrb[0].mxu0
        %v371 = vpop.f32.mrb[0].mxu0
        %v372 = vpop.f32.mrb[0].mxu0
        %373 = vdwg.mxu0
        %vm374 = vcmask 523264
        %375 = vst.msk [vmem:[%s253] sm:$0xff] %vm374, %v369
        %s376 = sand.u32 %s161, 1
        %s377 = scalar_lea.sflag [#allocation4], %s376
        %s378 = sand.u32 %s161, 1
        %s379 = smul.addr %s378, 8
        %s380 = scalar_lea.vmem [#allocation3], %s379
        // Predicated region
        $region45: #{sharded_transformer_forward.17} parent=39 // pred_check
          %p381 = pneg %p171
        $region46: #{sharded_transformer_forward.17} parent=39 // pred_check_branch
          %383 = sbr.rel (%p381) target = $region48
        $region47: #{sharded_transformer_forward.17} parent=39 // pred_region
          %s385 = ssub.s32 128, 128
          %386 = vsyncadd %s377, %s385
          %s387 = sadd.s32 %s24, %s23
          %s388 = smul.addr %s387, 128
          %s389 = scalar_lea.hbm %s5, %s388
          %s391 = sshll.u32 %s380, 4
          %s392 = int_to_ptr.vmem [resolvable:$true] %s391
          %394 = dma.vmem_to_hbm [thread:$0]  %s392, 128, %s389, %s377
        $region48: #{sharded_transformer_forward.17} parent=39 // pred_fallthru
          _
      $region40: #{sharded_transformer_forward.17} parent=5 // pred_fallthru
        _
      %p395 = scmp.le.s32.totalorder 2, %s14
      // Predicated region
      $region49: #{sharded_transformer_forward.17} parent=5 // pred_check
        %p396 = pneg %p395
      $region50: #{sharded_transformer_forward.17} parent=5 // pred_check_branch
        %398 = sbr.rel (%p396) target = $region52
      $region51: #{sharded_transformer_forward.17} parent=5 // pred_region
        %s399 = ssub.s32 %s14, 2
        // Predicated region
        $region53: #{sharded_transformer_forward.17} parent=51 // pred_check
          %p400 = pneg %p177
        $region54: #{sharded_transformer_forward.17} parent=51 // pred_check_branch
          %402 = sbr.rel (%p400) target = $region56
        $region55: #{sharded_transformer_forward.17} parent=51 // pred_region
          %s403 = sand.u32 %s162, 1
          %s404 = scalar_lea.sflag [#allocation4], %s403
          %s405 = sand.u32 %s162, 1
          %s406 = smul.addr %s405, 8
          %s407 = scalar_lea.vmem [#allocation3], %s406
          %408 = dma.done %s404, 128
        $region56: #{sharded_transformer_forward.17} parent=51 // pred_fallthru
          _
      $region52: #{sharded_transformer_forward.17} parent=5 // pred_fallthru
        _
    $region6: #{sharded_transformer_forward.17} parent=1 // loop_footer
      %s18 = sadd.s32 1, %s14
    $region7: #{sharded_transformer_forward.17} parent=1 // loop_footer_branch
      %13 = sbr.rel target = $region3
    $region8: #{sharded_transformer_forward.17} parent=1 // loop_exit
      _
    %409 = vsyncpa [#allocation4], 1
    %s410 = scalar_lea.sflag [#allocation4], 1
    %411 = vsyncpa %s410, 1

</llo_original>
